<compile_context>
chip_gen: v7x
topology: tpu7x:2x2x1
jax: 0.10.0
libtpu: 0.0.40
codegen_flags: <defaults>
</compile_context>

<pallas_src>
import functools

import jax
import jax.numpy as jnp
from jax.experimental import pallas as pl
from jax.experimental.pallas import tpu as pltpu

BN_EPS = 1e-5
# explicit VMEM budget: above the 32 MiB scoped default, below v7x's 64 MiB.
_VMEM_LIMIT = 48 * 1024 * 1024


# ----------------------------------------------------------------------------
# Kernel A: fused dense layer
#   pre-act(norm1,relu1) -> 1x1 conv (per-feature matmul-sum, norm2 folded)
#   -> relu2 -> causal masked conv (per-tap matmul accumulate) -> bias.
# Grid over batch; every operand block is the full per-batch slab.
# ----------------------------------------------------------------------------
def _dense_layer_kernel(ps_ref, pt_ref, w1_ref, b1_ref, w2_ref, b2_ref,
                        col_ref, *rest, feat_channels, H, W, p):
    o_ref = rest[-1]
    feat_refs = rest[:-1]
    HW = H * W
    c1out = w1_ref.shape[0]
    growth = w2_ref.shape[0]

    ps = ps_ref[...]            # (cin, 1) f32
    pt = pt_ref[...]
    w1 = w1_ref[...]            # (c1out, cin) bf16 (norm2 scale folded in)

    # ---- bottleneck 1x1 conv as a sum over features (no HBM/VMEM concat) ----
    acc1 = jnp.zeros((c1out, HW), jnp.float32)
    off = 0
    for fr, cj in zip(feat_refs, feat_channels):
        xj = fr[0].astype(jnp.float32)                               # (cj, HW)
        xj = jnp.maximum(xj * ps[off:off + cj] + pt[off:off + cj], 0.0)
        acc1 = acc1 + jnp.dot(w1[:, off:off + cj], xj.astype(jnp.bfloat16),
                              preferred_element_type=jnp.float32)
        off += cj
    # norm2 folded into w1/b1 host-side; relu2 applied here.
    bott = jnp.maximum(acc1 + b1_ref[...], 0.0).astype(jnp.bfloat16)  # (c1out, HW)

    # ---- masked conv: causal in H (rows <= centre), 'same' in W ------------
    # Guard-padded flat view g[n] = bott_flat[n - G]; tap (r, c) is a static
    # lane-shifted slice; positions whose source column w+dc leaves [0, W)
    # are zeroed with the precomputed column-index mask.
    w2 = w2_ref[...]                                  # (growth, kh*kw*c1out)
    kh, kw = p + 1, 2 * p + 1
    G = p * W + p
    if p > 0:
        g = jnp.concatenate(
            [jnp.zeros((c1out, G), jnp.bfloat16), bott,
             jnp.zeros((c1out, p), jnp.bfloat16)], axis=1)
        col = col_ref[...]                            # (1, HW) int32, = w index
    else:
        g = bott
        col = None

    acc2 = jnp.zeros((growth, HW), jnp.float32)
    for r in range(kh):
        for c in range(kw):
            dc = c - p
            s = (r - p) * W + dc
            tap = g[:, G + s: G + s + HW]             # (c1out, HW) bf16
            if dc != 0:
                valid = jnp.logical_and(col + dc >= 0, col + dc < W)
                tap = jnp.where(valid, tap, jnp.zeros_like(tap))
            t = r * kw + c
            acc2 = acc2 + jnp.dot(w2[:, t * c1out:(t + 1) * c1out], tap,
                                  preferred_element_type=jnp.float32)
    o_ref[0] = (acc2 + b2_ref[...]).astype(o_ref.dtype)


def dense_layer(feats, layer, H, W):
    """feats: list of (B, c_j, H*W) bf16 arrays -> (B, growth, H*W) bf16."""
    B = feats[0].shape[0]
    HW = H * W
    fcs = tuple(int(f.shape[1]) for f in feats)
    cin = sum(fcs)
    ps, pt = layer["norm1"]
    w1, b1 = layer["conv1_wt"], layer["conv1_b"]
    w2, b2 = layer["conv2_wf"], layer["conv2_b"]
    c1out = int(w1.shape[0])
    growth = int(w2.shape[0])
    p = layer["k"] // 2
    col = (jnp.arange(HW, dtype=jnp.int32) % W).reshape(1, HW)

    kern = functools.partial(_dense_layer_kernel, feat_channels=fcs,
                             H=H, W=W, p=p)
    return pl.pallas_call(
        kern,
        grid=(B,),
        in_specs=[
            pl.BlockSpec((cin, 1), lambda b: (0, 0)),
            pl.BlockSpec((cin, 1), lambda b: (0, 0)),
            pl.BlockSpec((c1out, cin), lambda b: (0, 0)),
            pl.BlockSpec((c1out, 1), lambda b: (0, 0)),
            pl.BlockSpec((growth, int(w2.shape[1])), lambda b: (0, 0)),
            pl.BlockSpec((growth, 1), lambda b: (0, 0)),
            pl.BlockSpec((1, HW), lambda b: (0, 0)),
        ] + [pl.BlockSpec((1, c, HW), lambda b: (b, 0, 0)) for c in fcs],
        out_specs=pl.BlockSpec((1, growth, HW), lambda b: (b, 0, 0)),
        out_shape=jax.ShapeDtypeStruct((B, growth, HW), jnp.bfloat16),
        compiler_params=pltpu.CompilerParams(
            dimension_semantics=("parallel",),
            vmem_limit_bytes=_VMEM_LIMIT),
    )(ps.reshape(cin, 1), pt.reshape(cin, 1), w1, b1.reshape(c1out, 1),
      w2, b2.reshape(growth, 1), col, *feats)


# ----------------------------------------------------------------------------
# Kernel B: multi-feature 1x1 conv (optional BN+ReLU pre-act, optional ReLU
# epilogue).  Used for the initial transition and the block transitions
# (final norm/relu folded into the last transition's weights host-side).
# ----------------------------------------------------------------------------
def _fused_conv1x1_kernel(ps_ref, pt_ref, w_ref, b_ref, *rest,
                          feat_channels, pre_act, relu_out):
    o_ref = rest[-1]
    feat_refs = rest[:-1]
    cout = w_ref.shape[0]
    HW = o_ref.shape[2]
    w = w_ref[...]
    ps = ps_ref[...]
    pt = pt_ref[...]
    acc = jnp.zeros((cout, HW), jnp.float32)
    off = 0
    for fr, cj in zip(feat_refs, feat_channels):
        xj = fr[0]
        if pre_act:
            xj = jnp.maximum(xj.astype(jnp.float32) * ps[off:off + cj]
                             + pt[off:off + cj], 0.0).astype(jnp.bfloat16)
        acc = acc + jnp.dot(w[:, off:off + cj], xj,
                            preferred_element_type=jnp.float32)
        off += cj
    acc = acc + b_ref[...]
    if relu_out:
        acc = jnp.maximum(acc, 0.0)
    o_ref[0] = acc.astype(o_ref.dtype)


def conv1x1(feats, wt, b, pre=None, relu_out=False, out_dtype=jnp.bfloat16):
    """feats: list of (B, c_j, HW) bf16; wt: (cout, sum c_j) bf16; b: (cout,)."""
    B = feats[0].shape[0]
    HW = int(feats[0].shape[2])
    fcs = tuple(int(f.shape[1]) for f in feats)
    cin = sum(fcs)
    cout = int(wt.shape[0])
    if pre is None:
        ps = jnp.ones((cin,), jnp.float32)
        pt = jnp.zeros((cin,), jnp.float32)
    else:
        ps, pt = pre
    kern = functools.partial(_fused_conv1x1_kernel, feat_channels=fcs,
                             pre_act=pre is not None, relu_out=relu_out)
    return pl.pallas_call(
        kern,
        grid=(B,),
        in_specs=[
            pl.BlockSpec((cin, 1), lambda bb: (0, 0)),
            pl.BlockSpec((cin, 1), lambda bb: (0, 0)),
            pl.BlockSpec((cout, cin), lambda bb: (0, 0)),
            pl.BlockSpec((cout, 1), lambda bb: (0, 0)),
        ] + [pl.BlockSpec((1, c, HW), lambda bb: (bb, 0, 0)) for c in fcs],
        out_specs=pl.BlockSpec((1, cout, HW), lambda bb: (bb, 0, 0)),
        out_shape=jax.ShapeDtypeStruct((B, cout, HW), out_dtype),
        compiler_params=pltpu.CompilerParams(
            dimension_semantics=("parallel",),
            vmem_limit_bytes=_VMEM_LIMIT),
    )(ps.reshape(cin, 1), pt.reshape(cin, 1), wt, b.reshape(cout, 1), *feats)


# ----------------------------------------------------------------------------
# Deterministic parameter construction (shapes follow the PyTorch __init__),
# stored kernel-ready: transposed / tap-folded bf16 weights, BN folded to
# scale/shift, norm2 folded into conv1, norm_final folded into last transition.
# ----------------------------------------------------------------------------
def _make_bn(key, c):
    k1, k2, k3, k4 = jax.random.split(key, 4)
    gamma = 1.0 + 0.1 * jax.random.normal(k1, (c,))
    beta = 0.1 * jax.random.normal(k2, (c,))
    mean = 0.1 * jax.random.normal(k3, (c,))
    var = 1.0 + 0.1 * jax.random.uniform(k4, (c,))
    scale = gamma / jnp.sqrt(var + BN_EPS)
    shift = beta - mean * scale
    return scale.astype(jnp.float32), shift.astype(jnp.float32)


def _make_conv1x1(key, cin, cout, bias=True):
    k1, k2 = jax.random.split(key)
    wt = (jax.random.normal(k1, (cout, cin)) / jnp.sqrt(cin)).astype(jnp.bfloat16)
    b = (0.01 * jax.random.normal(k2, (cout,)) if bias
         else jnp.zeros((cout,))).astype(jnp.float32)
    return wt, b


def _make_masked_conv(key, cin, cout, k, bias=True):
    kh = k // 2 + 1
    k1, k2 = jax.random.split(key)
    w = jax.random.normal(k1, (kh, k, cin, cout)) / jnp.sqrt(cin * kh * k)
    # fold taps: Wf[co, (r*kw + c)*cin + ci] = w[r, c, ci, co]
    wf = jnp.transpose(w, (3, 0, 1, 2)).reshape(cout, kh * k * cin)
    wf = wf.astype(jnp.bfloat16)
    b = (0.01 * jax.random.normal(k2, (cout,)) if bias
         else jnp.zeros((cout,))).astype(jnp.float32)
    return wf, b


def build_params(key, num_init_features, cfg):
    growth = cfg["growth_rate"]
    block_layers = cfg["num_layers"]
    kernels = cfg["kernels"]
    bn_size = cfg["bn_size"]
    divide_channels = cfg["divide_channels"]
    bias = bool(cfg.get("bias", 1))

    keys = iter(jax.random.split(key, 512))
    params = {}
    nf = num_init_features
    if divide_channels > 1:
        params["init_trans"] = _make_conv1x1(next(keys), nf,
                                             nf // divide_channels, bias=True)
        nf = nf // divide_channels

    blocks = []
    for num_layers, ks in zip(block_layers, kernels):
        layers = []
        for i in range(num_layers):
            cin = nf + i * growth
            c1out = bn_size * growth
            wt1, b1 = _make_conv1x1(next(keys), cin, c1out, bias=bias)
            qs, qt = _make_bn(next(keys), c1out)          # norm2 (folded below)
            wt1 = (qs[:, None] * wt1.astype(jnp.float32)).astype(jnp.bfloat16)
            b1 = (qs * b1 + qt).astype(jnp.float32)
            wf2, b2 = _make_masked_conv(next(keys), c1out, growth, ks[i],
                                        bias=bias)
            layers.append(dict(
                k=ks[i],
                norm1=_make_bn(next(keys), cin),
                conv1_wt=wt1, conv1_b=b1,
                conv2_wf=wf2, conv2_b=b2,
            ))
        nf = nf + num_layers * growth
        twt, _ = _make_conv1x1(next(keys), nf, nf // 2, bias=False)
        blocks.append(dict(
            layers=layers,
            trans_norm=_make_bn(next(keys), nf),
            trans_wt=twt,
            trans_b=jnp.zeros((nf // 2,), jnp.float32),
        ))
        nf = nf // 2

    # fold norm_final (+ relu_last as in-kernel epilogue) into last transition
    fs, ft = _make_bn(next(keys), nf)
    blocks[-1]["trans_wt"] = (fs[:, None] *
                              blocks[-1]["trans_wt"].astype(jnp.float32)
                              ).astype(jnp.bfloat16)
    blocks[-1]["trans_b"] = ft.astype(jnp.float32)

    params["blocks"] = blocks
    params["out_channels"] = nf
    return params


# ----------------------------------------------------------------------------
# Forward pass (matches Efficient_DenseNet.forward semantics, NCHW in/out)
# ----------------------------------------------------------------------------
def efficient_densenet_forward(x_nchw, params):
    B, C0, H, W = x_nchw.shape
    HW = H * W
    x = x_nchw.reshape(B, C0, HW).astype(jnp.bfloat16)   # free reshape, no copy

    if "init_trans" in params:                           # initial 1x1 (no BN/ReLU)
        wt, b = params["init_trans"]
        x = conv1x1([x], wt, b)

    nblocks = len(params["blocks"])
    for bi, blk in enumerate(params["blocks"]):
        feats = [x]
        for layer in blk["layers"]:
            new = dense_layer(feats, layer, H, W)        # fused layer kernel
            feats.append(new)
        is_last = (bi == nblocks - 1)
        # transition: BN->ReLU->1x1 on the (never-materialised) concat;
        # the last one carries the folded norm_final + relu_last epilogue.
        x = conv1x1(feats, blk["trans_wt"], blk["trans_b"],
                    pre=blk["trans_norm"], relu_out=is_last,
                    out_dtype=jnp.float32 if is_last else jnp.bfloat16)

    return x.reshape(B, params["out_channels"], H, W)


if __name__ == "__main__":
    key = jax.random.PRNGKey(0)
    kx, kp = jax.random.split(key)

    num_init_features = 16
    cfg = dict(growth_rate=4, num_layers=(2, 2), kernels=((3, 3), (3, 3)),
               bn_size=2, divide_channels=2, bias=1)
    params = build_params(kp, num_init_features, cfg)

    x = jax.random.normal(kx, (2, num_init_features, 16, 16), dtype=jnp.float32)

    fwd = jax.jit(lambda inp: efficient_densenet_forward(inp, params))
    out = jax.block_until_ready(fwd(x))

    assert out.shape == (2, params["out_channels"], 16, 16), out.shape
    assert bool(jnp.all(jnp.isfinite(out)))
    assert bool(jnp.all(out >= 0.0))                     # ends with fused ReLU
    print("KERNEL_OK")
</pallas_src>

<mosaic_0001>
module attributes {stable_mosaic.version = 11 : i64} {
  func.func @_fused_conv1x1_kernel(%arg0: i32, %arg1: memref<16x1xf32, #tpu.memory_space<vmem>>, %arg2: memref<16x1xf32, #tpu.memory_space<vmem>>, %arg3: memref<8x16xbf16, #tpu.memory_space<vmem>>, %arg4: memref<8x1xf32, #tpu.memory_space<vmem>>, %arg5: memref<1x16x256xbf16, #tpu.memory_space<vmem>>, %arg6: memref<1x8x256xbf16, #tpu.memory_space<vmem>>) attributes {dimension_semantics = [#tpu.dimension_semantics<parallel>], iteration_bounds = array<i64: 2>, scalar_prefetch = 0 : i64, scratch_operands = 0 : i64, tpu.core_type = #tpu.core_type<tc>, window_params = [{pipeline_mode = #tpu.pipeline_mode<synchronous>, transform_indices = @transform_0, window_bounds = array<i64: 16, 1>}, {pipeline_mode = #tpu.pipeline_mode<synchronous>, transform_indices = @transform_1, window_bounds = array<i64: 16, 1>}, {pipeline_mode = #tpu.pipeline_mode<synchronous>, transform_indices = @transform_2, window_bounds = array<i64: 8, 16>}, {pipeline_mode = #tpu.pipeline_mode<synchronous>, transform_indices = @transform_3, window_bounds = array<i64: 8, 1>}, {transform_indices = @transform_4, window_bounds = array<i64: 1, 16, 256>}, {transform_indices = @transform_5, window_bounds = array<i64: 1, 8, 256>}]} {
    %c0 = arith.constant 0 : index
    %c0_0 = arith.constant 0 : index
    %0 = vector.load %arg3[%c0, %c0_0] : memref<8x16xbf16, #tpu.memory_space<vmem>>, vector<8x16xbf16>
    %cst = arith.constant 0.000000e+00 : f32
    %1 = vector.broadcast %cst : f32 to vector<8x256xf32>
    %c0_1 = arith.constant 0 : index
    %c0_2 = arith.constant 0 : index
    %c0_3 = arith.constant 0 : index
    %2 = vector.load %arg5[%c0_1, %c0_2, %c0_3] : memref<1x16x256xbf16, #tpu.memory_space<vmem>>, vector<1x16x256xbf16>
    %3 = vector.shape_cast %2 : vector<1x16x256xbf16> to vector<16x256xbf16>
    %cst_4 = arith.constant dense<0.000000e+00> : vector<8x256xf32>
    %4 = tpu.matmul %0, %3, %cst_4 {dimension_numbers = #tpu.dot_dimension_numbers<[1], [0], [0], [1], [0, 0, 1, 1], [], []>} : vector<8x16xbf16>, vector<16x256xbf16>, vector<8x256xf32> -> vector<8x256xf32>
    %5 = arith.addf %1, %4 : vector<8x256xf32>
    %c0_5 = arith.constant 0 : index
    %c0_6 = arith.constant 0 : index
    %6 = vector.load %arg4[%c0_5, %c0_6] : memref<8x1xf32, #tpu.memory_space<vmem>>, vector<8x1xf32>
    %7 = vector.broadcast %6 : vector<8x1xf32> to vector<8x256xf32>
    %8 = arith.addf %5, %7 : vector<8x256xf32>
    %9 = arith.truncf %8 : vector<8x256xf32> to vector<8x256xbf16>
    %c0_7 = arith.constant 0 : index
    %c0_8 = arith.constant 0 : index
    %c0_9 = arith.constant 0 : index
    %10 = vector.load %arg6[%c0_7, %c0_8, %c0_9] : memref<1x8x256xbf16, #tpu.memory_space<vmem>>, vector<1x8x256xbf16>
    %11 = vector.shape_cast %10 : vector<1x8x256xbf16> to vector<8x256xbf16>
    %12 = vector.shape_cast %9 : vector<8x256xbf16> to vector<1x8x256xbf16>
    tpu.vector_store %arg6[%c0_7, %c0_8, %c0_9], %12 {strides = array<i32>} : memref<1x8x256xbf16, #tpu.memory_space<vmem>>, vector<1x8x256xbf16>,
    return
  }
  func.func @transform_0(%arg0: i32) -> (i32, i32) {
    %c0_i32 = arith.constant 0 : i32
    %c0_i32_0 = arith.constant 0 : i32
    %c0_i32_1 = arith.constant 0 : i32
    return %c0_i32, %c0_i32_0 : i32, i32
  }
  func.func @transform_1(%arg0: i32) -> (i32, i32) {
    %c0_i32 = arith.constant 0 : i32
    %c0_i32_0 = arith.constant 0 : i32
    %c0_i32_1 = arith.constant 0 : i32
    return %c0_i32, %c0_i32_0 : i32, i32
  }
  func.func @transform_2(%arg0: i32) -> (i32, i32) {
    %c0_i32 = arith.constant 0 : i32
    %c0_i32_0 = arith.constant 0 : i32
    %c0_i32_1 = arith.constant 0 : i32
    return %c0_i32, %c0_i32_0 : i32, i32
  }
  func.func @transform_3(%arg0: i32) -> (i32, i32) {
    %c0_i32 = arith.constant 0 : i32
    %c0_i32_0 = arith.constant 0 : i32
    %c0_i32_1 = arith.constant 0 : i32
    return %c0_i32, %c0_i32_0 : i32, i32
  }
  func.func @transform_4(%arg0: i32) -> (i32, i32, i32) {
    %c0_i32 = arith.constant 0 : i32
    %c0_i32_0 = arith.constant 0 : i32
    %c0_i32_1 = arith.constant 0 : i32
    return %arg0, %c0_i32, %c0_i32_0 : i32, i32, i32
  }
  func.func @transform_5(%arg0: i32) -> (i32, i32, i32) {
    %c0_i32 = arith.constant 0 : i32
    %c0_i32_0 = arith.constant 0 : i32
    %c0_i32_1 = arith.constant 0 : i32
    return %arg0, %c0_i32, %c0_i32_0 : i32, i32, i32
  }
}

module attributes {stable_mosaic.version = 11 : i64} {
  func.func @_dense_layer_kernel(%arg0: i32, %arg1: memref<8x1xf32, #tpu.memory_space<vmem>>, %arg2: memref<8x1xf32, #tpu.memory_space<vmem>>, %arg3: memref<8x8xbf16, #tpu.memory_space<vmem>>, %arg4: memref<8x1xf32, #tpu.memory_space<vmem>>, %arg5: memref<4x48xbf16, #tpu.memory_space<vmem>>, %arg6: memref<4x1xf32, #tpu.memory_space<vmem>>, %arg7: memref<1x256xi32, #tpu.memory_space<vmem>>, %arg8: memref<1x8x256xbf16, #tpu.memory_space<vmem>>, %arg9: memref<1x4x256xbf16, #tpu.memory_space<vmem>>) attributes {dimension_semantics = [#tpu.dimension_semantics<parallel>], iteration_bounds = array<i64: 2>, scalar_prefetch = 0 : i64, scratch_operands = 0 : i64, tpu.core_type = #tpu.core_type<tc>, window_params = [{pipeline_mode = #tpu.pipeline_mode<synchronous>, transform_indices = @transform_0, window_bounds = array<i64: 8, 1>}, {pipeline_mode = #tpu.pipeline_mode<synchronous>, transform_indices = @transform_1, window_bounds = array<i64: 8, 1>}, {pipeline_mode = #tpu.pipeline_mode<synchronous>, transform_indices = @transform_2, window_bounds = array<i64: 8, 8>}, {pipeline_mode = #tpu.pipeline_mode<synchronous>, transform_indices = @transform_3, window_bounds = array<i64: 8, 1>}, {pipeline_mode = #tpu.pipeline_mode<synchronous>, transform_indices = @transform_4, window_bounds = array<i64: 4, 48>}, {pipeline_mode = #tpu.pipeline_mode<synchronous>, transform_indices = @transform_5, window_bounds = array<i64: 4, 1>}, {pipeline_mode = #tpu.pipeline_mode<synchronous>, transform_indices = @transform_6, window_bounds = array<i64: 1, 256>}, {transform_indices = @transform_7, window_bounds = array<i64: 1, 8, 256>}, {transform_indices = @transform_8, window_bounds = array<i64: 1, 4, 256>}]} {
    %c0 = arith.constant 0 : index
    %c0_0 = arith.constant 0 : index
    %0 = vector.load %arg1[%c0, %c0_0] : memref<8x1xf32, #tpu.memory_space<vmem>>, vector<8x1xf32>
    %c0_1 = arith.constant 0 : index
    %c0_2 = arith.constant 0 : index
    %1 = vector.load %arg2[%c0_1, %c0_2] : memref<8x1xf32, #tpu.memory_space<vmem>>, vector<8x1xf32>
    %c0_3 = arith.constant 0 : index
    %c0_4 = arith.constant 0 : index
    %2 = vector.load %arg3[%c0_3, %c0_4] : memref<8x8xbf16, #tpu.memory_space<vmem>>, vector<8x8xbf16>
    %cst = arith.constant 0.000000e+00 : f32
    %3 = vector.broadcast %cst : f32 to vector<8x256xf32>
    %c0_5 = arith.constant 0 : index
    %c0_6 = arith.constant 0 : index
    %c0_7 = arith.constant 0 : index
    %4 = vector.load %arg8[%c0_5, %c0_6, %c0_7] : memref<1x8x256xbf16, #tpu.memory_space<vmem>>, vector<1x8x256xbf16>
    %5 = vector.shape_cast %4 : vector<1x8x256xbf16> to vector<8x256xbf16>
    %6 = arith.extf %5 : vector<8x256xbf16> to vector<8x256xf32>
    %7 = vector.broadcast %0 : vector<8x1xf32> to vector<8x256xf32>
    %8 = arith.mulf %6, %7 : vector<8x256xf32>
    %9 = vector.broadcast %1 : vector<8x1xf32> to vector<8x256xf32>
    %10 = arith.addf %8, %9 : vector<8x256xf32>
    %cst_8 = arith.constant 0.000000e+00 : f32
    %11 = vector.broadcast %cst_8 : f32 to vector<8x256xf32>
    %12 = arith.maximumf %10, %11 : vector<8x256xf32>
    %13 = arith.truncf %12 : vector<8x256xf32> to vector<8x256xbf16>
    %cst_9 = arith.constant dense<0.000000e+00> : vector<8x256xf32>
    %14 = tpu.matmul %2, %13, %cst_9 {dimension_numbers = #tpu.dot_dimension_numbers<[1], [0], [0], [1], [0, 0, 1, 1], [], []>} : vector<8x8xbf16>, vector<8x256xbf16>, vector<8x256xf32> -> vector<8x256xf32>
    %15 = arith.addf %3, %14 : vector<8x256xf32>
    %c0_10 = arith.constant 0 : index
    %c0_11 = arith.constant 0 : index
    %16 = vector.load %arg4[%c0_10, %c0_11] : memref<8x1xf32, #tpu.memory_space<vmem>>, vector<8x1xf32>
    %17 = vector.broadcast %16 : vector<8x1xf32> to vector<8x256xf32>
    %18 = arith.addf %15, %17 : vector<8x256xf32>
    %cst_12 = arith.constant 0.000000e+00 : f32
    %19 = vector.broadcast %cst_12 : f32 to vector<8x256xf32>
    %20 = arith.maximumf %18, %19 : vector<8x256xf32>
    %21 = arith.truncf %20 : vector<8x256xf32> to vector<8x256xbf16>
    %c0_13 = arith.constant 0 : index
    %c0_14 = arith.constant 0 : index
    %22 = vector.load %arg5[%c0_13, %c0_14] : memref<4x48xbf16, #tpu.memory_space<vmem>>, vector<4x48xbf16>
    %cst_15 = arith.constant 0.000000e+00 : bf16
    %23 = vector.broadcast %cst_15 : bf16 to vector<8x17xbf16>
    %cst_16 = arith.constant 0.000000e+00 : bf16
    %24 = vector.broadcast %cst_16 : bf16 to vector<8x1xbf16>
    %25 = tpu.concatenate %23, %21, %24 in 1 : vector<8x17xbf16>, vector<8x256xbf16>, vector<8x1xbf16> -> vector<8x274xbf16>
    %c0_17 = arith.constant 0 : index
    %c0_18 = arith.constant 0 : index
    %26 = vector.load %arg7[%c0_17, %c0_18] : memref<1x256xi32, #tpu.memory_space<vmem>>, vector<1x256xi32>
    %cst_19 = arith.constant 0.000000e+00 : f32
    %27 = vector.broadcast %cst_19 : f32 to vector<4x256xf32>
    %28 = vector.extract_strided_slice %25 {offsets = [0, 0], sizes = [8, 256], strides = [1, 1]} : vector<8x274xbf16> to vector<8x256xbf16>
    %c-1_i32 = arith.constant -1 : i32
    %29 = vector.broadcast %c-1_i32 : i32 to vector<1x256xi32>
    %30 = arith.addi %26, %29 : vector<1x256xi32>
    %c0_i32 = arith.constant 0 : i32
    %31 = vector.broadcast %c0_i32 : i32 to vector<1x256xi32>
    %32 = arith.cmpi sge, %30, %31 : vector<1x256xi32>
    %c-1_i32_20 = arith.constant -1 : i32
    %33 = vector.broadcast %c-1_i32_20 : i32 to vector<1x256xi32>
    %34 = arith.addi %26, %33 : vector<1x256xi32>
    %c16_i32 = arith.constant 16 : i32
    %35 = vector.broadcast %c16_i32 : i32 to vector<1x256xi32>
    %36 = arith.cmpi slt, %34, %35 : vector<1x256xi32>
    %37 = arith.andi %32, %36 : vector<1x256xi1>
    %cst_21 = arith.constant 0.000000e+00 : bf16
    %38 = vector.broadcast %cst_21 : bf16 to vector<8x256xbf16>
    %39 = vector.shape_cast %37 : vector<1x256xi1> to vector<1x256xi1>
    %40 = vector.broadcast %39 : vector<1x256xi1> to vector<8x256xi1>
    %41 = arith.select %40, %28, %38 : vector<8x256xi1>, vector<8x256xbf16>
    %42 = vector.extract_strided_slice %22 {offsets = [0, 0], sizes = [4, 8], strides = [1, 1]} : vector<4x48xbf16> to vector<4x8xbf16>
    %cst_22 = arith.constant dense<0.000000e+00> : vector<4x256xf32>
    %43 = tpu.matmul %42, %41, %cst_22 {dimension_numbers = #tpu.dot_dimension_numbers<[1], [0], [0], [1], [0, 0, 1, 1], [], []>} : vector<4x8xbf16>, vector<8x256xbf16>, vector<4x256xf32> -> vector<4x256xf32>
    %44 = arith.addf %27, %43 : vector<4x256xf32>
    %45 = vector.extract_strided_slice %25 {offsets = [0, 1], sizes = [8, 256], strides = [1, 1]} : vector<8x274xbf16> to vector<8x256xbf16>
    %46 = vector.extract_strided_slice %22 {offsets = [0, 8], sizes = [4, 8], strides = [1, 1]} : vector<4x48xbf16> to vector<4x8xbf16>
    %cst_23 = arith.constant dense<0.000000e+00> : vector<4x256xf32>
    %47 = tpu.matmul %46, %45, %cst_23 {dimension_numbers = #tpu.dot_dimension_numbers<[1], [0], [0], [1], [0, 0, 1, 1], [], []>} : vector<4x8xbf16>, vector<8x256xbf16>, vector<4x256xf32> -> vector<4x256xf32>
    %48 = arith.addf %44, %47 : vector<4x256xf32>
    %49 = vector.extract_strided_slice %25 {offsets = [0, 2], sizes = [8, 256], strides = [1, 1]} : vector<8x274xbf16> to vector<8x256xbf16>
    %c1_i32 = arith.constant 1 : i32
    %50 = vector.broadcast %c1_i32 : i32 to vector<1x256xi32>
    %51 = arith.addi %26, %50 : vector<1x256xi32>
    %c0_i32_24 = arith.constant 0 : i32
    %52 = vector.broadcast %c0_i32_24 : i32 to vector<1x256xi32>
    %53 = arith.cmpi sge, %51, %52 : vector<1x256xi32>
    %c1_i32_25 = arith.constant 1 : i32
    %54 = vector.broadcast %c1_i32_25 : i32 to vector<1x256xi32>
    %55 = arith.addi %26, %54 : vector<1x256xi32>
    %c16_i32_26 = arith.constant 16 : i32
    %56 = vector.broadcast %c16_i32_26 : i32 to vector<1x256xi32>
    %57 = arith.cmpi slt, %55, %56 : vector<1x256xi32>
    %58 = arith.andi %53, %57 : vector<1x256xi1>
    %cst_27 = arith.constant 0.000000e+00 : bf16
    %59 = vector.broadcast %cst_27 : bf16 to vector<8x256xbf16>
    %60 = vector.shape_cast %58 : vector<1x256xi1> to vector<1x256xi1>
    %61 = vector.broadcast %60 : vector<1x256xi1> to vector<8x256xi1>
    %62 = arith.select %61, %49, %59 : vector<8x256xi1>, vector<8x256xbf16>
    %63 = vector.extract_strided_slice %22 {offsets = [0, 16], sizes = [4, 8], strides = [1, 1]} : vector<4x48xbf16> to vector<4x8xbf16>
    %cst_28 = arith.constant dense<0.000000e+00> : vector<4x256xf32>
    %64 = tpu.matmul %63, %62, %cst_28 {dimension_numbers = #tpu.dot_dimension_numbers<[1], [0], [0], [1], [0, 0, 1, 1], [], []>} : vector<4x8xbf16>, vector<8x256xbf16>, vector<4x256xf32> -> vector<4x256xf32>
    %65 = arith.addf %48, %64 : vector<4x256xf32>
    %66 = vector.extract_strided_slice %25 {offsets = [0, 16], sizes = [8, 256], strides = [1, 1]} : vector<8x274xbf16> to vector<8x256xbf16>
    %c-1_i32_29 = arith.constant -1 : i32
    %67 = vector.broadcast %c-1_i32_29 : i32 to vector<1x256xi32>
    %68 = arith.addi %26, %67 : vector<1x256xi32>
    %c0_i32_30 = arith.constant 0 : i32
    %69 = vector.broadcast %c0_i32_30 : i32 to vector<1x256xi32>
    %70 = arith.cmpi sge, %68, %69 : vector<1x256xi32>
    %c-1_i32_31 = arith.constant -1 : i32
    %71 = vector.broadcast %c-1_i32_31 : i32 to vector<1x256xi32>
    %72 = arith.addi %26, %71 : vector<1x256xi32>
    %c16_i32_32 = arith.constant 16 : i32
    %73 = vector.broadcast %c16_i32_32 : i32 to vector<1x256xi32>
    %74 = arith.cmpi slt, %72, %73 : vector<1x256xi32>
    %75 = arith.andi %70, %74 : vector<1x256xi1>
    %cst_33 = arith.constant 0.000000e+00 : bf16
    %76 = vector.broadcast %cst_33 : bf16 to vector<8x256xbf16>
    %77 = vector.shape_cast %75 : vector<1x256xi1> to vector<1x256xi1>
    %78 = vector.broadcast %77 : vector<1x256xi1> to vector<8x256xi1>
    %79 = arith.select %78, %66, %76 : vector<8x256xi1>, vector<8x256xbf16>
    %80 = vector.extract_strided_slice %22 {offsets = [0, 24], sizes = [4, 8], strides = [1, 1]} : vector<4x48xbf16> to vector<4x8xbf16>
    %cst_34 = arith.constant dense<0.000000e+00> : vector<4x256xf32>
    %81 = tpu.matmul %80, %79, %cst_34 {dimension_numbers = #tpu.dot_dimension_numbers<[1], [0], [0], [1], [0, 0, 1, 1], [], []>} : vector<4x8xbf16>, vector<8x256xbf16>, vector<4x256xf32> -> vector<4x256xf32>
    %82 = arith.addf %65, %81 : vector<4x256xf32>
    %83 = vector.extract_strided_slice %25 {offsets = [0, 17], sizes = [8, 256], strides = [1, 1]} : vector<8x274xbf16> to vector<8x256xbf16>
    %84 = vector.extract_strided_slice %22 {offsets = [0, 32], sizes = [4, 8], strides = [1, 1]} : vector<4x48xbf16> to vector<4x8xbf16>
    %cst_35 = arith.constant dense<0.000000e+00> : vector<4x256xf32>
    %85 = tpu.matmul %84, %83, %cst_35 {dimension_numbers = #tpu.dot_dimension_numbers<[1], [0], [0], [1], [0, 0, 1, 1], [], []>} : vector<4x8xbf16>, vector<8x256xbf16>, vector<4x256xf32> -> vector<4x256xf32>
    %86 = arith.addf %82, %85 : vector<4x256xf32>
    %87 = vector.extract_strided_slice %25 {offsets = [0, 18], sizes = [8, 256], strides = [1, 1]} : vector<8x274xbf16> to vector<8x256xbf16>
    %c1_i32_36 = arith.constant 1 : i32
    %88 = vector.broadcast %c1_i32_36 : i32 to vector<1x256xi32>
    %89 = arith.addi %26, %88 : vector<1x256xi32>
    %c0_i32_37 = arith.constant 0 : i32
    %90 = vector.broadcast %c0_i32_37 : i32 to vector<1x256xi32>
    %91 = arith.cmpi sge, %89, %90 : vector<1x256xi32>
    %c1_i32_38 = arith.constant 1 : i32
    %92 = vector.broadcast %c1_i32_38 : i32 to vector<1x256xi32>
    %93 = arith.addi %26, %92 : vector<1x256xi32>
    %c16_i32_39 = arith.constant 16 : i32
    %94 = vector.broadcast %c16_i32_39 : i32 to vector<1x256xi32>
    %95 = arith.cmpi slt, %93, %94 : vector<1x256xi32>
    %96 = arith.andi %91, %95 : vector<1x256xi1>
    %cst_40 = arith.constant 0.000000e+00 : bf16
    %97 = vector.broadcast %cst_40 : bf16 to vector<8x256xbf16>
    %98 = vector.shape_cast %96 : vector<1x256xi1> to vector<1x256xi1>
    %99 = vector.broadcast %98 : vector<1x256xi1> to vector<8x256xi1>
    %100 = arith.select %99, %87, %97 : vector<8x256xi1>, vector<8x256xbf16>
    %101 = vector.extract_strided_slice %22 {offsets = [0, 40], sizes = [4, 8], strides = [1, 1]} : vector<4x48xbf16> to vector<4x8xbf16>
    %cst_41 = arith.constant dense<0.000000e+00> : vector<4x256xf32>
    %102 = tpu.matmul %101, %100, %cst_41 {dimension_numbers = #tpu.dot_dimension_numbers<[1], [0], [0], [1], [0, 0, 1, 1], [], []>} : vector<4x8xbf16>, vector<8x256xbf16>, vector<4x256xf32> -> vector<4x256xf32>
    %103 = arith.addf %86, %102 : vector<4x256xf32>
    %c0_42 = arith.constant 0 : index
    %c0_43 = arith.constant 0 : index
    %104 = vector.load %arg6[%c0_42, %c0_43] : memref<4x1xf32, #tpu.memory_space<vmem>>, vector<4x1xf32>
    %105 = vector.broadcast %104 : vector<4x1xf32> to vector<4x256xf32>
    %106 = arith.addf %103, %105 : vector<4x256xf32>
    %107 = arith.truncf %106 : vector<4x256xf32> to vector<4x256xbf16>
    %c0_44 = arith.constant 0 : index
    %c0_45 = arith.constant 0 : index
    %c0_46 = arith.constant 0 : index
    %108 = vector.load %arg9[%c0_44, %c0_45, %c0_46] : memref<1x4x256xbf16, #tpu.memory_space<vmem>>, vector<1x4x256xbf16>
    %109 = vector.shape_cast %108 : vector<1x4x256xbf16> to vector<4x256xbf16>
    %110 = vector.shape_cast %107 : vector<4x256xbf16> to vector<1x4x256xbf16>
    tpu.vector_store %arg9[%c0_44, %c0_45, %c0_46], %110 {strides = array<i32>} : memref<1x4x256xbf16, #tpu.memory_space<vmem>>, vector<1x4x256xbf16>,
    return
  }
  func.func @transform_0(%arg0: i32) -> (i32, i32) {
    %c0_i32 = arith.constant 0 : i32
    %c0_i32_0 = arith.constant 0 : i32
    %c0_i32_1 = arith.constant 0 : i32
    return %c0_i32, %c0_i32_0 : i32, i32
  }
  func.func @transform_1(%arg0: i32) -> (i32, i32) {
    %c0_i32 = arith.constant 0 : i32
    %c0_i32_0 = arith.constant 0 : i32
    %c0_i32_1 = arith.constant 0 : i32
    return %c0_i32, %c0_i32_0 : i32, i32
  }
  func.func @transform_2(%arg0: i32) -> (i32, i32) {
    %c0_i32 = arith.constant 0 : i32
    %c0_i32_0 = arith.constant 0 : i32
    %c0_i32_1 = arith.constant 0 : i32
    return %c0_i32, %c0_i32_0 : i32, i32
  }
  func.func @transform_3(%arg0: i32) -> (i32, i32) {
    %c0_i32 = arith.constant 0 : i32
    %c0_i32_0 = arith.constant 0 : i32
    %c0_i32_1 = arith.constant 0 : i32
    return %c0_i32, %c0_i32_0 : i32, i32
  }
  func.func @transform_4(%arg0: i32) -> (i32, i32) {
    %c0_i32 = arith.constant 0 : i32
    %c0_i32_0 = arith.constant 0 : i32
    %c0_i32_1 = arith.constant 0 : i32
    return %c0_i32, %c0_i32_0 : i32, i32
  }
  func.func @transform_5(%arg0: i32) -> (i32, i32) {
    %c0_i32 = arith.constant 0 : i32
    %c0_i32_0 = arith.constant 0 : i32
    %c0_i32_1 = arith.constant 0 : i32
    return %c0_i32, %c0_i32_0 : i32, i32
  }
  func.func @transform_6(%arg0: i32) -> (i32, i32) {
    %c0_i32 = arith.constant 0 : i32
    %c0_i32_0 = arith.constant 0 : i32
    %c0_i32_1 = arith.constant 0 : i32
    return %c0_i32, %c0_i32_0 : i32, i32
  }
  func.func @transform_7(%arg0: i32) -> (i32, i32, i32) {
    %c0_i32 = arith.constant 0 : i32
    %c0_i32_0 = arith.constant 0 : i32
    %c0_i32_1 = arith.constant 0 : i32
    return %arg0, %c0_i32, %c0_i32_0 : i32, i32, i32
  }
  func.func @transform_8(%arg0: i32) -> (i32, i32, i32) {
    %c0_i32 = arith.constant 0 : i32
    %c0_i32_0 = arith.constant 0 : i32
    %c0_i32_1 = arith.constant 0 : i32
    return %arg0, %c0_i32, %c0_i32_0 : i32, i32, i32
  }
}

module attributes {stable_mosaic.version = 11 : i64} {
  func.func @_dense_layer_kernel(%arg0: i32, %arg1: memref<12x1xf32, #tpu.memory_space<vmem>>, %arg2: memref<12x1xf32, #tpu.memory_space<vmem>>, %arg3: memref<8x12xbf16, #tpu.memory_space<vmem>>, %arg4: memref<8x1xf32, #tpu.memory_space<vmem>>, %arg5: memref<4x48xbf16, #tpu.memory_space<vmem>>, %arg6: memref<4x1xf32, #tpu.memory_space<vmem>>, %arg7: memref<1x256xi32, #tpu.memory_space<vmem>>, %arg8: memref<1x8x256xbf16, #tpu.memory_space<vmem>>, %arg9: memref<1x4x256xbf16, #tpu.memory_space<vmem>>, %arg10: memref<1x4x256xbf16, #tpu.memory_space<vmem>>) attributes {dimension_semantics = [#tpu.dimension_semantics<parallel>], iteration_bounds = array<i64: 2>, scalar_prefetch = 0 : i64, scratch_operands = 0 : i64, tpu.core_type = #tpu.core_type<tc>, window_params = [{pipeline_mode = #tpu.pipeline_mode<synchronous>, transform_indices = @transform_0, window_bounds = array<i64: 12, 1>}, {pipeline_mode = #tpu.pipeline_mode<synchronous>, transform_indices = @transform_1, window_bounds = array<i64: 12, 1>}, {pipeline_mode = #tpu.pipeline_mode<synchronous>, transform_indices = @transform_2, window_bounds = array<i64: 8, 12>}, {pipeline_mode = #tpu.pipeline_mode<synchronous>, transform_indices = @transform_3, window_bounds = array<i64: 8, 1>}, {pipeline_mode = #tpu.pipeline_mode<synchronous>, transform_indices = @transform_4, window_bounds = array<i64: 4, 48>}, {pipeline_mode = #tpu.pipeline_mode<synchronous>, transform_indices = @transform_5, window_bounds = array<i64: 4, 1>}, {pipeline_mode = #tpu.pipeline_mode<synchronous>, transform_indices = @transform_6, window_bounds = array<i64: 1, 256>}, {transform_indices = @transform_7, window_bounds = array<i64: 1, 8, 256>}, {transform_indices = @transform_8, window_bounds = array<i64: 1, 4, 256>}, {transform_indices = @transform_9, window_bounds = array<i64: 1, 4, 256>}]} {
    %c0 = arith.constant 0 : index
    %c0_0 = arith.constant 0 : index
    %0 = vector.load %arg1[%c0, %c0_0] : memref<12x1xf32, #tpu.memory_space<vmem>>, vector<12x1xf32>
    %c0_1 = arith.constant 0 : index
    %c0_2 = arith.constant 0 : index
    %1 = vector.load %arg2[%c0_1, %c0_2] : memref<12x1xf32, #tpu.memory_space<vmem>>, vector<12x1xf32>
    %c0_3 = arith.constant 0 : index
    %c0_4 = arith.constant 0 : index
    %2 = vector.load %arg3[%c0_3, %c0_4] : memref<8x12xbf16, #tpu.memory_space<vmem>>, vector<8x12xbf16>
    %cst = arith.constant 0.000000e+00 : f32
    %3 = vector.broadcast %cst : f32 to vector<8x256xf32>
    %c0_5 = arith.constant 0 : index
    %c0_6 = arith.constant 0 : index
    %c0_7 = arith.constant 0 : index
    %4 = vector.load %arg8[%c0_5, %c0_6, %c0_7] : memref<1x8x256xbf16, #tpu.memory_space<vmem>>, vector<1x8x256xbf16>
    %5 = vector.shape_cast %4 : vector<1x8x256xbf16> to vector<8x256xbf16>
    %6 = arith.extf %5 : vector<8x256xbf16> to vector<8x256xf32>
    %7 = vector.extract_strided_slice %0 {offsets = [0, 0], sizes = [8, 1], strides = [1, 1]} : vector<12x1xf32> to vector<8x1xf32>
    %8 = vector.broadcast %7 : vector<8x1xf32> to vector<8x256xf32>
    %9 = arith.mulf %6, %8 : vector<8x256xf32>
    %10 = vector.extract_strided_slice %1 {offsets = [0, 0], sizes = [8, 1], strides = [1, 1]} : vector<12x1xf32> to vector<8x1xf32>
    %11 = vector.broadcast %10 : vector<8x1xf32> to vector<8x256xf32>
    %12 = arith.addf %9, %11 : vector<8x256xf32>
    %cst_8 = arith.constant 0.000000e+00 : f32
    %13 = vector.broadcast %cst_8 : f32 to vector<8x256xf32>
    %14 = arith.maximumf %12, %13 : vector<8x256xf32>
    %15 = vector.extract_strided_slice %2 {offsets = [0, 0], sizes = [8, 8], strides = [1, 1]} : vector<8x12xbf16> to vector<8x8xbf16>
    %16 = arith.truncf %14 : vector<8x256xf32> to vector<8x256xbf16>
    %cst_9 = arith.constant dense<0.000000e+00> : vector<8x256xf32>
    %17 = tpu.matmul %15, %16, %cst_9 {dimension_numbers = #tpu.dot_dimension_numbers<[1], [0], [0], [1], [0, 0, 1, 1], [], []>} : vector<8x8xbf16>, vector<8x256xbf16>, vector<8x256xf32> -> vector<8x256xf32>
    %18 = arith.addf %3, %17 : vector<8x256xf32>
    %c0_10 = arith.constant 0 : index
    %c0_11 = arith.constant 0 : index
    %c0_12 = arith.constant 0 : index
    %19 = vector.load %arg9[%c0_10, %c0_11, %c0_12] : memref<1x4x256xbf16, #tpu.memory_space<vmem>>, vector<1x4x256xbf16>
    %20 = vector.shape_cast %19 : vector<1x4x256xbf16> to vector<4x256xbf16>
    %21 = arith.extf %20 : vector<4x256xbf16> to vector<4x256xf32>
    %22 = vector.extract_strided_slice %0 {offsets = [8, 0], sizes = [4, 1], strides = [1, 1]} : vector<12x1xf32> to vector<4x1xf32>
    %23 = vector.broadcast %22 : vector<4x1xf32> to vector<4x256xf32>
    %24 = arith.mulf %21, %23 : vector<4x256xf32>
    %25 = vector.extract_strided_slice %1 {offsets = [8, 0], sizes = [4, 1], strides = [1, 1]} : vector<12x1xf32> to vector<4x1xf32>
    %26 = vector.broadcast %25 : vector<4x1xf32> to vector<4x256xf32>
    %27 = arith.addf %24, %26 : vector<4x256xf32>
    %cst_13 = arith.constant 0.000000e+00 : f32
    %28 = vector.broadcast %cst_13 : f32 to vector<4x256xf32>
    %29 = arith.maximumf %27, %28 : vector<4x256xf32>
    %30 = vector.extract_strided_slice %2 {offsets = [0, 8], sizes = [8, 4], strides = [1, 1]} : vector<8x12xbf16> to vector<8x4xbf16>
    %31 = arith.truncf %29 : vector<4x256xf32> to vector<4x256xbf16>
    %cst_14 = arith.constant dense<0.000000e+00> : vector<8x256xf32>
    %32 = tpu.matmul %30, %31, %cst_14 {dimension_numbers = #tpu.dot_dimension_numbers<[1], [0], [0], [1], [0, 0, 1, 1], [], []>} : vector<8x4xbf16>, vector<4x256xbf16>, vector<8x256xf32> -> vector<8x256xf32>
    %33 = arith.addf %18, %32 : vector<8x256xf32>
    %c0_15 = arith.constant 0 : index
    %c0_16 = arith.constant 0 : index
    %34 = vector.load %arg4[%c0_15, %c0_16] : memref<8x1xf32, #tpu.memory_space<vmem>>, vector<8x1xf32>
    %35 = vector.broadcast %34 : vector<8x1xf32> to vector<8x256xf32>
    %36 = arith.addf %33, %35 : vector<8x256xf32>
    %cst_17 = arith.constant 0.000000e+00 : f32
    %37 = vector.broadcast %cst_17 : f32 to vector<8x256xf32>
    %38 = arith.maximumf %36, %37 : vector<8x256xf32>
    %39 = arith.truncf %38 : vector<8x256xf32> to vector<8x256xbf16>
    %c0_18 = arith.constant 0 : index
    %c0_19 = arith.constant 0 : index
    %40 = vector.load %arg5[%c0_18, %c0_19] : memref<4x48xbf16, #tpu.memory_space<vmem>>, vector<4x48xbf16>
    %cst_20 = arith.constant 0.000000e+00 : bf16
    %41 = vector.broadcast %cst_20 : bf16 to vector<8x17xbf16>
    %cst_21 = arith.constant 0.000000e+00 : bf16
    %42 = vector.broadcast %cst_21 : bf16 to vector<8x1xbf16>
    %43 = tpu.concatenate %41, %39, %42 in 1 : vector<8x17xbf16>, vector<8x256xbf16>, vector<8x1xbf16> -> vector<8x274xbf16>
    %c0_22 = arith.constant 0 : index
    %c0_23 = arith.constant 0 : index
    %44 = vector.load %arg7[%c0_22, %c0_23] : memref<1x256xi32, #tpu.memory_space<vmem>>, vector<1x256xi32>
    %cst_24 = arith.constant 0.000000e+00 : f32
    %45 = vector.broadcast %cst_24 : f32 to vector<4x256xf32>
    %46 = vector.extract_strided_slice %43 {offsets = [0, 0], sizes = [8, 256], strides = [1, 1]} : vector<8x274xbf16> to vector<8x256xbf16>
    %c-1_i32 = arith.constant -1 : i32
    %47 = vector.broadcast %c-1_i32 : i32 to vector<1x256xi32>
    %48 = arith.addi %44, %47 : vector<1x256xi32>
    %c0_i32 = arith.constant 0 : i32
    %49 = vector.broadcast %c0_i32 : i32 to vector<1x256xi32>
    %50 = arith.cmpi sge, %48, %49 : vector<1x256xi32>
    %c-1_i32_25 = arith.constant -1 : i32
    %51 = vector.broadcast %c-1_i32_25 : i32 to vector<1x256xi32>
    %52 = arith.addi %44, %51 : vector<1x256xi32>
    %c16_i32 = arith.constant 16 : i32
    %53 = vector.broadcast %c16_i32 : i32 to vector<1x256xi32>
    %54 = arith.cmpi slt, %52, %53 : vector<1x256xi32>
    %55 = arith.andi %50, %54 : vector<1x256xi1>
    %cst_26 = arith.constant 0.000000e+00 : bf16
    %56 = vector.broadcast %cst_26 : bf16 to vector<8x256xbf16>
    %57 = vector.shape_cast %55 : vector<1x256xi1> to vector<1x256xi1>
    %58 = vector.broadcast %57 : vector<1x256xi1> to vector<8x256xi1>
    %59 = arith.select %58, %46, %56 : vector<8x256xi1>, vector<8x256xbf16>
    %60 = vector.extract_strided_slice %40 {offsets = [0, 0], sizes = [4, 8], strides = [1, 1]} : vector<4x48xbf16> to vector<4x8xbf16>
    %cst_27 = arith.constant dense<0.000000e+00> : vector<4x256xf32>
    %61 = tpu.matmul %60, %59, %cst_27 {dimension_numbers = #tpu.dot_dimension_numbers<[1], [0], [0], [1], [0, 0, 1, 1], [], []>} : vector<4x8xbf16>, vector<8x256xbf16>, vector<4x256xf32> -> vector<4x256xf32>
    %62 = arith.addf %45, %61 : vector<4x256xf32>
    %63 = vector.extract_strided_slice %43 {offsets = [0, 1], sizes = [8, 256], strides = [1, 1]} : vector<8x274xbf16> to vector<8x256xbf16>
    %64 = vector.extract_strided_slice %40 {offsets = [0, 8], sizes = [4, 8], strides = [1, 1]} : vector<4x48xbf16> to vector<4x8xbf16>
    %cst_28 = arith.constant dense<0.000000e+00> : vector<4x256xf32>
    %65 = tpu.matmul %64, %63, %cst_28 {dimension_numbers = #tpu.dot_dimension_numbers<[1], [0], [0], [1], [0, 0, 1, 1], [], []>} : vector<4x8xbf16>, vector<8x256xbf16>, vector<4x256xf32> -> vector<4x256xf32>
    %66 = arith.addf %62, %65 : vector<4x256xf32>
    %67 = vector.extract_strided_slice %43 {offsets = [0, 2], sizes = [8, 256], strides = [1, 1]} : vector<8x274xbf16> to vector<8x256xbf16>
    %c1_i32 = arith.constant 1 : i32
    %68 = vector.broadcast %c1_i32 : i32 to vector<1x256xi32>
    %69 = arith.addi %44, %68 : vector<1x256xi32>
    %c0_i32_29 = arith.constant 0 : i32
    %70 = vector.broadcast %c0_i32_29 : i32 to vector<1x256xi32>
    %71 = arith.cmpi sge, %69, %70 : vector<1x256xi32>
    %c1_i32_30 = arith.constant 1 : i32
    %72 = vector.broadcast %c1_i32_30 : i32 to vector<1x256xi32>
    %73 = arith.addi %44, %72 : vector<1x256xi32>
    %c16_i32_31 = arith.constant 16 : i32
    %74 = vector.broadcast %c16_i32_31 : i32 to vector<1x256xi32>
    %75 = arith.cmpi slt, %73, %74 : vector<1x256xi32>
    %76 = arith.andi %71, %75 : vector<1x256xi1>
    %cst_32 = arith.constant 0.000000e+00 : bf16
    %77 = vector.broadcast %cst_32 : bf16 to vector<8x256xbf16>
    %78 = vector.shape_cast %76 : vector<1x256xi1> to vector<1x256xi1>
    %79 = vector.broadcast %78 : vector<1x256xi1> to vector<8x256xi1>
    %80 = arith.select %79, %67, %77 : vector<8x256xi1>, vector<8x256xbf16>
    %81 = vector.extract_strided_slice %40 {offsets = [0, 16], sizes = [4, 8], strides = [1, 1]} : vector<4x48xbf16> to vector<4x8xbf16>
    %cst_33 = arith.constant dense<0.000000e+00> : vector<4x256xf32>
    %82 = tpu.matmul %81, %80, %cst_33 {dimension_numbers = #tpu.dot_dimension_numbers<[1], [0], [0], [1], [0, 0, 1, 1], [], []>} : vector<4x8xbf16>, vector<8x256xbf16>, vector<4x256xf32> -> vector<4x256xf32>
    %83 = arith.addf %66, %82 : vector<4x256xf32>
    %84 = vector.extract_strided_slice %43 {offsets = [0, 16], sizes = [8, 256], strides = [1, 1]} : vector<8x274xbf16> to vector<8x256xbf16>
    %c-1_i32_34 = arith.constant -1 : i32
    %85 = vector.broadcast %c-1_i32_34 : i32 to vector<1x256xi32>
    %86 = arith.addi %44, %85 : vector<1x256xi32>
    %c0_i32_35 = arith.constant 0 : i32
    %87 = vector.broadcast %c0_i32_35 : i32 to vector<1x256xi32>
    %88 = arith.cmpi sge, %86, %87 : vector<1x256xi32>
    %c-1_i32_36 = arith.constant -1 : i32
    %89 = vector.broadcast %c-1_i32_36 : i32 to vector<1x256xi32>
    %90 = arith.addi %44, %89 : vector<1x256xi32>
    %c16_i32_37 = arith.constant 16 : i32
    %91 = vector.broadcast %c16_i32_37 : i32 to vector<1x256xi32>
    %92 = arith.cmpi slt, %90, %91 : vector<1x256xi32>
    %93 = arith.andi %88, %92 : vector<1x256xi1>
    %cst_38 = arith.constant 0.000000e+00 : bf16
    %94 = vector.broadcast %cst_38 : bf16 to vector<8x256xbf16>
    %95 = vector.shape_cast %93 : vector<1x256xi1> to vector<1x256xi1>
    %96 = vector.broadcast %95 : vector<1x256xi1> to vector<8x256xi1>
    %97 = arith.select %96, %84, %94 : vector<8x256xi1>, vector<8x256xbf16>
    %98 = vector.extract_strided_slice %40 {offsets = [0, 24], sizes = [4, 8], strides = [1, 1]} : vector<4x48xbf16> to vector<4x8xbf16>
    %cst_39 = arith.constant dense<0.000000e+00> : vector<4x256xf32>
    %99 = tpu.matmul %98, %97, %cst_39 {dimension_numbers = #tpu.dot_dimension_numbers<[1], [0], [0], [1], [0, 0, 1, 1], [], []>} : vector<4x8xbf16>, vector<8x256xbf16>, vector<4x256xf32> -> vector<4x256xf32>
    %100 = arith.addf %83, %99 : vector<4x256xf32>
    %101 = vector.extract_strided_slice %43 {offsets = [0, 17], sizes = [8, 256], strides = [1, 1]} : vector<8x274xbf16> to vector<8x256xbf16>
    %102 = vector.extract_strided_slice %40 {offsets = [0, 32], sizes = [4, 8], strides = [1, 1]} : vector<4x48xbf16> to vector<4x8xbf16>
    %cst_40 = arith.constant dense<0.000000e+00> : vector<4x256xf32>
    %103 = tpu.matmul %102, %101, %cst_40 {dimension_numbers = #tpu.dot_dimension_numbers<[1], [0], [0], [1], [0, 0, 1, 1], [], []>} : vector<4x8xbf16>, vector<8x256xbf16>, vector<4x256xf32> -> vector<4x256xf32>
    %104 = arith.addf %100, %103 : vector<4x256xf32>
    %105 = vector.extract_strided_slice %43 {offsets = [0, 18], sizes = [8, 256], strides = [1, 1]} : vector<8x274xbf16> to vector<8x256xbf16>
    %c1_i32_41 = arith.constant 1 : i32
    %106 = vector.broadcast %c1_i32_41 : i32 to vector<1x256xi32>
    %107 = arith.addi %44, %106 : vector<1x256xi32>
    %c0_i32_42 = arith.constant 0 : i32
    %108 = vector.broadcast %c0_i32_42 : i32 to vector<1x256xi32>
    %109 = arith.cmpi sge, %107, %108 : vector<1x256xi32>
    %c1_i32_43 = arith.constant 1 : i32
    %110 = vector.broadcast %c1_i32_43 : i32 to vector<1x256xi32>
    %111 = arith.addi %44, %110 : vector<1x256xi32>
    %c16_i32_44 = arith.constant 16 : i32
    %112 = vector.broadcast %c16_i32_44 : i32 to vector<1x256xi32>
    %113 = arith.cmpi slt, %111, %112 : vector<1x256xi32>
    %114 = arith.andi %109, %113 : vector<1x256xi1>
    %cst_45 = arith.constant 0.000000e+00 : bf16
    %115 = vector.broadcast %cst_45 : bf16 to vector<8x256xbf16>
    %116 = vector.shape_cast %114 : vector<1x256xi1> to vector<1x256xi1>
    %117 = vector.broadcast %116 : vector<1x256xi1> to vector<8x256xi1>
    %118 = arith.select %117, %105, %115 : vector<8x256xi1>, vector<8x256xbf16>
    %119 = vector.extract_strided_slice %40 {offsets = [0, 40], sizes = [4, 8], strides = [1, 1]} : vector<4x48xbf16> to vector<4x8xbf16>
    %cst_46 = arith.constant dense<0.000000e+00> : vector<4x256xf32>
    %120 = tpu.matmul %119, %118, %cst_46 {dimension_numbers = #tpu.dot_dimension_numbers<[1], [0], [0], [1], [0, 0, 1, 1], [], []>} : vector<4x8xbf16>, vector<8x256xbf16>, vector<4x256xf32> -> vector<4x256xf32>
    %121 = arith.addf %104, %120 : vector<4x256xf32>
    %c0_47 = arith.constant 0 : index
    %c0_48 = arith.constant 0 : index
    %122 = vector.load %arg6[%c0_47, %c0_48] : memref<4x1xf32, #tpu.memory_space<vmem>>, vector<4x1xf32>
    %123 = vector.broadcast %122 : vector<4x1xf32> to vector<4x256xf32>
    %124 = arith.addf %121, %123 : vector<4x256xf32>
    %125 = arith.truncf %124 : vector<4x256xf32> to vector<4x256xbf16>
    %c0_49 = arith.constant 0 : index
    %c0_50 = arith.constant 0 : index
    %c0_51 = arith.constant 0 : index
    %126 = vector.load %arg10[%c0_49, %c0_50, %c0_51] : memref<1x4x256xbf16, #tpu.memory_space<vmem>>, vector<1x4x256xbf16>
    %127 = vector.shape_cast %126 : vector<1x4x256xbf16> to vector<4x256xbf16>
    %128 = vector.shape_cast %125 : vector<4x256xbf16> to vector<1x4x256xbf16>
    tpu.vector_store %arg10[%c0_49, %c0_50, %c0_51], %128 {strides = array<i32>} : memref<1x4x256xbf16, #tpu.memory_space<vmem>>, vector<1x4x256xbf16>,
    return
  }
  func.func @transform_0(%arg0: i32) -> (i32, i32) {
    %c0_i32 = arith.constant 0 : i32
    %c0_i32_0 = arith.constant 0 : i32
    %c0_i32_1 = arith.constant 0 : i32
    return %c0_i32, %c0_i32_0 : i32, i32
  }
  func.func @transform_1(%arg0: i32) -> (i32, i32) {
    %c0_i32 = arith.constant 0 : i32
    %c0_i32_0 = arith.constant 0 : i32
    %c0_i32_1 = arith.constant 0 : i32
    return %c0_i32, %c0_i32_0 : i32, i32
  }
  func.func @transform_2(%arg0: i32) -> (i32, i32) {
    %c0_i32 = arith.constant 0 : i32
    %c0_i32_0 = arith.constant 0 : i32
    %c0_i32_1 = arith.constant 0 : i32
    return %c0_i32, %c0_i32_0 : i32, i32
  }
  func.func @transform_3(%arg0: i32) -> (i32, i32) {
    %c0_i32 = arith.constant 0 : i32
    %c0_i32_0 = arith.constant 0 : i32
    %c0_i32_1 = arith.constant 0 : i32
    return %c0_i32, %c0_i32_0 : i32, i32
  }
  func.func @transform_4(%arg0: i32) -> (i32, i32) {
    %c0_i32 = arith.constant 0 : i32
    %c0_i32_0 = arith.constant 0 : i32
    %c0_i32_1 = arith.constant 0 : i32
    return %c0_i32, %c0_i32_0 : i32, i32
  }
  func.func @transform_5(%arg0: i32) -> (i32, i32) {
    %c0_i32 = arith.constant 0 : i32
    %c0_i32_0 = arith.constant 0 : i32
    %c0_i32_1 = arith.constant 0 : i32
    return %c0_i32, %c0_i32_0 : i32, i32
  }
  func.func @transform_6(%arg0: i32) -> (i32, i32) {
    %c0_i32 = arith.constant 0 : i32
    %c0_i32_0 = arith.constant 0 : i32
    %c0_i32_1 = arith.constant 0 : i32
    return %c0_i32, %c0_i32_0 : i32, i32
  }
  func.func @transform_7(%arg0: i32) -> (i32, i32, i32) {
    %c0_i32 = arith.constant 0 : i32
    %c0_i32_0 = arith.constant 0 : i32
    %c0_i32_1 = arith.constant 0 : i32
    return %arg0, %c0_i32, %c0_i32_0 : i32, i32, i32
  }
  func.func @transform_8(%arg0: i32) -> (i32, i32, i32) {
    %c0_i32 = arith.constant 0 : i32
    %c0_i32_0 = arith.constant 0 : i32
    %c0_i32_1 = arith.constant 0 : i32
    return %arg0, %c0_i32, %c0_i32_0 : i32, i32, i32
  }
  func.func @transform_9(%arg0: i32) -> (i32, i32, i32) {
    %c0_i32 = arith.constant 0 : i32
    %c0_i32_0 = arith.constant 0 : i32
    %c0_i32_1 = arith.constant 0 : i32
    return %arg0, %c0_i32, %c0_i32_0 : i32, i32, i32
  }
}

module attributes {stable_mosaic.version = 11 : i64} {
  func.func @_fused_conv1x1_kernel(%arg0: i32, %arg1: memref<16x1xf32, #tpu.memory_space<vmem>>, %arg2: memref<16x1xf32, #tpu.memory_space<vmem>>, %arg3: memref<8x16xbf16, #tpu.memory_space<vmem>>, %arg4: memref<8x1xf32, #tpu.memory_space<vmem>>, %arg5: memref<1x8x256xbf16, #tpu.memory_space<vmem>>, %arg6: memref<1x4x256xbf16, #tpu.memory_space<vmem>>, %arg7: memref<1x4x256xbf16, #tpu.memory_space<vmem>>, %arg8: memref<1x8x256xbf16, #tpu.memory_space<vmem>>) attributes {dimension_semantics = [#tpu.dimension_semantics<parallel>], iteration_bounds = array<i64: 2>, scalar_prefetch = 0 : i64, scratch_operands = 0 : i64, tpu.core_type = #tpu.core_type<tc>, window_params = [{pipeline_mode = #tpu.pipeline_mode<synchronous>, transform_indices = @transform_0, window_bounds = array<i64: 16, 1>}, {pipeline_mode = #tpu.pipeline_mode<synchronous>, transform_indices = @transform_1, window_bounds = array<i64: 16, 1>}, {pipeline_mode = #tpu.pipeline_mode<synchronous>, transform_indices = @transform_2, window_bounds = array<i64: 8, 16>}, {pipeline_mode = #tpu.pipeline_mode<synchronous>, transform_indices = @transform_3, window_bounds = array<i64: 8, 1>}, {transform_indices = @transform_4, window_bounds = array<i64: 1, 8, 256>}, {transform_indices = @transform_5, window_bounds = array<i64: 1, 4, 256>}, {transform_indices = @transform_6, window_bounds = array<i64: 1, 4, 256>}, {transform_indices = @transform_7, window_bounds = array<i64: 1, 8, 256>}]} {
    %c0 = arith.constant 0 : index
    %c0_0 = arith.constant 0 : index
    %0 = vector.load %arg3[%c0, %c0_0] : memref<8x16xbf16, #tpu.memory_space<vmem>>, vector<8x16xbf16>
    %c0_1 = arith.constant 0 : index
    %c0_2 = arith.constant 0 : index
    %1 = vector.load %arg1[%c0_1, %c0_2] : memref<16x1xf32, #tpu.memory_space<vmem>>, vector<16x1xf32>
    %c0_3 = arith.constant 0 : index
    %c0_4 = arith.constant 0 : index
    %2 = vector.load %arg2[%c0_3, %c0_4] : memref<16x1xf32, #tpu.memory_space<vmem>>, vector<16x1xf32>
    %cst = arith.constant 0.000000e+00 : f32
    %3 = vector.broadcast %cst : f32 to vector<8x256xf32>
    %c0_5 = arith.constant 0 : index
    %c0_6 = arith.constant 0 : index
    %c0_7 = arith.constant 0 : index
    %4 = vector.load %arg5[%c0_5, %c0_6, %c0_7] : memref<1x8x256xbf16, #tpu.memory_space<vmem>>, vector<1x8x256xbf16>
    %5 = vector.shape_cast %4 : vector<1x8x256xbf16> to vector<8x256xbf16>
    %6 = arith.extf %5 : vector<8x256xbf16> to vector<8x256xf32>
    %7 = vector.extract_strided_slice %1 {offsets = [0, 0], sizes = [8, 1], strides = [1, 1]} : vector<16x1xf32> to vector<8x1xf32>
    %8 = vector.broadcast %7 : vector<8x1xf32> to vector<8x256xf32>
    %9 = arith.mulf %6, %8 : vector<8x256xf32>
    %10 = vector.extract_strided_slice %2 {offsets = [0, 0], sizes = [8, 1], strides = [1, 1]} : vector<16x1xf32> to vector<8x1xf32>
    %11 = vector.broadcast %10 : vector<8x1xf32> to vector<8x256xf32>
    %12 = arith.addf %9, %11 : vector<8x256xf32>
    %cst_8 = arith.constant 0.000000e+00 : f32
    %13 = vector.broadcast %cst_8 : f32 to vector<8x256xf32>
    %14 = arith.maximumf %12, %13 : vector<8x256xf32>
    %15 = arith.truncf %14 : vector<8x256xf32> to vector<8x256xbf16>
    %16 = vector.extract_strided_slice %0 {offsets = [0, 0], sizes = [8, 8], strides = [1, 1]} : vector<8x16xbf16> to vector<8x8xbf16>
    %cst_9 = arith.constant dense<0.000000e+00> : vector<8x256xf32>
    %17 = tpu.matmul %16, %15, %cst_9 {dimension_numbers = #tpu.dot_dimension_numbers<[1], [0], [0], [1], [0, 0, 1, 1], [], []>} : vector<8x8xbf16>, vector<8x256xbf16>, vector<8x256xf32> -> vector<8x256xf32>
    %18 = arith.addf %3, %17 : vector<8x256xf32>
    %c0_10 = arith.constant 0 : index
    %c0_11 = arith.constant 0 : index
    %c0_12 = arith.constant 0 : index
    %19 = vector.load %arg6[%c0_10, %c0_11, %c0_12] : memref<1x4x256xbf16, #tpu.memory_space<vmem>>, vector<1x4x256xbf16>
    %20 = vector.shape_cast %19 : vector<1x4x256xbf16> to vector<4x256xbf16>
    %21 = arith.extf %20 : vector<4x256xbf16> to vector<4x256xf32>
    %22 = vector.extract_strided_slice %1 {offsets = [8, 0], sizes = [4, 1], strides = [1, 1]} : vector<16x1xf32> to vector<4x1xf32>
    %23 = vector.broadcast %22 : vector<4x1xf32> to vector<4x256xf32>
    %24 = arith.mulf %21, %23 : vector<4x256xf32>
    %25 = vector.extract_strided_slice %2 {offsets = [8, 0], sizes = [4, 1], strides = [1, 1]} : vector<16x1xf32> to vector<4x1xf32>
    %26 = vector.broadcast %25 : vector<4x1xf32> to vector<4x256xf32>
    %27 = arith.addf %24, %26 : vector<4x256xf32>
    %cst_13 = arith.constant 0.000000e+00 : f32
    %28 = vector.broadcast %cst_13 : f32 to vector<4x256xf32>
    %29 = arith.maximumf %27, %28 : vector<4x256xf32>
    %30 = arith.truncf %29 : vector<4x256xf32> to vector<4x256xbf16>
    %31 = vector.extract_strided_slice %0 {offsets = [0, 8], sizes = [8, 4], strides = [1, 1]} : vector<8x16xbf16> to vector<8x4xbf16>
    %cst_14 = arith.constant dense<0.000000e+00> : vector<8x256xf32>
    %32 = tpu.matmul %31, %30, %cst_14 {dimension_numbers = #tpu.dot_dimension_numbers<[1], [0], [0], [1], [0, 0, 1, 1], [], []>} : vector<8x4xbf16>, vector<4x256xbf16>, vector<8x256xf32> -> vector<8x256xf32>
    %33 = arith.addf %18, %32 : vector<8x256xf32>
    %c0_15 = arith.constant 0 : index
    %c0_16 = arith.constant 0 : index
    %c0_17 = arith.constant 0 : index
    %34 = vector.load %arg7[%c0_15, %c0_16, %c0_17] : memref<1x4x256xbf16, #tpu.memory_space<vmem>>, vector<1x4x256xbf16>
    %35 = vector.shape_cast %34 : vector<1x4x256xbf16> to vector<4x256xbf16>
    %36 = arith.extf %35 : vector<4x256xbf16> to vector<4x256xf32>
    %37 = vector.extract_strided_slice %1 {offsets = [12, 0], sizes = [4, 1], strides = [1, 1]} : vector<16x1xf32> to vector<4x1xf32>
    %38 = vector.broadcast %37 : vector<4x1xf32> to vector<4x256xf32>
    %39 = arith.mulf %36, %38 : vector<4x256xf32>
    %40 = vector.extract_strided_slice %2 {offsets = [12, 0], sizes = [4, 1], strides = [1, 1]} : vector<16x1xf32> to vector<4x1xf32>
    %41 = vector.broadcast %40 : vector<4x1xf32> to vector<4x256xf32>
    %42 = arith.addf %39, %41 : vector<4x256xf32>
    %cst_18 = arith.constant 0.000000e+00 : f32
    %43 = vector.broadcast %cst_18 : f32 to vector<4x256xf32>
    %44 = arith.maximumf %42, %43 : vector<4x256xf32>
    %45 = arith.truncf %44 : vector<4x256xf32> to vector<4x256xbf16>
    %46 = vector.extract_strided_slice %0 {offsets = [0, 12], sizes = [8, 4], strides = [1, 1]} : vector<8x16xbf16> to vector<8x4xbf16>
    %cst_19 = arith.constant dense<0.000000e+00> : vector<8x256xf32>
    %47 = tpu.matmul %46, %45, %cst_19 {dimension_numbers = #tpu.dot_dimension_numbers<[1], [0], [0], [1], [0, 0, 1, 1], [], []>} : vector<8x4xbf16>, vector<4x256xbf16>, vector<8x256xf32> -> vector<8x256xf32>
    %48 = arith.addf %33, %47 : vector<8x256xf32>
    %c0_20 = arith.constant 0 : index
    %c0_21 = arith.constant 0 : index
    %49 = vector.load %arg4[%c0_20, %c0_21] : memref<8x1xf32, #tpu.memory_space<vmem>>, vector<8x1xf32>
    %50 = vector.broadcast %49 : vector<8x1xf32> to vector<8x256xf32>
    %51 = arith.addf %48, %50 : vector<8x256xf32>
    %52 = arith.truncf %51 : vector<8x256xf32> to vector<8x256xbf16>
    %c0_22 = arith.constant 0 : index
    %c0_23 = arith.constant 0 : index
    %c0_24 = arith.constant 0 : index
    %53 = vector.load %arg8[%c0_22, %c0_23, %c0_24] : memref<1x8x256xbf16, #tpu.memory_space<vmem>>, vector<1x8x256xbf16>
    %54 = vector.shape_cast %53 : vector<1x8x256xbf16> to vector<8x256xbf16>
    %55 = vector.shape_cast %52 : vector<8x256xbf16> to vector<1x8x256xbf16>
    tpu.vector_store %arg8[%c0_22, %c0_23, %c0_24], %55 {strides = array<i32>} : memref<1x8x256xbf16, #tpu.memory_space<vmem>>, vector<1x8x256xbf16>,
    return
  }
  func.func @transform_0(%arg0: i32) -> (i32, i32) {
    %c0_i32 = arith.constant 0 : i32
    %c0_i32_0 = arith.constant 0 : i32
    %c0_i32_1 = arith.constant 0 : i32
    return %c0_i32, %c0_i32_0 : i32, i32
  }
  func.func @transform_1(%arg0: i32) -> (i32, i32) {
    %c0_i32 = arith.constant 0 : i32
    %c0_i32_0 = arith.constant 0 : i32
    %c0_i32_1 = arith.constant 0 : i32
    return %c0_i32, %c0_i32_0 : i32, i32
  }
  func.func @transform_2(%arg0: i32) -> (i32, i32) {
    %c0_i32 = arith.constant 0 : i32
    %c0_i32_0 = arith.constant 0 : i32
    %c0_i32_1 = arith.constant 0 : i32
    return %c0_i32, %c0_i32_0 : i32, i32
  }
  func.func @transform_3(%arg0: i32) -> (i32, i32) {
    %c0_i32 = arith.constant 0 : i32
    %c0_i32_0 = arith.constant 0 : i32
    %c0_i32_1 = arith.constant 0 : i32
    return %c0_i32, %c0_i32_0 : i32, i32
  }
  func.func @transform_4(%arg0: i32) -> (i32, i32, i32) {
    %c0_i32 = arith.constant 0 : i32
    %c0_i32_0 = arith.constant 0 : i32
    %c0_i32_1 = arith.constant 0 : i32
    return %arg0, %c0_i32, %c0_i32_0 : i32, i32, i32
  }
  func.func @transform_5(%arg0: i32) -> (i32, i32, i32) {
    %c0_i32 = arith.constant 0 : i32
    %c0_i32_0 = arith.constant 0 : i32
    %c0_i32_1 = arith.constant 0 : i32
    return %arg0, %c0_i32, %c0_i32_0 : i32, i32, i32
  }
  func.func @transform_6(%arg0: i32) -> (i32, i32, i32) {
    %c0_i32 = arith.constant 0 : i32
    %c0_i32_0 = arith.constant 0 : i32
    %c0_i32_1 = arith.constant 0 : i32
    return %arg0, %c0_i32, %c0_i32_0 : i32, i32, i32
  }
  func.func @transform_7(%arg0: i32) -> (i32, i32, i32) {
    %c0_i32 = arith.constant 0 : i32
    %c0_i32_0 = arith.constant 0 : i32
    %c0_i32_1 = arith.constant 0 : i32
    return %arg0, %c0_i32, %c0_i32_0 : i32, i32, i32
  }
}

module attributes {stable_mosaic.version = 11 : i64} {
  func.func @_fused_conv1x1_kernel(%arg0: i32, %arg1: memref<16x1xf32, #tpu.memory_space<vmem>>, %arg2: memref<16x1xf32, #tpu.memory_space<vmem>>, %arg3: memref<8x16xbf16, #tpu.memory_space<vmem>>, %arg4: memref<8x1xf32, #tpu.memory_space<vmem>>, %arg5: memref<1x8x256xbf16, #tpu.memory_space<vmem>>, %arg6: memref<1x4x256xbf16, #tpu.memory_space<vmem>>, %arg7: memref<1x4x256xbf16, #tpu.memory_space<vmem>>, %arg8: memref<1x8x256xf32, #tpu.memory_space<vmem>>) attributes {dimension_semantics = [#tpu.dimension_semantics<parallel>], iteration_bounds = array<i64: 2>, scalar_prefetch = 0 : i64, scratch_operands = 0 : i64, tpu.core_type = #tpu.core_type<tc>, window_params = [{pipeline_mode = #tpu.pipeline_mode<synchronous>, transform_indices = @transform_0, window_bounds = array<i64: 16, 1>}, {pipeline_mode = #tpu.pipeline_mode<synchronous>, transform_indices = @transform_1, window_bounds = array<i64: 16, 1>}, {pipeline_mode = #tpu.pipeline_mode<synchronous>, transform_indices = @transform_2, window_bounds = array<i64: 8, 16>}, {pipeline_mode = #tpu.pipeline_mode<synchronous>, transform_indices = @transform_3, window_bounds = array<i64: 8, 1>}, {transform_indices = @transform_4, window_bounds = array<i64: 1, 8, 256>}, {transform_indices = @transform_5, window_bounds = array<i64: 1, 4, 256>}, {transform_indices = @transform_6, window_bounds = array<i64: 1, 4, 256>}, {transform_indices = @transform_7, window_bounds = array<i64: 1, 8, 256>}]} {
    %c0 = arith.constant 0 : index
    %c0_0 = arith.constant 0 : index
    %0 = vector.load %arg3[%c0, %c0_0] : memref<8x16xbf16, #tpu.memory_space<vmem>>, vector<8x16xbf16>
    %c0_1 = arith.constant 0 : index
    %c0_2 = arith.constant 0 : index
    %1 = vector.load %arg1[%c0_1, %c0_2] : memref<16x1xf32, #tpu.memory_space<vmem>>, vector<16x1xf32>
    %c0_3 = arith.constant 0 : index
    %c0_4 = arith.constant 0 : index
    %2 = vector.load %arg2[%c0_3, %c0_4] : memref<16x1xf32, #tpu.memory_space<vmem>>, vector<16x1xf32>
    %cst = arith.constant 0.000000e+00 : f32
    %3 = vector.broadcast %cst : f32 to vector<8x256xf32>
    %c0_5 = arith.constant 0 : index
    %c0_6 = arith.constant 0 : index
    %c0_7 = arith.constant 0 : index
    %4 = vector.load %arg5[%c0_5, %c0_6, %c0_7] : memref<1x8x256xbf16, #tpu.memory_space<vmem>>, vector<1x8x256xbf16>
    %5 = vector.shape_cast %4 : vector<1x8x256xbf16> to vector<8x256xbf16>
    %6 = arith.extf %5 : vector<8x256xbf16> to vector<8x256xf32>
    %7 = vector.extract_strided_slice %1 {offsets = [0, 0], sizes = [8, 1], strides = [1, 1]} : vector<16x1xf32> to vector<8x1xf32>
    %8 = vector.broadcast %7 : vector<8x1xf32> to vector<8x256xf32>
    %9 = arith.mulf %6, %8 : vector<8x256xf32>
    %10 = vector.extract_strided_slice %2 {offsets = [0, 0], sizes = [8, 1], strides = [1, 1]} : vector<16x1xf32> to vector<8x1xf32>
    %11 = vector.broadcast %10 : vector<8x1xf32> to vector<8x256xf32>
    %12 = arith.addf %9, %11 : vector<8x256xf32>
    %cst_8 = arith.constant 0.000000e+00 : f32
    %13 = vector.broadcast %cst_8 : f32 to vector<8x256xf32>
    %14 = arith.maximumf %12, %13 : vector<8x256xf32>
    %15 = arith.truncf %14 : vector<8x256xf32> to vector<8x256xbf16>
    %16 = vector.extract_strided_slice %0 {offsets = [0, 0], sizes = [8, 8], strides = [1, 1]} : vector<8x16xbf16> to vector<8x8xbf16>
    %cst_9 = arith.constant dense<0.000000e+00> : vector<8x256xf32>
    %17 = tpu.matmul %16, %15, %cst_9 {dimension_numbers = #tpu.dot_dimension_numbers<[1], [0], [0], [1], [0, 0, 1, 1], [], []>} : vector<8x8xbf16>, vector<8x256xbf16>, vector<8x256xf32> -> vector<8x256xf32>
    %18 = arith.addf %3, %17 : vector<8x256xf32>
    %c0_10 = arith.constant 0 : index
    %c0_11 = arith.constant 0 : index
    %c0_12 = arith.constant 0 : index
    %19 = vector.load %arg6[%c0_10, %c0_11, %c0_12] : memref<1x4x256xbf16, #tpu.memory_space<vmem>>, vector<1x4x256xbf16>
    %20 = vector.shape_cast %19 : vector<1x4x256xbf16> to vector<4x256xbf16>
    %21 = arith.extf %20 : vector<4x256xbf16> to vector<4x256xf32>
    %22 = vector.extract_strided_slice %1 {offsets = [8, 0], sizes = [4, 1], strides = [1, 1]} : vector<16x1xf32> to vector<4x1xf32>
    %23 = vector.broadcast %22 : vector<4x1xf32> to vector<4x256xf32>
    %24 = arith.mulf %21, %23 : vector<4x256xf32>
    %25 = vector.extract_strided_slice %2 {offsets = [8, 0], sizes = [4, 1], strides = [1, 1]} : vector<16x1xf32> to vector<4x1xf32>
    %26 = vector.broadcast %25 : vector<4x1xf32> to vector<4x256xf32>
    %27 = arith.addf %24, %26 : vector<4x256xf32>
    %cst_13 = arith.constant 0.000000e+00 : f32
    %28 = vector.broadcast %cst_13 : f32 to vector<4x256xf32>
    %29 = arith.maximumf %27, %28 : vector<4x256xf32>
    %30 = arith.truncf %29 : vector<4x256xf32> to vector<4x256xbf16>
    %31 = vector.extract_strided_slice %0 {offsets = [0, 8], sizes = [8, 4], strides = [1, 1]} : vector<8x16xbf16> to vector<8x4xbf16>
    %cst_14 = arith.constant dense<0.000000e+00> : vector<8x256xf32>
    %32 = tpu.matmul %31, %30, %cst_14 {dimension_numbers = #tpu.dot_dimension_numbers<[1], [0], [0], [1], [0, 0, 1, 1], [], []>} : vector<8x4xbf16>, vector<4x256xbf16>, vector<8x256xf32> -> vector<8x256xf32>
    %33 = arith.addf %18, %32 : vector<8x256xf32>
    %c0_15 = arith.constant 0 : index
    %c0_16 = arith.constant 0 : index
    %c0_17 = arith.constant 0 : index
    %34 = vector.load %arg7[%c0_15, %c0_16, %c0_17] : memref<1x4x256xbf16, #tpu.memory_space<vmem>>, vector<1x4x256xbf16>
    %35 = vector.shape_cast %34 : vector<1x4x256xbf16> to vector<4x256xbf16>
    %36 = arith.extf %35 : vector<4x256xbf16> to vector<4x256xf32>
    %37 = vector.extract_strided_slice %1 {offsets = [12, 0], sizes = [4, 1], strides = [1, 1]} : vector<16x1xf32> to vector<4x1xf32>
    %38 = vector.broadcast %37 : vector<4x1xf32> to vector<4x256xf32>
    %39 = arith.mulf %36, %38 : vector<4x256xf32>
    %40 = vector.extract_strided_slice %2 {offsets = [12, 0], sizes = [4, 1], strides = [1, 1]} : vector<16x1xf32> to vector<4x1xf32>
    %41 = vector.broadcast %40 : vector<4x1xf32> to vector<4x256xf32>
    %42 = arith.addf %39, %41 : vector<4x256xf32>
    %cst_18 = arith.constant 0.000000e+00 : f32
    %43 = vector.broadcast %cst_18 : f32 to vector<4x256xf32>
    %44 = arith.maximumf %42, %43 : vector<4x256xf32>
    %45 = arith.truncf %44 : vector<4x256xf32> to vector<4x256xbf16>
    %46 = vector.extract_strided_slice %0 {offsets = [0, 12], sizes = [8, 4], strides = [1, 1]} : vector<8x16xbf16> to vector<8x4xbf16>
    %cst_19 = arith.constant dense<0.000000e+00> : vector<8x256xf32>
    %47 = tpu.matmul %46, %45, %cst_19 {dimension_numbers = #tpu.dot_dimension_numbers<[1], [0], [0], [1], [0, 0, 1, 1], [], []>} : vector<8x4xbf16>, vector<4x256xbf16>, vector<8x256xf32> -> vector<8x256xf32>
    %48 = arith.addf %33, %47 : vector<8x256xf32>
    %c0_20 = arith.constant 0 : index
    %c0_21 = arith.constant 0 : index
    %49 = vector.load %arg4[%c0_20, %c0_21] : memref<8x1xf32, #tpu.memory_space<vmem>>, vector<8x1xf32>
    %50 = vector.broadcast %49 : vector<8x1xf32> to vector<8x256xf32>
    %51 = arith.addf %48, %50 : vector<8x256xf32>
    %cst_22 = arith.constant 0.000000e+00 : f32
    %52 = vector.broadcast %cst_22 : f32 to vector<8x256xf32>
    %53 = arith.maximumf %51, %52 : vector<8x256xf32>
    %c0_23 = arith.constant 0 : index
    %c0_24 = arith.constant 0 : index
    %c0_25 = arith.constant 0 : index
    %54 = vector.load %arg8[%c0_23, %c0_24, %c0_25] : memref<1x8x256xf32, #tpu.memory_space<vmem>>, vector<1x8x256xf32>
    %55 = vector.shape_cast %54 : vector<1x8x256xf32> to vector<8x256xf32>
    %56 = vector.shape_cast %53 : vector<8x256xf32> to vector<1x8x256xf32>
    tpu.vector_store %arg8[%c0_23, %c0_24, %c0_25], %56 {strides = array<i32>} : memref<1x8x256xf32, #tpu.memory_space<vmem>>, vector<1x8x256xf32>,
    return
  }
  func.func @transform_0(%arg0: i32) -> (i32, i32) {
    %c0_i32 = arith.constant 0 : i32
    %c0_i32_0 = arith.constant 0 : i32
    %c0_i32_1 = arith.constant 0 : i32
    return %c0_i32, %c0_i32_0 : i32, i32
  }
  func.func @transform_1(%arg0: i32) -> (i32, i32) {
    %c0_i32 = arith.constant 0 : i32
    %c0_i32_0 = arith.constant 0 : i32
    %c0_i32_1 = arith.constant 0 : i32
    return %c0_i32, %c0_i32_0 : i32, i32
  }
  func.func @transform_2(%arg0: i32) -> (i32, i32) {
    %c0_i32 = arith.constant 0 : i32
    %c0_i32_0 = arith.constant 0 : i32
    %c0_i32_1 = arith.constant 0 : i32
    return %c0_i32, %c0_i32_0 : i32, i32
  }
  func.func @transform_3(%arg0: i32) -> (i32, i32) {
    %c0_i32 = arith.constant 0 : i32
    %c0_i32_0 = arith.constant 0 : i32
    %c0_i32_1 = arith.constant 0 : i32
    return %c0_i32, %c0_i32_0 : i32, i32
  }
  func.func @transform_4(%arg0: i32) -> (i32, i32, i32) {
    %c0_i32 = arith.constant 0 : i32
    %c0_i32_0 = arith.constant 0 : i32
    %c0_i32_1 = arith.constant 0 : i32
    return %arg0, %c0_i32, %c0_i32_0 : i32, i32, i32
  }
  func.func @transform_5(%arg0: i32) -> (i32, i32, i32) {
    %c0_i32 = arith.constant 0 : i32
    %c0_i32_0 = arith.constant 0 : i32
    %c0_i32_1 = arith.constant 0 : i32
    return %arg0, %c0_i32, %c0_i32_0 : i32, i32, i32
  }
  func.func @transform_6(%arg0: i32) -> (i32, i32, i32) {
    %c0_i32 = arith.constant 0 : i32
    %c0_i32_0 = arith.constant 0 : i32
    %c0_i32_1 = arith.constant 0 : i32
    return %arg0, %c0_i32, %c0_i32_0 : i32, i32, i32
  }
  func.func @transform_7(%arg0: i32) -> (i32, i32, i32) {
    %c0_i32 = arith.constant 0 : i32
    %c0_i32_0 = arith.constant 0 : i32
    %c0_i32_1 = arith.constant 0 : i32
    return %arg0, %c0_i32, %c0_i32_0 : i32, i32, i32
  }
}

</mosaic_0001>

<llo_original>
// kernel: _lambda_.7
$region0: #{_lambda_.7}
  #allocation0 [shape = 'u32[]', space=smem, size = 0x4, offset = 0x4, fixed_abs, tag = 'smem constant byte address 0x4 - core index']
  #allocation1 [shape = 'u32[144,128]{1,0:T(1,128)}', space=vmem, size = 0x12000, scoped, tag = 'internal scratch']
  %s0 = inlined_call_operand.vmem [shape: f32[16,1], index: 0, kind: input, shape index: {}]
  %s1 = inlined_call_operand.vmem [shape: f32[16,1], index: 1, kind: input, shape index: {}]
  %s2 = inlined_call_operand.vmem [shape: bf16[8,16], index: 2, kind: input, shape index: {}]
  %s3 = inlined_call_operand.vmem [shape: f32[8,1], index: 3, kind: input, shape index: {}]
  %s4 = inlined_call_operand.vmem [shape: bf16[2,16,256], index: 4, kind: input, shape index: {}]
  %s5 = inlined_call_operand.vmem [shape: bf16[2,8,256], index: 5, kind: output, shape index: {}]
  %s6 = sld [smem:[#allocation0]]
  $region53: #{_lambda_.7} parent=0
    _
  %s8 = ssub.s32 1, %s6
  %s9 = scalar_select 0, %s8, %s6
  loop: start=0, step=1, limit=4
  $region2: #{_lambda_.7} parent=0 // loop_pre_header
    _
  $region3: #{_lambda_.7} parent=0 // loop_header
    %s11 = sphi 0, %s15
    %p12 = scmp.ge.s32.totalorder %s11, 4
    %s19 = sphi 0, %s19
    %s21 = sphi 0, %s19
    %s22 = sphi 0, %s21
    %s36 = sphi 0, %s22
    %s40 = sphi 0, %s40
    %s42 = sphi 0, %s40
    %s43 = sphi 0, %s42
    %s57 = sphi 0, %s43
    %s61 = sphi 0, %s61
    %s63 = sphi 0, %s61
    %s64 = sphi 0, %s63
    %s78 = sphi 0, %s64
    %s82 = sphi 0, %s82
    %s84 = sphi 0, %s82
    %s85 = sphi 0, %s84
    %s99 = sphi 0, %s85
    %s105 = sphi 0, %s107
    %s108 = sphi 0, %s105
    %s109 = sphi 0, %s108
    %s125 = sphi 0, %s109
    %s131 = sphi 0, %s133
    %s134 = sphi 0, %s131
    %s135 = sphi 0, %s134
    %s151 = sphi 0, %s135
  $region4: #{_lambda_.7} parent=0 // loop_header_branch
    %14 = sbr.rel (%p12) target = $region8
  $region5: #{_lambda_.7} parent=0 // loop_body
    %s16 = ssub.s32 %s11, 1
    %s17 = ssub.s32 %s11, 2
    %s18 = sadd.s32 %s11, 1
    %s20 = sadd.s32 %s19, 1
    %p23 = scmp.eq.s32.totalorder %s11, 1
    %p24 = scmp.ne.s32.totalorder %s19, %s21
    %p25 = scmp.eq.s32.totalorder %s11, 0
    %p26 = por %p24, %p25
    %p27 = scmp.ne.s32.totalorder %s19, %s21
    %p28 = scmp.eq.s32.totalorder %s16, 1
    %p29 = por %p27, %p28
    %p30 = scmp.ne.s32.totalorder %s21, %s22
    %p31 = scmp.eq.s32.totalorder %s16, 0
    %p32 = por %p30, %p31
    %p33 = scmp.ne.s32.totalorder %s21, %s22
    %p34 = scmp.eq.s32.totalorder %s17, 1
    %p35 = por %p33, %p34
    %p37 = scmp.ne.s32.totalorder %s22, %s36
    %p38 = scmp.eq.s32.totalorder %s17, 0
    %p39 = por %p37, %p38
    %s41 = sadd.s32 %s40, 1
    %p44 = scmp.eq.s32.totalorder %s11, 1
    %p45 = scmp.ne.s32.totalorder %s40, %s42
    %p46 = scmp.eq.s32.totalorder %s11, 0
    %p47 = por %p45, %p46
    %p48 = scmp.ne.s32.totalorder %s40, %s42
    %p49 = scmp.eq.s32.totalorder %s16, 1
    %p50 = por %p48, %p49
    %p51 = scmp.ne.s32.totalorder %s42, %s43
    %p52 = scmp.eq.s32.totalorder %s16, 0
    %p53 = por %p51, %p52
    %p54 = scmp.ne.s32.totalorder %s42, %s43
    %p55 = scmp.eq.s32.totalorder %s17, 1
    %p56 = por %p54, %p55
    %p58 = scmp.ne.s32.totalorder %s43, %s57
    %p59 = scmp.eq.s32.totalorder %s17, 0
    %p60 = por %p58, %p59
    %s62 = sadd.s32 %s61, 1
    %p65 = scmp.eq.s32.totalorder %s11, 1
    %p66 = scmp.ne.s32.totalorder %s61, %s63
    %p67 = scmp.eq.s32.totalorder %s11, 0
    %p68 = por %p66, %p67
    %p69 = scmp.ne.s32.totalorder %s61, %s63
    %p70 = scmp.eq.s32.totalorder %s16, 1
    %p71 = por %p69, %p70
    %p72 = scmp.ne.s32.totalorder %s63, %s64
    %p73 = scmp.eq.s32.totalorder %s16, 0
    %p74 = por %p72, %p73
    %p75 = scmp.ne.s32.totalorder %s63, %s64
    %p76 = scmp.eq.s32.totalorder %s17, 1
    %p77 = por %p75, %p76
    %p79 = scmp.ne.s32.totalorder %s64, %s78
    %p80 = scmp.eq.s32.totalorder %s17, 0
    %p81 = por %p79, %p80
    %s83 = sadd.s32 %s82, 1
    %p86 = scmp.eq.s32.totalorder %s11, 1
    %p87 = scmp.ne.s32.totalorder %s82, %s84
    %p88 = scmp.eq.s32.totalorder %s11, 0
    %p89 = por %p87, %p88
    %p90 = scmp.ne.s32.totalorder %s82, %s84
    %p91 = scmp.eq.s32.totalorder %s16, 1
    %p92 = por %p90, %p91
    %p93 = scmp.ne.s32.totalorder %s84, %s85
    %p94 = scmp.eq.s32.totalorder %s16, 0
    %p95 = por %p93, %p94
    %p96 = scmp.ne.s32.totalorder %s84, %s85
    %p97 = scmp.eq.s32.totalorder %s17, 1
    %p98 = por %p96, %p97
    %p100 = scmp.ne.s32.totalorder %s85, %s99
    %p101 = scmp.eq.s32.totalorder %s17, 0
    %p102 = por %p100, %p101
    %s103 = ssub.s32 %s11, %s18
    %p104 = scmp.eq.s32.totalorder %s103, 0
    %s106 = sadd.s32 %s105, 1
    %s107 = scalar_select %p104, %s105, %s106
    %p110 = pneg %p104
    %p111 = scmp.eq.s32.totalorder %s11, 1
    %p112 = por %p110, %p111
    %p113 = scmp.ne.s32.totalorder %s105, %s108
    %p114 = scmp.eq.s32.totalorder %s11, 0
    %p115 = por %p113, %p114
    %p116 = scmp.ne.s32.totalorder %s105, %s108
    %p117 = scmp.eq.s32.totalorder %s16, 1
    %p118 = por %p116, %p117
    %p119 = scmp.ne.s32.totalorder %s108, %s109
    %p120 = scmp.eq.s32.totalorder %s16, 0
    %p121 = por %p119, %p120
    %p122 = scmp.ne.s32.totalorder %s108, %s109
    %p123 = scmp.eq.s32.totalorder %s17, 1
    %p124 = por %p122, %p123
    %p126 = scmp.ne.s32.totalorder %s109, %s125
    %p127 = scmp.eq.s32.totalorder %s17, 0
    %p128 = por %p126, %p127
    %s129 = ssub.s32 %s11, %s18
    %p130 = scmp.eq.s32.totalorder %s129, 0
    %s132 = sadd.s32 %s131, 1
    %s133 = scalar_select %p130, %s131, %s132
    %p136 = pneg %p130
    %p137 = scmp.eq.s32.totalorder %s11, 1
    %p138 = por %p136, %p137
    %p139 = scmp.ne.s32.totalorder %s131, %s134
    %p140 = scmp.eq.s32.totalorder %s11, 0
    %p141 = por %p139, %p140
    %p142 = scmp.ne.s32.totalorder %s131, %s134
    %p143 = scmp.eq.s32.totalorder %s16, 1
    %p144 = por %p142, %p143
    %p145 = scmp.ne.s32.totalorder %s134, %s135
    %p146 = scmp.eq.s32.totalorder %s16, 0
    %p147 = por %p145, %p146
    %p148 = scmp.ne.s32.totalorder %s134, %s135
    %p149 = scmp.eq.s32.totalorder %s17, 1
    %p150 = por %p148, %p149
    %p152 = scmp.ne.s32.totalorder %s135, %s151
    %p153 = scmp.eq.s32.totalorder %s17, 0
    %p154 = por %p152, %p153
    %p155 = scmp.le.s32.totalorder 1, %s11
    %p156 = scmp.lt.s32.totalorder %s11, 3
    %p157 = pnand %p155, %p156
    %p158 = pneg %p157
    // Predicated region
    $region9: #{_lambda_.7} parent=5 // pred_check
      _
    $region10: #{_lambda_.7} parent=5 // pred_check_branch
      %160 = sbr.rel (%p157) target = $region12
    $region11: #{_lambda_.7} parent=5 // pred_region
      %s161 = ssub.s32 %s11, 1
      // Predicated region
      $region13: #{_lambda_.7} parent=11 // pred_check
        %p162 = pneg %p32
      $region14: #{_lambda_.7} parent=11 // pred_check_branch
        %164 = sbr.rel (%p162) target = $region16
      $region15: #{_lambda_.7} parent=11 // pred_region
        _
      $region16: #{_lambda_.7} parent=11 // pred_fallthru
        _
      // Predicated region
      $region17: #{_lambda_.7} parent=11 // pred_check
        %p165 = pneg %p53
      $region18: #{_lambda_.7} parent=11 // pred_check_branch
        %167 = sbr.rel (%p165) target = $region20
      $region19: #{_lambda_.7} parent=11 // pred_region
        _
      $region20: #{_lambda_.7} parent=11 // pred_fallthru
        _
      // Predicated region
      $region21: #{_lambda_.7} parent=11 // pred_check
        %p168 = pneg %p74
      $region22: #{_lambda_.7} parent=11 // pred_check_branch
        %170 = sbr.rel (%p168) target = $region24
      $region23: #{_lambda_.7} parent=11 // pred_region
        _
      $region24: #{_lambda_.7} parent=11 // pred_fallthru
        _
      // Predicated region
      $region25: #{_lambda_.7} parent=11 // pred_check
        %p171 = pneg %p95
      $region26: #{_lambda_.7} parent=11 // pred_check_branch
        %173 = sbr.rel (%p171) target = $region28
      $region27: #{_lambda_.7} parent=11 // pred_region
        _
      $region28: #{_lambda_.7} parent=11 // pred_fallthru
        _
    $region12: #{_lambda_.7} parent=5 // pred_fallthru
      _
    %p174 = scmp.lt.s32.totalorder %s11, 2
    // Predicated region
    $region29: #{_lambda_.7} parent=5 // pred_check
      %p175 = pneg %p174
    $region30: #{_lambda_.7} parent=5 // pred_check_branch
      %177 = sbr.rel (%p175) target = $region32
    $region31: #{_lambda_.7} parent=5 // pred_region
      // Predicated region
      $region33: #{_lambda_.7} parent=31 // pred_check
        %p178 = pneg %p115
      $region34: #{_lambda_.7} parent=31 // pred_check_branch
        %180 = sbr.rel (%p178) target = $region36
      $region35: #{_lambda_.7} parent=31 // pred_region
        %p181 = scmp.lt.s32.totalorder %s11, 1
        %s182 = scalar_select %p181, %s11, 1
        %s183 = smul.addr %s182, 4
        %s184 = smul.addr %s183, 4
        %s185 = scalar_lea.vmem %s4, %s184
      $region36: #{_lambda_.7} parent=31 // pred_fallthru
        _
    $region32: #{_lambda_.7} parent=5 // pred_fallthru
      _
    %p186 = scmp.le.s32.totalorder 1, %s11
    %p187 = scmp.lt.s32.totalorder %s11, 3
    %p188 = pnand %p186, %p187
    %p189 = pneg %p188
    // Predicated region
    $region37: #{_lambda_.7} parent=5 // pred_check
      _
    $region38: #{_lambda_.7} parent=5 // pred_check_branch
      %191 = sbr.rel (%p188) target = $region40
    $region39: #{_lambda_.7} parent=5 // pred_region
      %s192 = ssub.s32 %s11, 1
      %p193 = pneg %p32
      %p194 = pneg %p29
      %p195 = pneg %p53
      %p196 = pneg %p50
      %p197 = pneg %p74
      %p198 = pneg %p71
      %p199 = pneg %p95
      %p200 = pneg %p92
      %p201 = scmp.lt.s32.totalorder %s16, 1
      %s202 = scalar_select %p201, %s16, 1
      %s203 = smul.addr %s202, 4
      %s204 = smul.addr %s203, 4
      %s205 = scalar_lea.vmem %s4, %s204
      %p206 = pneg %p121
      %p207 = pneg %p118
      %p208 = pneg %p147
      %p209 = pneg %p144
      %p210 = scmp.lt.s32.totalorder %s16, 1
      %s211 = scalar_select %p210, %s16, 1
      %s212 = smul.addr %s211, 2
      %s213 = smul.addr %s212, 4
      %s214 = scalar_lea.vmem %s5, %s213
      %p215 = scmp.lt.s32.totalorder %s16, 1
      %s216 = scalar_select %p215, %s16, 1
      %s217 = smul.addr %s216, 4
      %s218 = smul.addr %s217, 4
      %s219 = scalar_lea.vmem %s4, %s218
      %p220 = scmp.lt.s32.totalorder %s16, 1
      %s221 = scalar_select %p220, %s16, 1
      %s222 = smul.addr %s221, 2
      %s223 = smul.addr %s222, 4
      %s224 = scalar_lea.vmem %s5, %s223
      %v226 = vld [vmem:[%s2] sm:$0xf]
      %v227 = vld [vmem:[%s219] sm:$0xff]
      %v228 = vld [vmem:[%s219 + $0x8] sm:$0xff]
      %v229 = vld [vmem:[%s3] sm:$0xff]
      %231 = vset.pattern.permute.xlu0 0
      %232 = vperm.xlu0 %231, %v229
      %v233 = vpop.permute.xlu0 %232
      %v237 = vunpack.c.l.b16 %v227
      %v238 = vunpack.c.h.b16 %v227
      %v239 = vunpack.c.l.b16 %v228
      %v240 = vunpack.c.h.b16 %v228
      %v241 = vpack.c.b16 %v239, %v237
      %v242 = vpack.c.b16 %v240, %v238
      %vm245 = vcmask 130048
      %v247 = vsel %vm245, %v226, 0
      %249 = vmatprep.subr.bf16.mxu0 %v242
      %250 = vmatpush1.bf16.msra.mxu0 %v241
      %251 = vmatprep.subr.bf16.mxu0 0
      %252 = vmatpush1.bf16.msra.mxu0 0
      %253 = vmatprep.subr.bf16.mxu0 0
      %254 = vmatpush1.bf16.msra.mxu0 0
      %255 = vmatprep.subr.bf16.mxu0 0
      %256 = vmatpush1.bf16.msra.mxu0 0
      %257 = vmatprep.subr.bf16.mxu0 0
      %258 = vmatpush1.bf16.msra.mxu0 0
      %259 = vmatprep.subr.bf16.mxu0 0
      %260 = vmatpush1.bf16.msra.mxu0 0
      %261 = vmatprep.subr.bf16.mxu0 0
      %262 = vmatpush1.bf16.msra.mxu0 0
      %263 = vmatprep.subr.bf16.mxu0 0
      %264 = vmatpush1.bf16.msra.mxu0 0
      %265 = vmatprep.subr.bf16.mxu0 0
      %266 = vmatpush1.bf16.msra.mxu0 0
      %267 = vmatprep.subr.bf16.mxu0 0
      %268 = vmatpush1.bf16.msra.mxu0 0
      %269 = vmatprep.subr.bf16.mxu0 0
      %270 = vmatpush1.bf16.msra.mxu0 0
      %271 = vmatprep.subr.bf16.mxu0 0
      %272 = vmatpush1.bf16.msra.mxu0 0
      %273 = vmatprep.subr.bf16.mxu0 0
      %274 = vmatpush1.bf16.msra.mxu0 0
      %275 = vmatprep.subr.bf16.mxu0 0
      %276 = vmatpush1.bf16.msra.mxu0 0
      %277 = vmatprep.subr.bf16.mxu0 0
      %278 = vmatpush1.bf16.msra.mxu0 0
      %279 = vmatprep.subr.bf16.mxu0 0
      %280 = vmatpush1.bf16.msra.mxu0 0
      %281 = vmatprep.mubr.bf16.mxu0 0
      %282 = vmatmul.mubr.bf16.gmra.mrb[0].mxu0 %v247
      %v283 = vpop.f32.mrb[0].mxu0
      %v284 = vadd.f32 %v233, %v283
      %v285 = vpop.f32.mrb[0].mxu0
      %v286 = vadd.f32 %v233, %v285
      %v287 = vpop.f32.mrb[0].mxu0
      %v288 = vpop.f32.mrb[0].mxu0
      %289 = vdwg.mxu0
      %v290 = vpack.c.bf16 %v284, %v284
      %v291 = vpack.c.bf16 %v286, %v286
      %v294 = vunpack.c.l.b16 %v290
      %v295 = vunpack.c.l.b16 %v291
      %v296 = vpack.c.b16 %v295, %v294
      %298 = vst [vmem:[%s224] sm:$0xff] %v296
      %p299 = scmp.lt.s32.totalorder %s16, 1
      %s300 = scalar_select %p299, %s16, 1
      %s301 = smul.addr %s300, 2
      %s302 = smul.addr %s301, 4
      %s303 = scalar_lea.vmem %s5, %s302
      // Predicated region
      $region41: #{_lambda_.7} parent=39 // pred_check
        %p304 = pneg %p144
      $region42: #{_lambda_.7} parent=39 // pred_check_branch
        %306 = sbr.rel (%p304) target = $region44
      $region43: #{_lambda_.7} parent=39 // pred_region
        _
      $region44: #{_lambda_.7} parent=39 // pred_fallthru
        _
    $region40: #{_lambda_.7} parent=5 // pred_fallthru
      _
    %p307 = scmp.le.s32.totalorder 2, %s11
    // Predicated region
    $region45: #{_lambda_.7} parent=5 // pred_check
      %p308 = pneg %p307
    $region46: #{_lambda_.7} parent=5 // pred_check_branch
      %310 = sbr.rel (%p308) target = $region48
    $region47: #{_lambda_.7} parent=5 // pred_region
      %s311 = ssub.s32 %s11, 2
      // Predicated region
      $region49: #{_lambda_.7} parent=47 // pred_check
        %p312 = pneg %p150
      $region50: #{_lambda_.7} parent=47 // pred_check_branch
        %314 = sbr.rel (%p312) target = $region52
      $region51: #{_lambda_.7} parent=47 // pred_region
        %p315 = scmp.lt.s32.totalorder %s17, 1
        %s316 = scalar_select %p315, %s17, 1
        %s317 = smul.addr %s316, 2
        %s318 = smul.addr %s317, 4
        %s319 = scalar_lea.vmem %s5, %s318
      $region52: #{_lambda_.7} parent=47 // pred_fallthru
        _
    $region48: #{_lambda_.7} parent=5 // pred_fallthru
      _
  $region6: #{_lambda_.7} parent=0 // loop_footer
    %s15 = sadd.s32 1, %s11
  $region7: #{_lambda_.7} parent=0 // loop_footer_branch
    %10 = sbr.rel target = $region3
  $region8: #{_lambda_.7} parent=0 // loop_exit
    _

// kernel: _lambda_.8
$region0: #{_lambda_.8}
  #allocation0 [shape = 'u32[]', space=smem, size = 0x4, offset = 0x4, fixed_abs, tag = 'smem constant byte address 0x4 - core index']
  #allocation1 [shape = 'u32[144,128]{1,0:T(1,128)}', space=vmem, size = 0x12000, scoped, tag = 'internal scratch']
  %s0 = inlined_call_operand.vmem [shape: f32[8,1], index: 0, kind: input, shape index: {}]
  %s1 = inlined_call_operand.vmem [shape: f32[8,1], index: 1, kind: input, shape index: {}]
  %s2 = inlined_call_operand.vmem [shape: bf16[8,8], index: 2, kind: input, shape index: {}]
  %s3 = inlined_call_operand.vmem [shape: f32[8,1], index: 3, kind: input, shape index: {}]
  %s4 = inlined_call_operand.vmem [shape: bf16[4,48], index: 4, kind: input, shape index: {}]
  %s5 = inlined_call_operand.vmem [shape: f32[4,1], index: 5, kind: input, shape index: {}]
  %s6 = inlined_call_operand.vmem [shape: s32[1,256], index: 6, kind: input, shape index: {}]
  %s7 = inlined_call_operand.vmem [shape: bf16[2,8,256], index: 7, kind: input, shape index: {}]
  %s8 = inlined_call_operand.vmem [shape: bf16[2,4,256], index: 8, kind: output, shape index: {}]
  %s9 = sld [smem:[#allocation0]]
  $region65: #{_lambda_.8} parent=0
    _
  %s11 = ssub.s32 1, %s9
  %s12 = scalar_select 0, %s11, %s9
  loop: start=0, step=1, limit=4
  $region2: #{_lambda_.8} parent=0 // loop_pre_header
    _
  $region3: #{_lambda_.8} parent=0 // loop_header
    %s14 = sphi 0, %s18
    %p15 = scmp.ge.s32.totalorder %s14, 4
    %s22 = sphi 0, %s22
    %s24 = sphi 0, %s22
    %s25 = sphi 0, %s24
    %s39 = sphi 0, %s25
    %s43 = sphi 0, %s43
    %s45 = sphi 0, %s43
    %s46 = sphi 0, %s45
    %s60 = sphi 0, %s46
    %s64 = sphi 0, %s64
    %s66 = sphi 0, %s64
    %s67 = sphi 0, %s66
    %s81 = sphi 0, %s67
    %s85 = sphi 0, %s85
    %s87 = sphi 0, %s85
    %s88 = sphi 0, %s87
    %s102 = sphi 0, %s88
    %s106 = sphi 0, %s106
    %s108 = sphi 0, %s106
    %s109 = sphi 0, %s108
    %s123 = sphi 0, %s109
    %s127 = sphi 0, %s127
    %s129 = sphi 0, %s127
    %s130 = sphi 0, %s129
    %s144 = sphi 0, %s130
    %s148 = sphi 0, %s148
    %s150 = sphi 0, %s148
    %s151 = sphi 0, %s150
    %s165 = sphi 0, %s151
    %s171 = sphi 0, %s173
    %s174 = sphi 0, %s171
    %s175 = sphi 0, %s174
    %s191 = sphi 0, %s175
    %s197 = sphi 0, %s199
    %s200 = sphi 0, %s197
    %s201 = sphi 0, %s200
    %s217 = sphi 0, %s201
  $region4: #{_lambda_.8} parent=0 // loop_header_branch
    %17 = sbr.rel (%p15) target = $region8
  $region5: #{_lambda_.8} parent=0 // loop_body
    %s19 = ssub.s32 %s14, 1
    %s20 = ssub.s32 %s14, 2
    %s21 = sadd.s32 %s14, 1
    %s23 = sadd.s32 %s22, 1
    %p26 = scmp.eq.s32.totalorder %s14, 1
    %p27 = scmp.ne.s32.totalorder %s22, %s24
    %p28 = scmp.eq.s32.totalorder %s14, 0
    %p29 = por %p27, %p28
    %p30 = scmp.ne.s32.totalorder %s22, %s24
    %p31 = scmp.eq.s32.totalorder %s19, 1
    %p32 = por %p30, %p31
    %p33 = scmp.ne.s32.totalorder %s24, %s25
    %p34 = scmp.eq.s32.totalorder %s19, 0
    %p35 = por %p33, %p34
    %p36 = scmp.ne.s32.totalorder %s24, %s25
    %p37 = scmp.eq.s32.totalorder %s20, 1
    %p38 = por %p36, %p37
    %p40 = scmp.ne.s32.totalorder %s25, %s39
    %p41 = scmp.eq.s32.totalorder %s20, 0
    %p42 = por %p40, %p41
    %s44 = sadd.s32 %s43, 1
    %p47 = scmp.eq.s32.totalorder %s14, 1
    %p48 = scmp.ne.s32.totalorder %s43, %s45
    %p49 = scmp.eq.s32.totalorder %s14, 0
    %p50 = por %p48, %p49
    %p51 = scmp.ne.s32.totalorder %s43, %s45
    %p52 = scmp.eq.s32.totalorder %s19, 1
    %p53 = por %p51, %p52
    %p54 = scmp.ne.s32.totalorder %s45, %s46
    %p55 = scmp.eq.s32.totalorder %s19, 0
    %p56 = por %p54, %p55
    %p57 = scmp.ne.s32.totalorder %s45, %s46
    %p58 = scmp.eq.s32.totalorder %s20, 1
    %p59 = por %p57, %p58
    %p61 = scmp.ne.s32.totalorder %s46, %s60
    %p62 = scmp.eq.s32.totalorder %s20, 0
    %p63 = por %p61, %p62
    %s65 = sadd.s32 %s64, 1
    %p68 = scmp.eq.s32.totalorder %s14, 1
    %p69 = scmp.ne.s32.totalorder %s64, %s66
    %p70 = scmp.eq.s32.totalorder %s14, 0
    %p71 = por %p69, %p70
    %p72 = scmp.ne.s32.totalorder %s64, %s66
    %p73 = scmp.eq.s32.totalorder %s19, 1
    %p74 = por %p72, %p73
    %p75 = scmp.ne.s32.totalorder %s66, %s67
    %p76 = scmp.eq.s32.totalorder %s19, 0
    %p77 = por %p75, %p76
    %p78 = scmp.ne.s32.totalorder %s66, %s67
    %p79 = scmp.eq.s32.totalorder %s20, 1
    %p80 = por %p78, %p79
    %p82 = scmp.ne.s32.totalorder %s67, %s81
    %p83 = scmp.eq.s32.totalorder %s20, 0
    %p84 = por %p82, %p83
    %s86 = sadd.s32 %s85, 1
    %p89 = scmp.eq.s32.totalorder %s14, 1
    %p90 = scmp.ne.s32.totalorder %s85, %s87
    %p91 = scmp.eq.s32.totalorder %s14, 0
    %p92 = por %p90, %p91
    %p93 = scmp.ne.s32.totalorder %s85, %s87
    %p94 = scmp.eq.s32.totalorder %s19, 1
    %p95 = por %p93, %p94
    %p96 = scmp.ne.s32.totalorder %s87, %s88
    %p97 = scmp.eq.s32.totalorder %s19, 0
    %p98 = por %p96, %p97
    %p99 = scmp.ne.s32.totalorder %s87, %s88
    %p100 = scmp.eq.s32.totalorder %s20, 1
    %p101 = por %p99, %p100
    %p103 = scmp.ne.s32.totalorder %s88, %s102
    %p104 = scmp.eq.s32.totalorder %s20, 0
    %p105 = por %p103, %p104
    %s107 = sadd.s32 %s106, 1
    %p110 = scmp.eq.s32.totalorder %s14, 1
    %p111 = scmp.ne.s32.totalorder %s106, %s108
    %p112 = scmp.eq.s32.totalorder %s14, 0
    %p113 = por %p111, %p112
    %p114 = scmp.ne.s32.totalorder %s106, %s108
    %p115 = scmp.eq.s32.totalorder %s19, 1
    %p116 = por %p114, %p115
    %p117 = scmp.ne.s32.totalorder %s108, %s109
    %p118 = scmp.eq.s32.totalorder %s19, 0
    %p119 = por %p117, %p118
    %p120 = scmp.ne.s32.totalorder %s108, %s109
    %p121 = scmp.eq.s32.totalorder %s20, 1
    %p122 = por %p120, %p121
    %p124 = scmp.ne.s32.totalorder %s109, %s123
    %p125 = scmp.eq.s32.totalorder %s20, 0
    %p126 = por %p124, %p125
    %s128 = sadd.s32 %s127, 1
    %p131 = scmp.eq.s32.totalorder %s14, 1
    %p132 = scmp.ne.s32.totalorder %s127, %s129
    %p133 = scmp.eq.s32.totalorder %s14, 0
    %p134 = por %p132, %p133
    %p135 = scmp.ne.s32.totalorder %s127, %s129
    %p136 = scmp.eq.s32.totalorder %s19, 1
    %p137 = por %p135, %p136
    %p138 = scmp.ne.s32.totalorder %s129, %s130
    %p139 = scmp.eq.s32.totalorder %s19, 0
    %p140 = por %p138, %p139
    %p141 = scmp.ne.s32.totalorder %s129, %s130
    %p142 = scmp.eq.s32.totalorder %s20, 1
    %p143 = por %p141, %p142
    %p145 = scmp.ne.s32.totalorder %s130, %s144
    %p146 = scmp.eq.s32.totalorder %s20, 0
    %p147 = por %p145, %p146
    %s149 = sadd.s32 %s148, 1
    %p152 = scmp.eq.s32.totalorder %s14, 1
    %p153 = scmp.ne.s32.totalorder %s148, %s150
    %p154 = scmp.eq.s32.totalorder %s14, 0
    %p155 = por %p153, %p154
    %p156 = scmp.ne.s32.totalorder %s148, %s150
    %p157 = scmp.eq.s32.totalorder %s19, 1
    %p158 = por %p156, %p157
    %p159 = scmp.ne.s32.totalorder %s150, %s151
    %p160 = scmp.eq.s32.totalorder %s19, 0
    %p161 = por %p159, %p160
    %p162 = scmp.ne.s32.totalorder %s150, %s151
    %p163 = scmp.eq.s32.totalorder %s20, 1
    %p164 = por %p162, %p163
    %p166 = scmp.ne.s32.totalorder %s151, %s165
    %p167 = scmp.eq.s32.totalorder %s20, 0
    %p168 = por %p166, %p167
    %s169 = ssub.s32 %s14, %s21
    %p170 = scmp.eq.s32.totalorder %s169, 0
    %s172 = sadd.s32 %s171, 1
    %s173 = scalar_select %p170, %s171, %s172
    %p176 = pneg %p170
    %p177 = scmp.eq.s32.totalorder %s14, 1
    %p178 = por %p176, %p177
    %p179 = scmp.ne.s32.totalorder %s171, %s174
    %p180 = scmp.eq.s32.totalorder %s14, 0
    %p181 = por %p179, %p180
    %p182 = scmp.ne.s32.totalorder %s171, %s174
    %p183 = scmp.eq.s32.totalorder %s19, 1
    %p184 = por %p182, %p183
    %p185 = scmp.ne.s32.totalorder %s174, %s175
    %p186 = scmp.eq.s32.totalorder %s19, 0
    %p187 = por %p185, %p186
    %p188 = scmp.ne.s32.totalorder %s174, %s175
    %p189 = scmp.eq.s32.totalorder %s20, 1
    %p190 = por %p188, %p189
    %p192 = scmp.ne.s32.totalorder %s175, %s191
    %p193 = scmp.eq.s32.totalorder %s20, 0
    %p194 = por %p192, %p193
    %s195 = ssub.s32 %s14, %s21
    %p196 = scmp.eq.s32.totalorder %s195, 0
    %s198 = sadd.s32 %s197, 1
    %s199 = scalar_select %p196, %s197, %s198
    %p202 = pneg %p196
    %p203 = scmp.eq.s32.totalorder %s14, 1
    %p204 = por %p202, %p203
    %p205 = scmp.ne.s32.totalorder %s197, %s200
    %p206 = scmp.eq.s32.totalorder %s14, 0
    %p207 = por %p205, %p206
    %p208 = scmp.ne.s32.totalorder %s197, %s200
    %p209 = scmp.eq.s32.totalorder %s19, 1
    %p210 = por %p208, %p209
    %p211 = scmp.ne.s32.totalorder %s200, %s201
    %p212 = scmp.eq.s32.totalorder %s19, 0
    %p213 = por %p211, %p212
    %p214 = scmp.ne.s32.totalorder %s200, %s201
    %p215 = scmp.eq.s32.totalorder %s20, 1
    %p216 = por %p214, %p215
    %p218 = scmp.ne.s32.totalorder %s201, %s217
    %p219 = scmp.eq.s32.totalorder %s20, 0
    %p220 = por %p218, %p219
    %p221 = scmp.le.s32.totalorder 1, %s14
    %p222 = scmp.lt.s32.totalorder %s14, 3
    %p223 = pnand %p221, %p222
    %p224 = pneg %p223
    // Predicated region
    $region9: #{_lambda_.8} parent=5 // pred_check
      _
    $region10: #{_lambda_.8} parent=5 // pred_check_branch
      %226 = sbr.rel (%p223) target = $region12
    $region11: #{_lambda_.8} parent=5 // pred_region
      %s227 = ssub.s32 %s14, 1
      // Predicated region
      $region13: #{_lambda_.8} parent=11 // pred_check
        %p228 = pneg %p35
      $region14: #{_lambda_.8} parent=11 // pred_check_branch
        %230 = sbr.rel (%p228) target = $region16
      $region15: #{_lambda_.8} parent=11 // pred_region
        _
      $region16: #{_lambda_.8} parent=11 // pred_fallthru
        _
      // Predicated region
      $region17: #{_lambda_.8} parent=11 // pred_check
        %p231 = pneg %p56
      $region18: #{_lambda_.8} parent=11 // pred_check_branch
        %233 = sbr.rel (%p231) target = $region20
      $region19: #{_lambda_.8} parent=11 // pred_region
        _
      $region20: #{_lambda_.8} parent=11 // pred_fallthru
        _
      // Predicated region
      $region21: #{_lambda_.8} parent=11 // pred_check
        %p234 = pneg %p77
      $region22: #{_lambda_.8} parent=11 // pred_check_branch
        %236 = sbr.rel (%p234) target = $region24
      $region23: #{_lambda_.8} parent=11 // pred_region
        _
      $region24: #{_lambda_.8} parent=11 // pred_fallthru
        _
      // Predicated region
      $region25: #{_lambda_.8} parent=11 // pred_check
        %p237 = pneg %p98
      $region26: #{_lambda_.8} parent=11 // pred_check_branch
        %239 = sbr.rel (%p237) target = $region28
      $region27: #{_lambda_.8} parent=11 // pred_region
        _
      $region28: #{_lambda_.8} parent=11 // pred_fallthru
        _
      // Predicated region
      $region29: #{_lambda_.8} parent=11 // pred_check
        %p240 = pneg %p119
      $region30: #{_lambda_.8} parent=11 // pred_check_branch
        %242 = sbr.rel (%p240) target = $region32
      $region31: #{_lambda_.8} parent=11 // pred_region
        _
      $region32: #{_lambda_.8} parent=11 // pred_fallthru
        _
      // Predicated region
      $region33: #{_lambda_.8} parent=11 // pred_check
        %p243 = pneg %p140
      $region34: #{_lambda_.8} parent=11 // pred_check_branch
        %245 = sbr.rel (%p243) target = $region36
      $region35: #{_lambda_.8} parent=11 // pred_region
        _
      $region36: #{_lambda_.8} parent=11 // pred_fallthru
        _
      // Predicated region
      $region37: #{_lambda_.8} parent=11 // pred_check
        %p246 = pneg %p161
      $region38: #{_lambda_.8} parent=11 // pred_check_branch
        %248 = sbr.rel (%p246) target = $region40
      $region39: #{_lambda_.8} parent=11 // pred_region
        _
      $region40: #{_lambda_.8} parent=11 // pred_fallthru
        _
    $region12: #{_lambda_.8} parent=5 // pred_fallthru
      _
    %p249 = scmp.lt.s32.totalorder %s14, 2
    // Predicated region
    $region41: #{_lambda_.8} parent=5 // pred_check
      %p250 = pneg %p249
    $region42: #{_lambda_.8} parent=5 // pred_check_branch
      %252 = sbr.rel (%p250) target = $region44
    $region43: #{_lambda_.8} parent=5 // pred_region
      // Predicated region
      $region45: #{_lambda_.8} parent=43 // pred_check
        %p253 = pneg %p181
      $region46: #{_lambda_.8} parent=43 // pred_check_branch
        %255 = sbr.rel (%p253) target = $region48
      $region47: #{_lambda_.8} parent=43 // pred_region
        %p256 = scmp.lt.s32.totalorder %s14, 1
        %s257 = scalar_select %p256, %s14, 1
        %s258 = smul.addr %s257, 2
        %s259 = smul.addr %s258, 4
        %s260 = scalar_lea.vmem %s7, %s259
      $region48: #{_lambda_.8} parent=43 // pred_fallthru
        _
    $region44: #{_lambda_.8} parent=5 // pred_fallthru
      _
    %p261 = scmp.le.s32.totalorder 1, %s14
    %p262 = scmp.lt.s32.totalorder %s14, 3
    %p263 = pnand %p261, %p262
    %p264 = pneg %p263
    // Predicated region
    $region49: #{_lambda_.8} parent=5 // pred_check
      _
    $region50: #{_lambda_.8} parent=5 // pred_check_branch
      %266 = sbr.rel (%p263) target = $region52
    $region51: #{_lambda_.8} parent=5 // pred_region
      %s267 = ssub.s32 %s14, 1
      %p268 = pneg %p35
      %p269 = pneg %p32
      %p270 = pneg %p56
      %p271 = pneg %p53
      %p272 = pneg %p77
      %p273 = pneg %p74
      %p274 = pneg %p98
      %p275 = pneg %p95
      %p276 = pneg %p119
      %p277 = pneg %p116
      %p278 = pneg %p140
      %p279 = pneg %p137
      %p280 = pneg %p161
      %p281 = pneg %p158
      %p282 = scmp.lt.s32.totalorder %s19, 1
      %s283 = scalar_select %p282, %s19, 1
      %s284 = smul.addr %s283, 2
      %s285 = smul.addr %s284, 4
      %s286 = scalar_lea.vmem %s7, %s285
      %p287 = pneg %p187
      %p288 = pneg %p184
      %p289 = pneg %p213
      %p290 = pneg %p210
      %p291 = scmp.lt.s32.totalorder %s19, 1
      %s292 = scalar_select %p291, %s19, 1
      %s293 = smul.addr %s292, 2
      %s294 = smul.addr %s293, 2
      %s295 = scalar_lea.vmem %s8, %s294
      %p296 = scmp.lt.s32.totalorder %s19, 1
      %s297 = scalar_select %p296, %s19, 1
      %s298 = smul.addr %s297, 2
      %s299 = smul.addr %s298, 4
      %s300 = scalar_lea.vmem %s7, %s299
      %p301 = scmp.lt.s32.totalorder %s19, 1
      %s302 = scalar_select %p301, %s19, 1
      %s303 = smul.addr %s302, 2
      %s304 = smul.addr %s303, 2
      %s305 = scalar_lea.vmem %s8, %s304
      %v309 = vld [vmem:[%s0] sm:$0xff]
      %v310 = vld [vmem:[%s1] sm:$0xff]
      %v311 = vld [vmem:[%s2] sm:$0xf]
      %v312 = vld [vmem:[%s300] sm:$0xff]
      %v313 = vunpack.c.l.bf16 %v312
      %v314 = vunpack.c.h.bf16 %v312
      %316 = vset.pattern.permute.xlu0 0
      %317 = vperm.xlu0 %316, %v309
      %v318 = vpop.permute.xlu0 %317
      %v320 = vmul.f32 %v313, %v318
      %v321 = vmul.f32 %v314, %v318
      %323 = vset.pattern.permute.xlu0 0
      %324 = vperm.xlu0 %323, %v310
      %v325 = vpop.permute.xlu0 %324
      %v327 = vadd.f32 %v320, %v325
      %v328 = vadd.f32 %v321, %v325
      %v329 = vmax.f32 %v327, 0.0
      %v330 = vmax.f32 %v328, 0.0
      %v331 = vpack.c.bf16 %v329, %v329
      %v332 = vpack.c.bf16 %v330, %v330
      %v333 = vld [vmem:[%s3] sm:$0xff]
      %335 = vset.pattern.permute.xlu0 0
      %336 = vperm.xlu0 %335, %v333
      %v337 = vpop.permute.xlu0 %336
      %vm339 = vcmask 64512
      %v341 = vsel %vm339, %v311, 0
      %vm343 = vcmask 1043456
      %v345 = vsel %vm343, %v331, 0
      %v348 = vsel %vm343, %v332, 0
      %350 = vmatprep.subr.bf16.mxu0 %v348
      %351 = vmatpush1.bf16.msra.mxu0 %v345
      %352 = vmatprep.subr.bf16.mxu0 0
      %353 = vmatpush1.bf16.msra.mxu0 0
      %354 = vmatprep.subr.bf16.mxu0 0
      %355 = vmatpush1.bf16.msra.mxu0 0
      %356 = vmatprep.subr.bf16.mxu0 0
      %357 = vmatpush1.bf16.msra.mxu0 0
      %358 = vmatprep.subr.bf16.mxu0 0
      %359 = vmatpush1.bf16.msra.mxu0 0
      %360 = vmatprep.subr.bf16.mxu0 0
      %361 = vmatpush1.bf16.msra.mxu0 0
      %362 = vmatprep.subr.bf16.mxu0 0
      %363 = vmatpush1.bf16.msra.mxu0 0
      %364 = vmatprep.subr.bf16.mxu0 0
      %365 = vmatpush1.bf16.msra.mxu0 0
      %366 = vmatprep.subr.bf16.mxu0 0
      %367 = vmatpush1.bf16.msra.mxu0 0
      %368 = vmatprep.subr.bf16.mxu0 0
      %369 = vmatpush1.bf16.msra.mxu0 0
      %370 = vmatprep.subr.bf16.mxu0 0
      %371 = vmatpush1.bf16.msra.mxu0 0
      %372 = vmatprep.subr.bf16.mxu0 0
      %373 = vmatpush1.bf16.msra.mxu0 0
      %374 = vmatprep.subr.bf16.mxu0 0
      %375 = vmatpush1.bf16.msra.mxu0 0
      %376 = vmatprep.subr.bf16.mxu0 0
      %377 = vmatpush1.bf16.msra.mxu0 0
      %378 = vmatprep.subr.bf16.mxu0 0
      %379 = vmatpush1.bf16.msra.mxu0 0
      %380 = vmatprep.subr.bf16.mxu0 0
      %381 = vmatpush1.bf16.msra.mxu0 0
      %382 = vmatprep.mubr.bf16.mxu0 0
      %383 = vmatmul.mubr.bf16.gmra.mrb[0].mxu0 %v341
      %v384 = vpop.f32.mrb[0].mxu0
      %v385 = vadd.f32 %v337, %v384
      %v386 = vpop.f32.mrb[0].mxu0
      %v387 = vadd.f32 %v337, %v386
      %v388 = vpop.f32.mrb[0].mxu0
      %v389 = vpop.f32.mrb[0].mxu0
      %390 = vdwg.mxu0
      %v391 = vmax.f32 %v385, 0.0
      %v392 = vmax.f32 %v387, 0.0
      %v393 = vpack.c.bf16 %v391, %v391
      %v394 = vpack.c.bf16 %v392, %v392
      %v395 = vld [vmem:[%s4] sm:$0x3]
      %398 = vrot.lane.b32.xlu0 %v393, 17
      %v399 = vpop.permute.xlu0 %398
      %400 = vrot.lane.b32.xlu0 %v394, 17
      %v401 = vpop.permute.xlu0 %400
      %vm402 = vcmask 138240
      %v403 = vsel %vm402, %v399, %v401
      %vm405 = vcmask 138240
      %v408 = vsel %vm405, 0, %v399
      %v411 = vsel %vm405, %v401, 0
      %v413 = vld [vmem:[%s6] sm:$0x3]
      %v414 = vadd.s32 %v413, 4294967295
      %vm415 = vcmp.ge.s32.totalorder %v414, 0
      %vm416 = vcmp.lt.s32.totalorder %v414, 16
      %vm417 = vmand %vm415, %vm416
      %v418 = vsel %vm417, 1, 0
      %v419 = vlaneseq
      %v420 = vshrl.u32 %v419, 7
      %v421 = vsub.s32 0, %v420
      %v422 = vrot.slane %v418, %v421
      %v423 = vlaneseq
      %v424 = vshrl.u32 %v423, 7
      %v425 = vsub.s32 1, %v424
      %v426 = vrot.slane %v418, %v425
      %vm427 = vcmp.eq.s32.totalorder %v422, 1
      %vm428 = vcmp.eq.s32.totalorder %v426, 1
      %vm429 = vmpackc.low %vm428, %vm427
      %v430 = vsel %vm429, 65537, 0
      %v431 = vlaneseq
      %v432 = vshrl.u32 %v431, 7
      %v433 = vsub.s32 0, %v432
      %v434 = vrot.slane %v430, %v433
      %v435 = vlaneseq
      %v436 = vshrl.u32 %v435, 7
      %v437 = vsub.s32 4, %v436
      %v438 = vrot.slane %v430, %v437
      %vm439 = vcmp.ne.s16.totalorder %v434, 0
      %vm440 = vcmp.ne.s16.totalorder %v438, 0
      %v441 = vsel %vm439, %v408, 0
      %v442 = vsel %vm440, %v403, 0
      %v445 = vunpack.c.l.s4 1983009808
      %v446 = vunpack.c.0.s8 %v445
      %v447 = vlaneseq
      %v448 = vshrl.u32 %v447, 7
      %v449 = vsub.s32 %v446, %v448
      %v450 = vrot.slane %v395, %v449
      %451 = vrot.lane.b32.xlu0 %v450, 120
      %v452 = vpop.permute.xlu0 %451
      %455 = vrot.lane.b32.xlu0 %v408, 127
      %v456 = vpop.permute.xlu0 %455
      %457 = vrot.lane.b32.xlu0 %v403, 127
      %v458 = vpop.permute.xlu0 %457
      %459 = vrot.lane.b32.xlu0 %v411, 127
      %v460 = vpop.permute.xlu0 %459
      %vm461 = vcmask 1039360
      %v462 = vsel %vm461, %v456, %v458
      %v463 = vsel %vm461, %v458, %v460
      %v465 = vsel %vm339, %v452, 0
      %v468 = vsel %vm343, %v462, 0
      %v471 = vsel %vm343, %v463, 0
      %473 = vmatprep.subr.bf16.mxu0 %v471
      %474 = vmatpush1.bf16.msra.mxu0 %v468
      %475 = vmatprep.subr.bf16.mxu0 0
      %476 = vmatpush1.bf16.msra.mxu0 0
      %477 = vmatprep.subr.bf16.mxu0 0
      %478 = vmatpush1.bf16.msra.mxu0 0
      %479 = vmatprep.subr.bf16.mxu0 0
      %480 = vmatpush1.bf16.msra.mxu0 0
      %481 = vmatprep.subr.bf16.mxu0 0
      %482 = vmatpush1.bf16.msra.mxu0 0
      %483 = vmatprep.subr.bf16.mxu0 0
      %484 = vmatpush1.bf16.msra.mxu0 0
      %485 = vmatprep.subr.bf16.mxu0 0
      %486 = vmatpush1.bf16.msra.mxu0 0
      %487 = vmatprep.subr.bf16.mxu0 0
      %488 = vmatpush1.bf16.msra.mxu0 0
      %489 = vmatprep.subr.bf16.mxu0 0
      %490 = vmatpush1.bf16.msra.mxu0 0
      %491 = vmatprep.subr.bf16.mxu0 0
      %492 = vmatpush1.bf16.msra.mxu0 0
      %493 = vmatprep.subr.bf16.mxu0 0
      %494 = vmatpush1.bf16.msra.mxu0 0
      %495 = vmatprep.subr.bf16.mxu0 0
      %496 = vmatpush1.bf16.msra.mxu0 0
      %497 = vmatprep.subr.bf16.mxu0 0
      %498 = vmatpush1.bf16.msra.mxu0 0
      %499 = vmatprep.subr.bf16.mxu0 0
      %500 = vmatpush1.bf16.msra.mxu0 0
      %501 = vmatprep.subr.bf16.mxu0 0
      %502 = vmatpush1.bf16.msra.mxu0 0
      %503 = vmatprep.subr.bf16.mxu0 0
      %504 = vmatpush1.bf16.msra.mxu0 0
      %505 = vmatprep.mubr.bf16.mxu0 0
      %506 = vmatmul.mubr.bf16.gmra.mrb[0].mxu0 %v465
      %v507 = vpop.f32.mrb[0].mxu0
      %v508 = vadd.f32 0.0, %v507
      %v509 = vpop.f32.mrb[0].mxu0
      %v510 = vadd.f32 0.0, %v509
      %v511 = vpop.f32.mrb[0].mxu0
      %v512 = vpop.f32.mrb[0].mxu0
      %513 = vdwg.mxu0
      %v515 = vsel %vm339, %v395, 0
      %v518 = vsel %vm343, %v441, 0
      %v521 = vsel %vm343, %v442, 0
      %523 = vmatprep.subr.bf16.mxu0 %v521
      %524 = vmatpush1.bf16.msra.mxu0 %v518
      %525 = vmatprep.subr.bf16.mxu0 0
      %526 = vmatpush1.bf16.msra.mxu0 0
      %527 = vmatprep.subr.bf16.mxu0 0
      %528 = vmatpush1.bf16.msra.mxu0 0
      %529 = vmatprep.subr.bf16.mxu0 0
      %530 = vmatpush1.bf16.msra.mxu0 0
      %531 = vmatprep.subr.bf16.mxu0 0
      %532 = vmatpush1.bf16.msra.mxu0 0
      %533 = vmatprep.subr.bf16.mxu0 0
      %534 = vmatpush1.bf16.msra.mxu0 0
      %535 = vmatprep.subr.bf16.mxu0 0
      %536 = vmatpush1.bf16.msra.mxu0 0
      %537 = vmatprep.subr.bf16.mxu0 0
      %538 = vmatpush1.bf16.msra.mxu0 0
      %539 = vmatprep.subr.bf16.mxu0 0
      %540 = vmatpush1.bf16.msra.mxu0 0
      %541 = vmatprep.subr.bf16.mxu0 0
      %542 = vmatpush1.bf16.msra.mxu0 0
      %543 = vmatprep.subr.bf16.mxu0 0
      %544 = vmatpush1.bf16.msra.mxu0 0
      %545 = vmatprep.subr.bf16.mxu0 0
      %546 = vmatpush1.bf16.msra.mxu0 0
      %547 = vmatprep.subr.bf16.mxu0 0
      %548 = vmatpush1.bf16.msra.mxu0 0
      %549 = vmatprep.subr.bf16.mxu0 0
      %550 = vmatpush1.bf16.msra.mxu0 0
      %551 = vmatprep.subr.bf16.mxu0 0
      %552 = vmatpush1.bf16.msra.mxu0 0
      %553 = vmatprep.subr.bf16.mxu0 0
      %554 = vmatpush1.bf16.msra.mxu0 0
      %555 = vmatprep.mubr.bf16.mxu0 0
      %556 = vmatmul.mubr.bf16.gmra.mrb[0].mxu0 %v515
      %v557 = vpop.f32.mrb[0].mxu0
      %v558 = vadd.f32 %v508, %v557
      %v559 = vpop.f32.mrb[0].mxu0
      %v560 = vadd.f32 %v510, %v559
      %v561 = vpop.f32.mrb[0].mxu0
      %v562 = vpop.f32.mrb[0].mxu0
      %563 = vdwg.mxu0
      %v564 = vadd.s32 %v413, 1
      %vm565 = vcmp.ge.s32.totalorder %v564, 0
      %vm566 = vcmp.lt.s32.totalorder %v564, 16
      %vm567 = vmand %vm565, %vm566
      %v568 = vsel %vm567, 1, 0
      %v569 = vlaneseq
      %v570 = vshrl.u32 %v569, 7
      %v571 = vsub.s32 0, %v570
      %v572 = vrot.slane %v568, %v571
      %v573 = vlaneseq
      %v574 = vshrl.u32 %v573, 7
      %v575 = vsub.s32 1, %v574
      %v576 = vrot.slane %v568, %v575
      %vm577 = vcmp.eq.s32.totalorder %v572, 1
      %vm578 = vcmp.eq.s32.totalorder %v576, 1
      %vm579 = vmpackc.low %vm578, %vm577
      %v580 = vsel %vm579, 65537, 0
      %v581 = vlaneseq
      %v582 = vshrl.u32 %v581, 7
      %v583 = vsub.s32 0, %v582
      %v584 = vrot.slane %v580, %v583
      %v585 = vlaneseq
      %v586 = vshrl.u32 %v585, 7
      %v587 = vsub.s32 4, %v586
      %v588 = vrot.slane %v580, %v587
      %589 = vrot.lane.b32.xlu0 %v584, 2
      %v590 = vpop.permute.xlu0 %589
      %591 = vrot.lane.b32.xlu0 %v588, 2
      %v592 = vpop.permute.xlu0 %591
      %vm593 = vcmask 15360
      %v594 = vsel %vm593, %v590, %v592
      %vm595 = vcmp.ne.s16.totalorder %v590, 0
      %vm596 = vcmp.ne.s16.totalorder %v594, 0
      %vm597 = vcmp.ne.s16.totalorder %v592, 0
      %v598 = vsel %vm595, %v408, 0
      %v599 = vsel %vm596, %v403, 0
      %v600 = vsel %vm597, %v411, 0
      %601 = vrot.lane.b32.xlu0 %v450, 112
      %v602 = vpop.permute.xlu0 %601
      %606 = vrot.lane.b32.xlu0 %v598, 126
      %v607 = vpop.permute.xlu0 %606
      %608 = vrot.lane.b32.xlu0 %v599, 126
      %v609 = vpop.permute.xlu0 %608
      %610 = vrot.lane.b32.xlu0 %v600, 126
      %v611 = vpop.permute.xlu0 %610
      %vm612 = vcmask 1031168
      %v613 = vsel %vm612, %v607, %v609
      %v614 = vsel %vm612, %v609, %v611
      %v616 = vsel %vm339, %v602, 0
      %v619 = vsel %vm343, %v613, 0
      %v622 = vsel %vm343, %v614, 0
      %624 = vmatprep.subr.bf16.mxu0 %v622
      %625 = vmatpush1.bf16.msra.mxu0 %v619
      %626 = vmatprep.subr.bf16.mxu0 0
      %627 = vmatpush1.bf16.msra.mxu0 0
      %628 = vmatprep.subr.bf16.mxu0 0
      %629 = vmatpush1.bf16.msra.mxu0 0
      %630 = vmatprep.subr.bf16.mxu0 0
      %631 = vmatpush1.bf16.msra.mxu0 0
      %632 = vmatprep.subr.bf16.mxu0 0
      %633 = vmatpush1.bf16.msra.mxu0 0
      %634 = vmatprep.subr.bf16.mxu0 0
      %635 = vmatpush1.bf16.msra.mxu0 0
      %636 = vmatprep.subr.bf16.mxu0 0
      %637 = vmatpush1.bf16.msra.mxu0 0
      %638 = vmatprep.subr.bf16.mxu0 0
      %639 = vmatpush1.bf16.msra.mxu0 0
      %640 = vmatprep.subr.bf16.mxu0 0
      %641 = vmatpush1.bf16.msra.mxu0 0
      %642 = vmatprep.subr.bf16.mxu0 0
      %643 = vmatpush1.bf16.msra.mxu0 0
      %644 = vmatprep.subr.bf16.mxu0 0
      %645 = vmatpush1.bf16.msra.mxu0 0
      %646 = vmatprep.subr.bf16.mxu0 0
      %647 = vmatpush1.bf16.msra.mxu0 0
      %648 = vmatprep.subr.bf16.mxu0 0
      %649 = vmatpush1.bf16.msra.mxu0 0
      %650 = vmatprep.subr.bf16.mxu0 0
      %651 = vmatpush1.bf16.msra.mxu0 0
      %652 = vmatprep.subr.bf16.mxu0 0
      %653 = vmatpush1.bf16.msra.mxu0 0
      %654 = vmatprep.subr.bf16.mxu0 0
      %655 = vmatpush1.bf16.msra.mxu0 0
      %656 = vmatprep.mubr.bf16.mxu0 0
      %657 = vmatmul.mubr.bf16.gmra.mrb[0].mxu0 %v616
      %v658 = vpop.f32.mrb[0].mxu0
      %v659 = vadd.f32 0.0, %v658
      %v660 = vpop.f32.mrb[0].mxu0
      %v661 = vadd.f32 0.0, %v660
      %v662 = vpop.f32.mrb[0].mxu0
      %v663 = vpop.f32.mrb[0].mxu0
      %664 = vdwg.mxu0
      %v665 = vadd.f32 %v558, %v659
      %v666 = vadd.f32 %v560, %v661
      %667 = vrot.lane.b32.xlu0 %v434, 16
      %v668 = vpop.permute.xlu0 %667
      %669 = vrot.lane.b32.xlu0 %v438, 16
      %v670 = vpop.permute.xlu0 %669
      %vm671 = vcmask 130048
      %v672 = vsel %vm671, %v668, %v670
      %vm673 = vcmp.ne.s16.totalorder %v668, 0
      %vm674 = vcmp.ne.s16.totalorder %v672, 0
      %vm675 = vcmp.ne.s16.totalorder %v670, 0
      %v676 = vsel %vm673, %v408, 0
      %v677 = vsel %vm674, %v403, 0
      %v678 = vsel %vm675, %v411, 0
      %679 = vrot.lane.b32.xlu0 %v450, 104
      %v680 = vpop.permute.xlu0 %679
      %684 = vrot.lane.b32.xlu0 %v676, 112
      %v685 = vpop.permute.xlu0 %684
      %686 = vrot.lane.b32.xlu0 %v677, 112
      %v687 = vpop.permute.xlu0 %686
      %688 = vrot.lane.b32.xlu0 %v678, 112
      %v689 = vpop.permute.xlu0 %688
      %vm690 = vcmask 916480
      %v691 = vsel %vm690, %v685, %v687
      %v692 = vsel %vm690, %v687, %v689
      %v694 = vsel %vm339, %v680, 0
      %v697 = vsel %vm343, %v691, 0
      %v700 = vsel %vm343, %v692, 0
      %702 = vmatprep.subr.bf16.mxu0 %v700
      %703 = vmatpush1.bf16.msra.mxu0 %v697
      %704 = vmatprep.subr.bf16.mxu0 0
      %705 = vmatpush1.bf16.msra.mxu0 0
      %706 = vmatprep.subr.bf16.mxu0 0
      %707 = vmatpush1.bf16.msra.mxu0 0
      %708 = vmatprep.subr.bf16.mxu0 0
      %709 = vmatpush1.bf16.msra.mxu0 0
      %710 = vmatprep.subr.bf16.mxu0 0
      %711 = vmatpush1.bf16.msra.mxu0 0
      %712 = vmatprep.subr.bf16.mxu0 0
      %713 = vmatpush1.bf16.msra.mxu0 0
      %714 = vmatprep.subr.bf16.mxu0 0
      %715 = vmatpush1.bf16.msra.mxu0 0
      %716 = vmatprep.subr.bf16.mxu0 0
      %717 = vmatpush1.bf16.msra.mxu0 0
      %718 = vmatprep.subr.bf16.mxu0 0
      %719 = vmatpush1.bf16.msra.mxu0 0
      %720 = vmatprep.subr.bf16.mxu0 0
      %721 = vmatpush1.bf16.msra.mxu0 0
      %722 = vmatprep.subr.bf16.mxu0 0
      %723 = vmatpush1.bf16.msra.mxu0 0
      %724 = vmatprep.subr.bf16.mxu0 0
      %725 = vmatpush1.bf16.msra.mxu0 0
      %726 = vmatprep.subr.bf16.mxu0 0
      %727 = vmatpush1.bf16.msra.mxu0 0
      %728 = vmatprep.subr.bf16.mxu0 0
      %729 = vmatpush1.bf16.msra.mxu0 0
      %730 = vmatprep.subr.bf16.mxu0 0
      %731 = vmatpush1.bf16.msra.mxu0 0
      %732 = vmatprep.subr.bf16.mxu0 0
      %733 = vmatpush1.bf16.msra.mxu0 0
      %734 = vmatprep.mubr.bf16.mxu0 0
      %735 = vmatmul.mubr.bf16.gmra.mrb[0].mxu0 %v694
      %v736 = vpop.f32.mrb[0].mxu0
      %v737 = vadd.f32 0.0, %v736
      %v738 = vpop.f32.mrb[0].mxu0
      %v739 = vadd.f32 0.0, %v738
      %v740 = vpop.f32.mrb[0].mxu0
      %v741 = vpop.f32.mrb[0].mxu0
      %742 = vdwg.mxu0
      %v743 = vadd.f32 %v665, %v737
      %v744 = vadd.f32 %v666, %v739
      %745 = vrot.lane.b32.xlu0 %v450, 96
      %v746 = vpop.permute.xlu0 %745
      %747 = vrot.lane.b32.xlu0 %v408, 111
      %v748 = vpop.permute.xlu0 %747
      %749 = vrot.lane.b32.xlu0 %v403, 111
      %v750 = vpop.permute.xlu0 %749
      %751 = vrot.lane.b32.xlu0 %v411, 111
      %v752 = vpop.permute.xlu0 %751
      %vm753 = vcmask 908288
      %v754 = vsel %vm753, %v748, %v750
      %v755 = vsel %vm753, %v750, %v752
      %v757 = vsel %vm339, %v746, 0
      %v760 = vsel %vm343, %v754, 0
      %v763 = vsel %vm343, %v755, 0
      %765 = vmatprep.subr.bf16.mxu0 %v763
      %766 = vmatpush1.bf16.msra.mxu0 %v760
      %767 = vmatprep.subr.bf16.mxu0 0
      %768 = vmatpush1.bf16.msra.mxu0 0
      %769 = vmatprep.subr.bf16.mxu0 0
      %770 = vmatpush1.bf16.msra.mxu0 0
      %771 = vmatprep.subr.bf16.mxu0 0
      %772 = vmatpush1.bf16.msra.mxu0 0
      %773 = vmatprep.subr.bf16.mxu0 0
      %774 = vmatpush1.bf16.msra.mxu0 0
      %775 = vmatprep.subr.bf16.mxu0 0
      %776 = vmatpush1.bf16.msra.mxu0 0
      %777 = vmatprep.subr.bf16.mxu0 0
      %778 = vmatpush1.bf16.msra.mxu0 0
      %779 = vmatprep.subr.bf16.mxu0 0
      %780 = vmatpush1.bf16.msra.mxu0 0
      %781 = vmatprep.subr.bf16.mxu0 0
      %782 = vmatpush1.bf16.msra.mxu0 0
      %783 = vmatprep.subr.bf16.mxu0 0
      %784 = vmatpush1.bf16.msra.mxu0 0
      %785 = vmatprep.subr.bf16.mxu0 0
      %786 = vmatpush1.bf16.msra.mxu0 0
      %787 = vmatprep.subr.bf16.mxu0 0
      %788 = vmatpush1.bf16.msra.mxu0 0
      %789 = vmatprep.subr.bf16.mxu0 0
      %790 = vmatpush1.bf16.msra.mxu0 0
      %791 = vmatprep.subr.bf16.mxu0 0
      %792 = vmatpush1.bf16.msra.mxu0 0
      %793 = vmatprep.subr.bf16.mxu0 0
      %794 = vmatpush1.bf16.msra.mxu0 0
      %795 = vmatprep.subr.bf16.mxu0 0
      %796 = vmatpush1.bf16.msra.mxu0 0
      %797 = vmatprep.mubr.bf16.mxu0 0
      %798 = vmatmul.mubr.bf16.gmra.mrb[0].mxu0 %v757
      %v799 = vpop.f32.mrb[0].mxu0
      %v800 = vadd.f32 0.0, %v799
      %v801 = vpop.f32.mrb[0].mxu0
      %v802 = vadd.f32 0.0, %v801
      %v803 = vpop.f32.mrb[0].mxu0
      %v804 = vpop.f32.mrb[0].mxu0
      %805 = vdwg.mxu0
      %v806 = vadd.f32 %v743, %v800
      %v807 = vadd.f32 %v744, %v802
      %808 = vrot.lane.b32.xlu0 %v584, 18
      %v809 = vpop.permute.xlu0 %808
      %810 = vrot.lane.b32.xlu0 %v588, 18
      %v811 = vpop.permute.xlu0 %810
      %vm812 = vcmask 146432
      %v813 = vsel %vm812, %v809, %v811
      %vm814 = vcmp.ne.s16.totalorder %v809, 0
      %vm815 = vcmp.ne.s16.totalorder %v813, 0
      %vm816 = vcmp.ne.s16.totalorder %v811, 0
      %v817 = vsel %vm814, %v408, 0
      %v818 = vsel %vm815, %v403, 0
      %v819 = vsel %vm816, %v411, 0
      %820 = vrot.lane.b32.xlu0 %v450, 88
      %v821 = vpop.permute.xlu0 %820
      %825 = vrot.lane.b32.xlu0 %v817, 110
      %v826 = vpop.permute.xlu0 %825
      %827 = vrot.lane.b32.xlu0 %v818, 110
      %v828 = vpop.permute.xlu0 %827
      %829 = vrot.lane.b32.xlu0 %v819, 110
      %v830 = vpop.permute.xlu0 %829
      %vm831 = vcmask 900096
      %v832 = vsel %vm831, %v826, %v828
      %v833 = vsel %vm831, %v828, %v830
      %v835 = vsel %vm339, %v821, 0
      %v838 = vsel %vm343, %v832, 0
      %v841 = vsel %vm343, %v833, 0
      %843 = vmatprep.subr.bf16.mxu0 %v841
      %844 = vmatpush1.bf16.msra.mxu0 %v838
      %845 = vmatprep.subr.bf16.mxu0 0
      %846 = vmatpush1.bf16.msra.mxu0 0
      %847 = vmatprep.subr.bf16.mxu0 0
      %848 = vmatpush1.bf16.msra.mxu0 0
      %849 = vmatprep.subr.bf16.mxu0 0
      %850 = vmatpush1.bf16.msra.mxu0 0
      %851 = vmatprep.subr.bf16.mxu0 0
      %852 = vmatpush1.bf16.msra.mxu0 0
      %853 = vmatprep.subr.bf16.mxu0 0
      %854 = vmatpush1.bf16.msra.mxu0 0
      %855 = vmatprep.subr.bf16.mxu0 0
      %856 = vmatpush1.bf16.msra.mxu0 0
      %857 = vmatprep.subr.bf16.mxu0 0
      %858 = vmatpush1.bf16.msra.mxu0 0
      %859 = vmatprep.subr.bf16.mxu0 0
      %860 = vmatpush1.bf16.msra.mxu0 0
      %861 = vmatprep.subr.bf16.mxu0 0
      %862 = vmatpush1.bf16.msra.mxu0 0
      %863 = vmatprep.subr.bf16.mxu0 0
      %864 = vmatpush1.bf16.msra.mxu0 0
      %865 = vmatprep.subr.bf16.mxu0 0
      %866 = vmatpush1.bf16.msra.mxu0 0
      %867 = vmatprep.subr.bf16.mxu0 0
      %868 = vmatpush1.bf16.msra.mxu0 0
      %869 = vmatprep.subr.bf16.mxu0 0
      %870 = vmatpush1.bf16.msra.mxu0 0
      %871 = vmatprep.subr.bf16.mxu0 0
      %872 = vmatpush1.bf16.msra.mxu0 0
      %873 = vmatprep.subr.bf16.mxu0 0
      %874 = vmatpush1.bf16.msra.mxu0 0
      %875 = vmatprep.mubr.bf16.mxu0 0
      %876 = vmatmul.mubr.bf16.gmra.mrb[0].mxu0 %v835
      %v877 = vpop.f32.mrb[0].mxu0
      %v878 = vadd.f32 0.0, %v877
      %v879 = vpop.f32.mrb[0].mxu0
      %v880 = vadd.f32 0.0, %v879
      %v881 = vpop.f32.mrb[0].mxu0
      %v882 = vpop.f32.mrb[0].mxu0
      %883 = vdwg.mxu0
      %v884 = vadd.f32 %v806, %v878
      %v885 = vadd.f32 %v807, %v880
      %v886 = vld [vmem:[%s5] sm:$0xf]
      %888 = vset.pattern.permute.xlu0 0
      %889 = vperm.xlu0 %888, %v886
      %v890 = vpop.permute.xlu0 %889
      %v892 = vadd.f32 %v884, %v890
      %v893 = vadd.f32 %v885, %v890
      %v894 = vpack.c.bf16 %v892, %v892
      %v895 = vpack.c.bf16 %v893, %v893
      %v898 = vcombine.low %v894, %v895
      %v900 = vunpack.c.l.s4 1983009808
      %v901 = vunpack.c.0.s8 %v900
      %v902 = vlaneseq
      %v903 = vshrl.u32 %v902, 7
      %v904 = vsub.s32 %v901, %v903
      %v905 = vrot.slane %v898, %v904
      %907 = vst [vmem:[%s305] sm:$0xf] %v905
      %p908 = scmp.lt.s32.totalorder %s19, 1
      %s909 = scalar_select %p908, %s19, 1
      %s910 = smul.addr %s909, 2
      %s911 = smul.addr %s910, 2
      %s912 = scalar_lea.vmem %s8, %s911
      // Predicated region
      $region53: #{_lambda_.8} parent=51 // pred_check
        %p913 = pneg %p210
      $region54: #{_lambda_.8} parent=51 // pred_check_branch
        %915 = sbr.rel (%p913) target = $region56
      $region55: #{_lambda_.8} parent=51 // pred_region
        _
      $region56: #{_lambda_.8} parent=51 // pred_fallthru
        _
    $region52: #{_lambda_.8} parent=5 // pred_fallthru
      _
    %p916 = scmp.le.s32.totalorder 2, %s14
    // Predicated region
    $region57: #{_lambda_.8} parent=5 // pred_check
      %p917 = pneg %p916
    $region58: #{_lambda_.8} parent=5 // pred_check_branch
      %919 = sbr.rel (%p917) target = $region60
    $region59: #{_lambda_.8} parent=5 // pred_region
      %s920 = ssub.s32 %s14, 2
      // Predicated region
      $region61: #{_lambda_.8} parent=59 // pred_check
        %p921 = pneg %p216
      $region62: #{_lambda_.8} parent=59 // pred_check_branch
        %923 = sbr.rel (%p921) target = $region64
      $region63: #{_lambda_.8} parent=59 // pred_region
        %p924 = scmp.lt.s32.totalorder %s20, 1
        %s925 = scalar_select %p924, %s20, 1
        %s926 = smul.addr %s925, 2
        %s927 = smul.addr %s926, 2
        %s928 = scalar_lea.vmem %s8, %s927
      $region64: #{_lambda_.8} parent=59 // pred_fallthru
        _
    $region60: #{_lambda_.8} parent=5 // pred_fallthru
      _
  $region6: #{_lambda_.8} parent=0 // loop_footer
    %s18 = sadd.s32 1, %s14
  $region7: #{_lambda_.8} parent=0 // loop_footer_branch
    %13 = sbr.rel target = $region3
  $region8: #{_lambda_.8} parent=0 // loop_exit
    _

// kernel: _lambda_.9
$region0: #{_lambda_.9}
  #allocation0 [shape = 'u32[]', space=smem, size = 0x4, offset = 0x4, fixed_abs, tag = 'smem constant byte address 0x4 - core index']
  #allocation1 [shape = 'u32[144,128]{1,0:T(1,128)}', space=vmem, size = 0x12000, scoped, tag = 'internal scratch']
  %s0 = inlined_call_operand.vmem [shape: f32[12,1], index: 0, kind: input, shape index: {}]
  %s1 = inlined_call_operand.vmem [shape: f32[12,1], index: 1, kind: input, shape index: {}]
  %s2 = inlined_call_operand.vmem [shape: bf16[8,12], index: 2, kind: input, shape index: {}]
  %s3 = inlined_call_operand.vmem [shape: f32[8,1], index: 3, kind: input, shape index: {}]
  %s4 = inlined_call_operand.vmem [shape: bf16[4,48], index: 4, kind: input, shape index: {}]
  %s5 = inlined_call_operand.vmem [shape: f32[4,1], index: 5, kind: input, shape index: {}]
  %s6 = inlined_call_operand.vmem [shape: s32[1,256], index: 6, kind: input, shape index: {}]
  %s7 = inlined_call_operand.vmem [shape: bf16[2,8,256], index: 7, kind: input, shape index: {}]
  %s8 = inlined_call_operand.vmem [shape: bf16[2,4,256], index: 8, kind: input, shape index: {}]
  %s9 = inlined_call_operand.vmem [shape: bf16[2,4,256], index: 9, kind: output, shape index: {}]
  %s10 = sld [smem:[#allocation0]]
  $region69: #{_lambda_.9} parent=0
    _
  %s12 = ssub.s32 1, %s10
  %s13 = scalar_select 0, %s12, %s10
  loop: start=0, step=1, limit=4
  $region2: #{_lambda_.9} parent=0 // loop_pre_header
    _
  $region3: #{_lambda_.9} parent=0 // loop_header
    %s15 = sphi 0, %s19
    %p16 = scmp.ge.s32.totalorder %s15, 4
    %s23 = sphi 0, %s23
    %s25 = sphi 0, %s23
    %s26 = sphi 0, %s25
    %s40 = sphi 0, %s26
    %s44 = sphi 0, %s44
    %s46 = sphi 0, %s44
    %s47 = sphi 0, %s46
    %s61 = sphi 0, %s47
    %s65 = sphi 0, %s65
    %s67 = sphi 0, %s65
    %s68 = sphi 0, %s67
    %s82 = sphi 0, %s68
    %s86 = sphi 0, %s86
    %s88 = sphi 0, %s86
    %s89 = sphi 0, %s88
    %s103 = sphi 0, %s89
    %s107 = sphi 0, %s107
    %s109 = sphi 0, %s107
    %s110 = sphi 0, %s109
    %s124 = sphi 0, %s110
    %s128 = sphi 0, %s128
    %s130 = sphi 0, %s128
    %s131 = sphi 0, %s130
    %s145 = sphi 0, %s131
    %s149 = sphi 0, %s149
    %s151 = sphi 0, %s149
    %s152 = sphi 0, %s151
    %s166 = sphi 0, %s152
    %s172 = sphi 0, %s174
    %s175 = sphi 0, %s172
    %s176 = sphi 0, %s175
    %s192 = sphi 0, %s176
    %s198 = sphi 0, %s200
    %s201 = sphi 0, %s198
    %s202 = sphi 0, %s201
    %s218 = sphi 0, %s202
    %s224 = sphi 0, %s226
    %s227 = sphi 0, %s224
    %s228 = sphi 0, %s227
    %s244 = sphi 0, %s228
  $region4: #{_lambda_.9} parent=0 // loop_header_branch
    %18 = sbr.rel (%p16) target = $region8
  $region5: #{_lambda_.9} parent=0 // loop_body
    %s20 = ssub.s32 %s15, 1
    %s21 = ssub.s32 %s15, 2
    %s22 = sadd.s32 %s15, 1
    %s24 = sadd.s32 %s23, 1
    %p27 = scmp.eq.s32.totalorder %s15, 1
    %p28 = scmp.ne.s32.totalorder %s23, %s25
    %p29 = scmp.eq.s32.totalorder %s15, 0
    %p30 = por %p28, %p29
    %p31 = scmp.ne.s32.totalorder %s23, %s25
    %p32 = scmp.eq.s32.totalorder %s20, 1
    %p33 = por %p31, %p32
    %p34 = scmp.ne.s32.totalorder %s25, %s26
    %p35 = scmp.eq.s32.totalorder %s20, 0
    %p36 = por %p34, %p35
    %p37 = scmp.ne.s32.totalorder %s25, %s26
    %p38 = scmp.eq.s32.totalorder %s21, 1
    %p39 = por %p37, %p38
    %p41 = scmp.ne.s32.totalorder %s26, %s40
    %p42 = scmp.eq.s32.totalorder %s21, 0
    %p43 = por %p41, %p42
    %s45 = sadd.s32 %s44, 1
    %p48 = scmp.eq.s32.totalorder %s15, 1
    %p49 = scmp.ne.s32.totalorder %s44, %s46
    %p50 = scmp.eq.s32.totalorder %s15, 0
    %p51 = por %p49, %p50
    %p52 = scmp.ne.s32.totalorder %s44, %s46
    %p53 = scmp.eq.s32.totalorder %s20, 1
    %p54 = por %p52, %p53
    %p55 = scmp.ne.s32.totalorder %s46, %s47
    %p56 = scmp.eq.s32.totalorder %s20, 0
    %p57 = por %p55, %p56
    %p58 = scmp.ne.s32.totalorder %s46, %s47
    %p59 = scmp.eq.s32.totalorder %s21, 1
    %p60 = por %p58, %p59
    %p62 = scmp.ne.s32.totalorder %s47, %s61
    %p63 = scmp.eq.s32.totalorder %s21, 0
    %p64 = por %p62, %p63
    %s66 = sadd.s32 %s65, 1
    %p69 = scmp.eq.s32.totalorder %s15, 1
    %p70 = scmp.ne.s32.totalorder %s65, %s67
    %p71 = scmp.eq.s32.totalorder %s15, 0
    %p72 = por %p70, %p71
    %p73 = scmp.ne.s32.totalorder %s65, %s67
    %p74 = scmp.eq.s32.totalorder %s20, 1
    %p75 = por %p73, %p74
    %p76 = scmp.ne.s32.totalorder %s67, %s68
    %p77 = scmp.eq.s32.totalorder %s20, 0
    %p78 = por %p76, %p77
    %p79 = scmp.ne.s32.totalorder %s67, %s68
    %p80 = scmp.eq.s32.totalorder %s21, 1
    %p81 = por %p79, %p80
    %p83 = scmp.ne.s32.totalorder %s68, %s82
    %p84 = scmp.eq.s32.totalorder %s21, 0
    %p85 = por %p83, %p84
    %s87 = sadd.s32 %s86, 1
    %p90 = scmp.eq.s32.totalorder %s15, 1
    %p91 = scmp.ne.s32.totalorder %s86, %s88
    %p92 = scmp.eq.s32.totalorder %s15, 0
    %p93 = por %p91, %p92
    %p94 = scmp.ne.s32.totalorder %s86, %s88
    %p95 = scmp.eq.s32.totalorder %s20, 1
    %p96 = por %p94, %p95
    %p97 = scmp.ne.s32.totalorder %s88, %s89
    %p98 = scmp.eq.s32.totalorder %s20, 0
    %p99 = por %p97, %p98
    %p100 = scmp.ne.s32.totalorder %s88, %s89
    %p101 = scmp.eq.s32.totalorder %s21, 1
    %p102 = por %p100, %p101
    %p104 = scmp.ne.s32.totalorder %s89, %s103
    %p105 = scmp.eq.s32.totalorder %s21, 0
    %p106 = por %p104, %p105
    %s108 = sadd.s32 %s107, 1
    %p111 = scmp.eq.s32.totalorder %s15, 1
    %p112 = scmp.ne.s32.totalorder %s107, %s109
    %p113 = scmp.eq.s32.totalorder %s15, 0
    %p114 = por %p112, %p113
    %p115 = scmp.ne.s32.totalorder %s107, %s109
    %p116 = scmp.eq.s32.totalorder %s20, 1
    %p117 = por %p115, %p116
    %p118 = scmp.ne.s32.totalorder %s109, %s110
    %p119 = scmp.eq.s32.totalorder %s20, 0
    %p120 = por %p118, %p119
    %p121 = scmp.ne.s32.totalorder %s109, %s110
    %p122 = scmp.eq.s32.totalorder %s21, 1
    %p123 = por %p121, %p122
    %p125 = scmp.ne.s32.totalorder %s110, %s124
    %p126 = scmp.eq.s32.totalorder %s21, 0
    %p127 = por %p125, %p126
    %s129 = sadd.s32 %s128, 1
    %p132 = scmp.eq.s32.totalorder %s15, 1
    %p133 = scmp.ne.s32.totalorder %s128, %s130
    %p134 = scmp.eq.s32.totalorder %s15, 0
    %p135 = por %p133, %p134
    %p136 = scmp.ne.s32.totalorder %s128, %s130
    %p137 = scmp.eq.s32.totalorder %s20, 1
    %p138 = por %p136, %p137
    %p139 = scmp.ne.s32.totalorder %s130, %s131
    %p140 = scmp.eq.s32.totalorder %s20, 0
    %p141 = por %p139, %p140
    %p142 = scmp.ne.s32.totalorder %s130, %s131
    %p143 = scmp.eq.s32.totalorder %s21, 1
    %p144 = por %p142, %p143
    %p146 = scmp.ne.s32.totalorder %s131, %s145
    %p147 = scmp.eq.s32.totalorder %s21, 0
    %p148 = por %p146, %p147
    %s150 = sadd.s32 %s149, 1
    %p153 = scmp.eq.s32.totalorder %s15, 1
    %p154 = scmp.ne.s32.totalorder %s149, %s151
    %p155 = scmp.eq.s32.totalorder %s15, 0
    %p156 = por %p154, %p155
    %p157 = scmp.ne.s32.totalorder %s149, %s151
    %p158 = scmp.eq.s32.totalorder %s20, 1
    %p159 = por %p157, %p158
    %p160 = scmp.ne.s32.totalorder %s151, %s152
    %p161 = scmp.eq.s32.totalorder %s20, 0
    %p162 = por %p160, %p161
    %p163 = scmp.ne.s32.totalorder %s151, %s152
    %p164 = scmp.eq.s32.totalorder %s21, 1
    %p165 = por %p163, %p164
    %p167 = scmp.ne.s32.totalorder %s152, %s166
    %p168 = scmp.eq.s32.totalorder %s21, 0
    %p169 = por %p167, %p168
    %s170 = ssub.s32 %s15, %s22
    %p171 = scmp.eq.s32.totalorder %s170, 0
    %s173 = sadd.s32 %s172, 1
    %s174 = scalar_select %p171, %s172, %s173
    %p177 = pneg %p171
    %p178 = scmp.eq.s32.totalorder %s15, 1
    %p179 = por %p177, %p178
    %p180 = scmp.ne.s32.totalorder %s172, %s175
    %p181 = scmp.eq.s32.totalorder %s15, 0
    %p182 = por %p180, %p181
    %p183 = scmp.ne.s32.totalorder %s172, %s175
    %p184 = scmp.eq.s32.totalorder %s20, 1
    %p185 = por %p183, %p184
    %p186 = scmp.ne.s32.totalorder %s175, %s176
    %p187 = scmp.eq.s32.totalorder %s20, 0
    %p188 = por %p186, %p187
    %p189 = scmp.ne.s32.totalorder %s175, %s176
    %p190 = scmp.eq.s32.totalorder %s21, 1
    %p191 = por %p189, %p190
    %p193 = scmp.ne.s32.totalorder %s176, %s192
    %p194 = scmp.eq.s32.totalorder %s21, 0
    %p195 = por %p193, %p194
    %s196 = ssub.s32 %s15, %s22
    %p197 = scmp.eq.s32.totalorder %s196, 0
    %s199 = sadd.s32 %s198, 1
    %s200 = scalar_select %p197, %s198, %s199
    %p203 = pneg %p197
    %p204 = scmp.eq.s32.totalorder %s15, 1
    %p205 = por %p203, %p204
    %p206 = scmp.ne.s32.totalorder %s198, %s201
    %p207 = scmp.eq.s32.totalorder %s15, 0
    %p208 = por %p206, %p207
    %p209 = scmp.ne.s32.totalorder %s198, %s201
    %p210 = scmp.eq.s32.totalorder %s20, 1
    %p211 = por %p209, %p210
    %p212 = scmp.ne.s32.totalorder %s201, %s202
    %p213 = scmp.eq.s32.totalorder %s20, 0
    %p214 = por %p212, %p213
    %p215 = scmp.ne.s32.totalorder %s201, %s202
    %p216 = scmp.eq.s32.totalorder %s21, 1
    %p217 = por %p215, %p216
    %p219 = scmp.ne.s32.totalorder %s202, %s218
    %p220 = scmp.eq.s32.totalorder %s21, 0
    %p221 = por %p219, %p220
    %s222 = ssub.s32 %s15, %s22
    %p223 = scmp.eq.s32.totalorder %s222, 0
    %s225 = sadd.s32 %s224, 1
    %s226 = scalar_select %p223, %s224, %s225
    %p229 = pneg %p223
    %p230 = scmp.eq.s32.totalorder %s15, 1
    %p231 = por %p229, %p230
    %p232 = scmp.ne.s32.totalorder %s224, %s227
    %p233 = scmp.eq.s32.totalorder %s15, 0
    %p234 = por %p232, %p233
    %p235 = scmp.ne.s32.totalorder %s224, %s227
    %p236 = scmp.eq.s32.totalorder %s20, 1
    %p237 = por %p235, %p236
    %p238 = scmp.ne.s32.totalorder %s227, %s228
    %p239 = scmp.eq.s32.totalorder %s20, 0
    %p240 = por %p238, %p239
    %p241 = scmp.ne.s32.totalorder %s227, %s228
    %p242 = scmp.eq.s32.totalorder %s21, 1
    %p243 = por %p241, %p242
    %p245 = scmp.ne.s32.totalorder %s228, %s244
    %p246 = scmp.eq.s32.totalorder %s21, 0
    %p247 = por %p245, %p246
    %p248 = scmp.le.s32.totalorder 1, %s15
    %p249 = scmp.lt.s32.totalorder %s15, 3
    %p250 = pnand %p248, %p249
    %p251 = pneg %p250
    // Predicated region
    $region9: #{_lambda_.9} parent=5 // pred_check
      _
    $region10: #{_lambda_.9} parent=5 // pred_check_branch
      %253 = sbr.rel (%p250) target = $region12
    $region11: #{_lambda_.9} parent=5 // pred_region
      %s254 = ssub.s32 %s15, 1
      // Predicated region
      $region13: #{_lambda_.9} parent=11 // pred_check
        %p255 = pneg %p36
      $region14: #{_lambda_.9} parent=11 // pred_check_branch
        %257 = sbr.rel (%p255) target = $region16
      $region15: #{_lambda_.9} parent=11 // pred_region
        _
      $region16: #{_lambda_.9} parent=11 // pred_fallthru
        _
      // Predicated region
      $region17: #{_lambda_.9} parent=11 // pred_check
        %p258 = pneg %p57
      $region18: #{_lambda_.9} parent=11 // pred_check_branch
        %260 = sbr.rel (%p258) target = $region20
      $region19: #{_lambda_.9} parent=11 // pred_region
        _
      $region20: #{_lambda_.9} parent=11 // pred_fallthru
        _
      // Predicated region
      $region21: #{_lambda_.9} parent=11 // pred_check
        %p261 = pneg %p78
      $region22: #{_lambda_.9} parent=11 // pred_check_branch
        %263 = sbr.rel (%p261) target = $region24
      $region23: #{_lambda_.9} parent=11 // pred_region
        _
      $region24: #{_lambda_.9} parent=11 // pred_fallthru
        _
      // Predicated region
      $region25: #{_lambda_.9} parent=11 // pred_check
        %p264 = pneg %p99
      $region26: #{_lambda_.9} parent=11 // pred_check_branch
        %266 = sbr.rel (%p264) target = $region28
      $region27: #{_lambda_.9} parent=11 // pred_region
        _
      $region28: #{_lambda_.9} parent=11 // pred_fallthru
        _
      // Predicated region
      $region29: #{_lambda_.9} parent=11 // pred_check
        %p267 = pneg %p120
      $region30: #{_lambda_.9} parent=11 // pred_check_branch
        %269 = sbr.rel (%p267) target = $region32
      $region31: #{_lambda_.9} parent=11 // pred_region
        _
      $region32: #{_lambda_.9} parent=11 // pred_fallthru
        _
      // Predicated region
      $region33: #{_lambda_.9} parent=11 // pred_check
        %p270 = pneg %p141
      $region34: #{_lambda_.9} parent=11 // pred_check_branch
        %272 = sbr.rel (%p270) target = $region36
      $region35: #{_lambda_.9} parent=11 // pred_region
        _
      $region36: #{_lambda_.9} parent=11 // pred_fallthru
        _
      // Predicated region
      $region37: #{_lambda_.9} parent=11 // pred_check
        %p273 = pneg %p162
      $region38: #{_lambda_.9} parent=11 // pred_check_branch
        %275 = sbr.rel (%p273) target = $region40
      $region39: #{_lambda_.9} parent=11 // pred_region
        _
      $region40: #{_lambda_.9} parent=11 // pred_fallthru
        _
    $region12: #{_lambda_.9} parent=5 // pred_fallthru
      _
    %p276 = scmp.lt.s32.totalorder %s15, 2
    // Predicated region
    $region41: #{_lambda_.9} parent=5 // pred_check
      %p277 = pneg %p276
    $region42: #{_lambda_.9} parent=5 // pred_check_branch
      %279 = sbr.rel (%p277) target = $region44
    $region43: #{_lambda_.9} parent=5 // pred_region
      // Predicated region
      $region45: #{_lambda_.9} parent=43 // pred_check
        %p280 = pneg %p182
      $region46: #{_lambda_.9} parent=43 // pred_check_branch
        %282 = sbr.rel (%p280) target = $region48
      $region47: #{_lambda_.9} parent=43 // pred_region
        %p283 = scmp.lt.s32.totalorder %s15, 1
        %s284 = scalar_select %p283, %s15, 1
        %s285 = smul.addr %s284, 2
        %s286 = smul.addr %s285, 4
        %s287 = scalar_lea.vmem %s7, %s286
      $region48: #{_lambda_.9} parent=43 // pred_fallthru
        _
      // Predicated region
      $region49: #{_lambda_.9} parent=43 // pred_check
        %p288 = pneg %p208
      $region50: #{_lambda_.9} parent=43 // pred_check_branch
        %290 = sbr.rel (%p288) target = $region52
      $region51: #{_lambda_.9} parent=43 // pred_region
        %p291 = scmp.lt.s32.totalorder %s15, 1
        %s292 = scalar_select %p291, %s15, 1
        %s293 = smul.addr %s292, 2
        %s294 = smul.addr %s293, 2
        %s295 = scalar_lea.vmem %s8, %s294
      $region52: #{_lambda_.9} parent=43 // pred_fallthru
        _
    $region44: #{_lambda_.9} parent=5 // pred_fallthru
      _
    %p296 = scmp.le.s32.totalorder 1, %s15
    %p297 = scmp.lt.s32.totalorder %s15, 3
    %p298 = pnand %p296, %p297
    %p299 = pneg %p298
    // Predicated region
    $region53: #{_lambda_.9} parent=5 // pred_check
      _
    $region54: #{_lambda_.9} parent=5 // pred_check_branch
      %301 = sbr.rel (%p298) target = $region56
    $region55: #{_lambda_.9} parent=5 // pred_region
      %s302 = ssub.s32 %s15, 1
      %p303 = pneg %p36
      %p304 = pneg %p33
      %p305 = pneg %p57
      %p306 = pneg %p54
      %p307 = pneg %p78
      %p308 = pneg %p75
      %p309 = pneg %p99
      %p310 = pneg %p96
      %p311 = pneg %p120
      %p312 = pneg %p117
      %p313 = pneg %p141
      %p314 = pneg %p138
      %p315 = pneg %p162
      %p316 = pneg %p159
      %p317 = scmp.lt.s32.totalorder %s20, 1
      %s318 = scalar_select %p317, %s20, 1
      %s319 = smul.addr %s318, 2
      %s320 = smul.addr %s319, 4
      %s321 = scalar_lea.vmem %s7, %s320
      %p322 = pneg %p188
      %p323 = pneg %p185
      %p324 = scmp.lt.s32.totalorder %s20, 1
      %s325 = scalar_select %p324, %s20, 1
      %s326 = smul.addr %s325, 2
      %s327 = smul.addr %s326, 2
      %s328 = scalar_lea.vmem %s8, %s327
      %p329 = pneg %p214
      %p330 = pneg %p211
      %p331 = pneg %p240
      %p332 = pneg %p237
      %p333 = scmp.lt.s32.totalorder %s20, 1
      %s334 = scalar_select %p333, %s20, 1
      %s335 = smul.addr %s334, 2
      %s336 = smul.addr %s335, 2
      %s337 = scalar_lea.vmem %s9, %s336
      %p338 = scmp.lt.s32.totalorder %s20, 1
      %s339 = scalar_select %p338, %s20, 1
      %s340 = smul.addr %s339, 2
      %s341 = smul.addr %s340, 4
      %s342 = scalar_lea.vmem %s7, %s341
      %p343 = scmp.lt.s32.totalorder %s20, 1
      %s344 = scalar_select %p343, %s20, 1
      %s345 = smul.addr %s344, 2
      %s346 = smul.addr %s345, 2
      %s347 = scalar_lea.vmem %s8, %s346
      %p348 = scmp.lt.s32.totalorder %s20, 1
      %s349 = scalar_select %p348, %s20, 1
      %s350 = smul.addr %s349, 2
      %s351 = smul.addr %s350, 2
      %s352 = scalar_lea.vmem %s9, %s351
      %v356 = vld [vmem:[%s0] sm:$0xff]
      %v357 = vld [vmem:[%s0 + $0x8] sm:$0xf]
      %v358 = vld [vmem:[%s1] sm:$0xff]
      %v359 = vld [vmem:[%s1 + $0x8] sm:$0xf]
      %v360 = vld [vmem:[%s2] sm:$0xf]
      %v361 = vld [vmem:[%s342] sm:$0xff]
      %v362 = vunpack.c.l.bf16 %v361
      %v363 = vunpack.c.h.bf16 %v361
      %365 = vset.pattern.permute.xlu0 0
      %366 = vperm.xlu0 %365, %v356
      %v367 = vpop.permute.xlu0 %366
      %v369 = vmul.f32 %v362, %v367
      %v370 = vmul.f32 %v363, %v367
      %372 = vset.pattern.permute.xlu0 0
      %373 = vperm.xlu0 %372, %v358
      %v374 = vpop.permute.xlu0 %373
      %v376 = vadd.f32 %v369, %v374
      %v377 = vadd.f32 %v370, %v374
      %v378 = vmax.f32 %v376, 0.0
      %v379 = vmax.f32 %v377, 0.0
      %v380 = vpack.c.bf16 %v378, %v378
      %v381 = vpack.c.bf16 %v379, %v379
      %v382 = vld [vmem:[%s347] sm:$0xf]
      %v383 = vunpack.c.l.bf16 %v382
      %385 = vset.pattern.permute.xlu0 0
      %386 = vperm.xlu0 %385, %v357
      %v387 = vpop.permute.xlu0 %386
      %v389 = vunpack.c.l.s4 839922192
      %v390 = vunpack.c.0.s8 %v389
      %v391 = vlaneseq
      %v392 = vshrl.u32 %v391, 7
      %v393 = vsub.s32 %v390, %v392
      %v394 = vrot.slane %v387, %v393
      %v396 = vmul.f32 %v383, %v394
      %398 = vset.pattern.permute.xlu0 0
      %399 = vperm.xlu0 %398, %v359
      %v400 = vpop.permute.xlu0 %399
      %v402 = vunpack.c.l.s4 839922192
      %v403 = vunpack.c.0.s8 %v402
      %v404 = vlaneseq
      %v405 = vshrl.u32 %v404, 7
      %v406 = vsub.s32 %v403, %v405
      %v407 = vrot.slane %v400, %v406
      %v409 = vadd.f32 %v396, %v407
      %v410 = vmax.f32 %v409, 0.0
      %v412 = vcombine.high %v410, %v410
      %v414 = vpack.c.bf16 %v410, %v410
      %v415 = vpack.c.bf16 %v412, %v412
      %v417 = vunpack.c.l.b16 %v360
      %v418 = vpack.c.b16 %v417, %v417
      %419 = vrot.lane.b32.xlu0 %v418, 120
      %v420 = vpop.permute.xlu0 %419
      %vm421 = vcmask 31744
      %v423 = vsel %vm421, %v420, 0
      %vm425 = vcmask 1041408
      %v427 = vsel %vm425, %v414, 0
      %v430 = vsel %vm425, %v415, 0
      %432 = vmatprep.subr.bf16.mxu0 %v430
      %433 = vmatpush1.bf16.msra.mxu0 %v427
      %434 = vmatprep.subr.bf16.mxu0 0
      %435 = vmatpush1.bf16.msra.mxu0 0
      %436 = vmatprep.subr.bf16.mxu0 0
      %437 = vmatpush1.bf16.msra.mxu0 0
      %438 = vmatprep.subr.bf16.mxu0 0
      %439 = vmatpush1.bf16.msra.mxu0 0
      %440 = vmatprep.subr.bf16.mxu0 0
      %441 = vmatpush1.bf16.msra.mxu0 0
      %442 = vmatprep.subr.bf16.mxu0 0
      %443 = vmatpush1.bf16.msra.mxu0 0
      %444 = vmatprep.subr.bf16.mxu0 0
      %445 = vmatpush1.bf16.msra.mxu0 0
      %446 = vmatprep.subr.bf16.mxu0 0
      %447 = vmatpush1.bf16.msra.mxu0 0
      %448 = vmatprep.subr.bf16.mxu0 0
      %449 = vmatpush1.bf16.msra.mxu0 0
      %450 = vmatprep.subr.bf16.mxu0 0
      %451 = vmatpush1.bf16.msra.mxu0 0
      %452 = vmatprep.subr.bf16.mxu0 0
      %453 = vmatpush1.bf16.msra.mxu0 0
      %454 = vmatprep.subr.bf16.mxu0 0
      %455 = vmatpush1.bf16.msra.mxu0 0
      %456 = vmatprep.subr.bf16.mxu0 0
      %457 = vmatpush1.bf16.msra.mxu0 0
      %458 = vmatprep.subr.bf16.mxu0 0
      %459 = vmatpush1.bf16.msra.mxu0 0
      %460 = vmatprep.subr.bf16.mxu0 0
      %461 = vmatpush1.bf16.msra.mxu0 0
      %462 = vmatprep.subr.bf16.mxu0 0
      %463 = vmatpush1.bf16.msra.mxu0 0
      %464 = vmatprep.mubr.bf16.mxu0 0
      %465 = vmatmul.mubr.bf16.gmra.mrb[0].mxu0 %v423
      %v466 = vpop.f32.mrb[0].mxu0
      %v467 = vadd.f32 0.0, %v466
      %v468 = vpop.f32.mrb[0].mxu0
      %v469 = vadd.f32 0.0, %v468
      %v470 = vpop.f32.mrb[0].mxu0
      %v471 = vpop.f32.mrb[0].mxu0
      %472 = vdwg.mxu0
      %vm473 = vcmask 64512
      %v475 = vsel %vm473, %v360, 0
      %vm477 = vcmask 1043456
      %v479 = vsel %vm477, %v380, 0
      %v482 = vsel %vm477, %v381, 0
      %484 = vmatprep.subr.bf16.mxu0 %v482
      %485 = vmatpush1.bf16.msra.mxu0 %v479
      %486 = vmatprep.subr.bf16.mxu0 0
      %487 = vmatpush1.bf16.msra.mxu0 0
      %488 = vmatprep.subr.bf16.mxu0 0
      %489 = vmatpush1.bf16.msra.mxu0 0
      %490 = vmatprep.subr.bf16.mxu0 0
      %491 = vmatpush1.bf16.msra.mxu0 0
      %492 = vmatprep.subr.bf16.mxu0 0
      %493 = vmatpush1.bf16.msra.mxu0 0
      %494 = vmatprep.subr.bf16.mxu0 0
      %495 = vmatpush1.bf16.msra.mxu0 0
      %496 = vmatprep.subr.bf16.mxu0 0
      %497 = vmatpush1.bf16.msra.mxu0 0
      %498 = vmatprep.subr.bf16.mxu0 0
      %499 = vmatpush1.bf16.msra.mxu0 0
      %500 = vmatprep.subr.bf16.mxu0 0
      %501 = vmatpush1.bf16.msra.mxu0 0
      %502 = vmatprep.subr.bf16.mxu0 0
      %503 = vmatpush1.bf16.msra.mxu0 0
      %504 = vmatprep.subr.bf16.mxu0 0
      %505 = vmatpush1.bf16.msra.mxu0 0
      %506 = vmatprep.subr.bf16.mxu0 0
      %507 = vmatpush1.bf16.msra.mxu0 0
      %508 = vmatprep.subr.bf16.mxu0 0
      %509 = vmatpush1.bf16.msra.mxu0 0
      %510 = vmatprep.subr.bf16.mxu0 0
      %511 = vmatpush1.bf16.msra.mxu0 0
      %512 = vmatprep.subr.bf16.mxu0 0
      %513 = vmatpush1.bf16.msra.mxu0 0
      %514 = vmatprep.subr.bf16.mxu0 0
      %515 = vmatpush1.bf16.msra.mxu0 0
      %516 = vmatprep.mubr.bf16.mxu0 0
      %517 = vmatmul.mubr.bf16.gmra.mrb[0].mxu0 %v475
      %v518 = vpop.f32.mrb[0].mxu0
      %v519 = vadd.f32 %v467, %v518
      %v520 = vpop.f32.mrb[0].mxu0
      %v521 = vadd.f32 %v469, %v520
      %v522 = vpop.f32.mrb[0].mxu0
      %v523 = vpop.f32.mrb[0].mxu0
      %524 = vdwg.mxu0
      %v525 = vld [vmem:[%s3] sm:$0xff]
      %527 = vset.pattern.permute.xlu0 0
      %528 = vperm.xlu0 %527, %v525
      %v529 = vpop.permute.xlu0 %528
      %v531 = vadd.f32 %v519, %v529
      %v532 = vadd.f32 %v521, %v529
      %v533 = vmax.f32 %v531, 0.0
      %v534 = vmax.f32 %v532, 0.0
      %v535 = vpack.c.bf16 %v533, %v533
      %v536 = vpack.c.bf16 %v534, %v534
      %v537 = vld [vmem:[%s4] sm:$0x3]
      %540 = vrot.lane.b32.xlu0 %v535, 17
      %v541 = vpop.permute.xlu0 %540
      %542 = vrot.lane.b32.xlu0 %v536, 17
      %v543 = vpop.permute.xlu0 %542
      %vm544 = vcmask 138240
      %v545 = vsel %vm544, %v541, %v543
      %vm547 = vcmask 138240
      %v550 = vsel %vm547, 0, %v541
      %v553 = vsel %vm547, %v543, 0
      %v555 = vld [vmem:[%s6] sm:$0x3]
      %v556 = vadd.s32 %v555, 4294967295
      %vm557 = vcmp.ge.s32.totalorder %v556, 0
      %vm558 = vcmp.lt.s32.totalorder %v556, 16
      %vm559 = vmand %vm557, %vm558
      %v560 = vsel %vm559, 1, 0
      %v561 = vlaneseq
      %v562 = vshrl.u32 %v561, 7
      %v563 = vsub.s32 0, %v562
      %v564 = vrot.slane %v560, %v563
      %v565 = vlaneseq
      %v566 = vshrl.u32 %v565, 7
      %v567 = vsub.s32 1, %v566
      %v568 = vrot.slane %v560, %v567
      %vm569 = vcmp.eq.s32.totalorder %v564, 1
      %vm570 = vcmp.eq.s32.totalorder %v568, 1
      %vm571 = vmpackc.low %vm570, %vm569
      %v572 = vsel %vm571, 65537, 0
      %v573 = vlaneseq
      %v574 = vshrl.u32 %v573, 7
      %v575 = vsub.s32 0, %v574
      %v576 = vrot.slane %v572, %v575
      %v577 = vlaneseq
      %v578 = vshrl.u32 %v577, 7
      %v579 = vsub.s32 4, %v578
      %v580 = vrot.slane %v572, %v579
      %vm581 = vcmp.ne.s16.totalorder %v576, 0
      %vm582 = vcmp.ne.s16.totalorder %v580, 0
      %v583 = vsel %vm581, %v550, 0
      %v584 = vsel %vm582, %v545, 0
      %v587 = vunpack.c.l.s4 1983009808
      %v588 = vunpack.c.0.s8 %v587
      %v589 = vlaneseq
      %v590 = vshrl.u32 %v589, 7
      %v591 = vsub.s32 %v588, %v590
      %v592 = vrot.slane %v537, %v591
      %593 = vrot.lane.b32.xlu0 %v592, 120
      %v594 = vpop.permute.xlu0 %593
      %597 = vrot.lane.b32.xlu0 %v550, 127
      %v598 = vpop.permute.xlu0 %597
      %599 = vrot.lane.b32.xlu0 %v545, 127
      %v600 = vpop.permute.xlu0 %599
      %601 = vrot.lane.b32.xlu0 %v553, 127
      %v602 = vpop.permute.xlu0 %601
      %vm603 = vcmask 1039360
      %v604 = vsel %vm603, %v598, %v600
      %v605 = vsel %vm603, %v600, %v602
      %v607 = vsel %vm473, %v594, 0
      %v610 = vsel %vm477, %v604, 0
      %v613 = vsel %vm477, %v605, 0
      %615 = vmatprep.subr.bf16.mxu0 %v613
      %616 = vmatpush1.bf16.msra.mxu0 %v610
      %617 = vmatprep.subr.bf16.mxu0 0
      %618 = vmatpush1.bf16.msra.mxu0 0
      %619 = vmatprep.subr.bf16.mxu0 0
      %620 = vmatpush1.bf16.msra.mxu0 0
      %621 = vmatprep.subr.bf16.mxu0 0
      %622 = vmatpush1.bf16.msra.mxu0 0
      %623 = vmatprep.subr.bf16.mxu0 0
      %624 = vmatpush1.bf16.msra.mxu0 0
      %625 = vmatprep.subr.bf16.mxu0 0
      %626 = vmatpush1.bf16.msra.mxu0 0
      %627 = vmatprep.subr.bf16.mxu0 0
      %628 = vmatpush1.bf16.msra.mxu0 0
      %629 = vmatprep.subr.bf16.mxu0 0
      %630 = vmatpush1.bf16.msra.mxu0 0
      %631 = vmatprep.subr.bf16.mxu0 0
      %632 = vmatpush1.bf16.msra.mxu0 0
      %633 = vmatprep.subr.bf16.mxu0 0
      %634 = vmatpush1.bf16.msra.mxu0 0
      %635 = vmatprep.subr.bf16.mxu0 0
      %636 = vmatpush1.bf16.msra.mxu0 0
      %637 = vmatprep.subr.bf16.mxu0 0
      %638 = vmatpush1.bf16.msra.mxu0 0
      %639 = vmatprep.subr.bf16.mxu0 0
      %640 = vmatpush1.bf16.msra.mxu0 0
      %641 = vmatprep.subr.bf16.mxu0 0
      %642 = vmatpush1.bf16.msra.mxu0 0
      %643 = vmatprep.subr.bf16.mxu0 0
      %644 = vmatpush1.bf16.msra.mxu0 0
      %645 = vmatprep.subr.bf16.mxu0 0
      %646 = vmatpush1.bf16.msra.mxu0 0
      %647 = vmatprep.mubr.bf16.mxu0 0
      %648 = vmatmul.mubr.bf16.gmra.mrb[0].mxu0 %v607
      %v649 = vpop.f32.mrb[0].mxu0
      %v650 = vadd.f32 0.0, %v649
      %v651 = vpop.f32.mrb[0].mxu0
      %v652 = vadd.f32 0.0, %v651
      %v653 = vpop.f32.mrb[0].mxu0
      %v654 = vpop.f32.mrb[0].mxu0
      %655 = vdwg.mxu0
      %v657 = vsel %vm473, %v537, 0
      %v660 = vsel %vm477, %v583, 0
      %v663 = vsel %vm477, %v584, 0
      %665 = vmatprep.subr.bf16.mxu0 %v663
      %666 = vmatpush1.bf16.msra.mxu0 %v660
      %667 = vmatprep.subr.bf16.mxu0 0
      %668 = vmatpush1.bf16.msra.mxu0 0
      %669 = vmatprep.subr.bf16.mxu0 0
      %670 = vmatpush1.bf16.msra.mxu0 0
      %671 = vmatprep.subr.bf16.mxu0 0
      %672 = vmatpush1.bf16.msra.mxu0 0
      %673 = vmatprep.subr.bf16.mxu0 0
      %674 = vmatpush1.bf16.msra.mxu0 0
      %675 = vmatprep.subr.bf16.mxu0 0
      %676 = vmatpush1.bf16.msra.mxu0 0
      %677 = vmatprep.subr.bf16.mxu0 0
      %678 = vmatpush1.bf16.msra.mxu0 0
      %679 = vmatprep.subr.bf16.mxu0 0
      %680 = vmatpush1.bf16.msra.mxu0 0
      %681 = vmatprep.subr.bf16.mxu0 0
      %682 = vmatpush1.bf16.msra.mxu0 0
      %683 = vmatprep.subr.bf16.mxu0 0
      %684 = vmatpush1.bf16.msra.mxu0 0
      %685 = vmatprep.subr.bf16.mxu0 0
      %686 = vmatpush1.bf16.msra.mxu0 0
      %687 = vmatprep.subr.bf16.mxu0 0
      %688 = vmatpush1.bf16.msra.mxu0 0
      %689 = vmatprep.subr.bf16.mxu0 0
      %690 = vmatpush1.bf16.msra.mxu0 0
      %691 = vmatprep.subr.bf16.mxu0 0
      %692 = vmatpush1.bf16.msra.mxu0 0
      %693 = vmatprep.subr.bf16.mxu0 0
      %694 = vmatpush1.bf16.msra.mxu0 0
      %695 = vmatprep.subr.bf16.mxu0 0
      %696 = vmatpush1.bf16.msra.mxu0 0
      %697 = vmatprep.mubr.bf16.mxu0 0
      %698 = vmatmul.mubr.bf16.gmra.mrb[0].mxu0 %v657
      %v699 = vpop.f32.mrb[0].mxu0
      %v700 = vadd.f32 %v650, %v699
      %v701 = vpop.f32.mrb[0].mxu0
      %v702 = vadd.f32 %v652, %v701
      %v703 = vpop.f32.mrb[0].mxu0
      %v704 = vpop.f32.mrb[0].mxu0
      %705 = vdwg.mxu0
      %v706 = vadd.s32 %v555, 1
      %vm707 = vcmp.ge.s32.totalorder %v706, 0
      %vm708 = vcmp.lt.s32.totalorder %v706, 16
      %vm709 = vmand %vm707, %vm708
      %v710 = vsel %vm709, 1, 0
      %v711 = vlaneseq
      %v712 = vshrl.u32 %v711, 7
      %v713 = vsub.s32 0, %v712
      %v714 = vrot.slane %v710, %v713
      %v715 = vlaneseq
      %v716 = vshrl.u32 %v715, 7
      %v717 = vsub.s32 1, %v716
      %v718 = vrot.slane %v710, %v717
      %vm719 = vcmp.eq.s32.totalorder %v714, 1
      %vm720 = vcmp.eq.s32.totalorder %v718, 1
      %vm721 = vmpackc.low %vm720, %vm719
      %v722 = vsel %vm721, 65537, 0
      %v723 = vlaneseq
      %v724 = vshrl.u32 %v723, 7
      %v725 = vsub.s32 0, %v724
      %v726 = vrot.slane %v722, %v725
      %v727 = vlaneseq
      %v728 = vshrl.u32 %v727, 7
      %v729 = vsub.s32 4, %v728
      %v730 = vrot.slane %v722, %v729
      %731 = vrot.lane.b32.xlu0 %v726, 2
      %v732 = vpop.permute.xlu0 %731
      %733 = vrot.lane.b32.xlu0 %v730, 2
      %v734 = vpop.permute.xlu0 %733
      %vm735 = vcmask 15360
      %v736 = vsel %vm735, %v732, %v734
      %vm737 = vcmp.ne.s16.totalorder %v732, 0
      %vm738 = vcmp.ne.s16.totalorder %v736, 0
      %vm739 = vcmp.ne.s16.totalorder %v734, 0
      %v740 = vsel %vm737, %v550, 0
      %v741 = vsel %vm738, %v545, 0
      %v742 = vsel %vm739, %v553, 0
      %743 = vrot.lane.b32.xlu0 %v592, 112
      %v744 = vpop.permute.xlu0 %743
      %748 = vrot.lane.b32.xlu0 %v740, 126
      %v749 = vpop.permute.xlu0 %748
      %750 = vrot.lane.b32.xlu0 %v741, 126
      %v751 = vpop.permute.xlu0 %750
      %752 = vrot.lane.b32.xlu0 %v742, 126
      %v753 = vpop.permute.xlu0 %752
      %vm754 = vcmask 1031168
      %v755 = vsel %vm754, %v749, %v751
      %v756 = vsel %vm754, %v751, %v753
      %v758 = vsel %vm473, %v744, 0
      %v761 = vsel %vm477, %v755, 0
      %v764 = vsel %vm477, %v756, 0
      %766 = vmatprep.subr.bf16.mxu0 %v764
      %767 = vmatpush1.bf16.msra.mxu0 %v761
      %768 = vmatprep.subr.bf16.mxu0 0
      %769 = vmatpush1.bf16.msra.mxu0 0
      %770 = vmatprep.subr.bf16.mxu0 0
      %771 = vmatpush1.bf16.msra.mxu0 0
      %772 = vmatprep.subr.bf16.mxu0 0
      %773 = vmatpush1.bf16.msra.mxu0 0
      %774 = vmatprep.subr.bf16.mxu0 0
      %775 = vmatpush1.bf16.msra.mxu0 0
      %776 = vmatprep.subr.bf16.mxu0 0
      %777 = vmatpush1.bf16.msra.mxu0 0
      %778 = vmatprep.subr.bf16.mxu0 0
      %779 = vmatpush1.bf16.msra.mxu0 0
      %780 = vmatprep.subr.bf16.mxu0 0
      %781 = vmatpush1.bf16.msra.mxu0 0
      %782 = vmatprep.subr.bf16.mxu0 0
      %783 = vmatpush1.bf16.msra.mxu0 0
      %784 = vmatprep.subr.bf16.mxu0 0
      %785 = vmatpush1.bf16.msra.mxu0 0
      %786 = vmatprep.subr.bf16.mxu0 0
      %787 = vmatpush1.bf16.msra.mxu0 0
      %788 = vmatprep.subr.bf16.mxu0 0
      %789 = vmatpush1.bf16.msra.mxu0 0
      %790 = vmatprep.subr.bf16.mxu0 0
      %791 = vmatpush1.bf16.msra.mxu0 0
      %792 = vmatprep.subr.bf16.mxu0 0
      %793 = vmatpush1.bf16.msra.mxu0 0
      %794 = vmatprep.subr.bf16.mxu0 0
      %795 = vmatpush1.bf16.msra.mxu0 0
      %796 = vmatprep.subr.bf16.mxu0 0
      %797 = vmatpush1.bf16.msra.mxu0 0
      %798 = vmatprep.mubr.bf16.mxu0 0
      %799 = vmatmul.mubr.bf16.gmra.mrb[0].mxu0 %v758
      %v800 = vpop.f32.mrb[0].mxu0
      %v801 = vadd.f32 0.0, %v800
      %v802 = vpop.f32.mrb[0].mxu0
      %v803 = vadd.f32 0.0, %v802
      %v804 = vpop.f32.mrb[0].mxu0
      %v805 = vpop.f32.mrb[0].mxu0
      %806 = vdwg.mxu0
      %v807 = vadd.f32 %v700, %v801
      %v808 = vadd.f32 %v702, %v803
      %809 = vrot.lane.b32.xlu0 %v576, 16
      %v810 = vpop.permute.xlu0 %809
      %811 = vrot.lane.b32.xlu0 %v580, 16
      %v812 = vpop.permute.xlu0 %811
      %vm813 = vcmask 130048
      %v814 = vsel %vm813, %v810, %v812
      %vm815 = vcmp.ne.s16.totalorder %v810, 0
      %vm816 = vcmp.ne.s16.totalorder %v814, 0
      %vm817 = vcmp.ne.s16.totalorder %v812, 0
      %v818 = vsel %vm815, %v550, 0
      %v819 = vsel %vm816, %v545, 0
      %v820 = vsel %vm817, %v553, 0
      %821 = vrot.lane.b32.xlu0 %v592, 104
      %v822 = vpop.permute.xlu0 %821
      %826 = vrot.lane.b32.xlu0 %v818, 112
      %v827 = vpop.permute.xlu0 %826
      %828 = vrot.lane.b32.xlu0 %v819, 112
      %v829 = vpop.permute.xlu0 %828
      %830 = vrot.lane.b32.xlu0 %v820, 112
      %v831 = vpop.permute.xlu0 %830
      %vm832 = vcmask 916480
      %v833 = vsel %vm832, %v827, %v829
      %v834 = vsel %vm832, %v829, %v831
      %v836 = vsel %vm473, %v822, 0
      %v839 = vsel %vm477, %v833, 0
      %v842 = vsel %vm477, %v834, 0
      %844 = vmatprep.subr.bf16.mxu0 %v842
      %845 = vmatpush1.bf16.msra.mxu0 %v839
      %846 = vmatprep.subr.bf16.mxu0 0
      %847 = vmatpush1.bf16.msra.mxu0 0
      %848 = vmatprep.subr.bf16.mxu0 0
      %849 = vmatpush1.bf16.msra.mxu0 0
      %850 = vmatprep.subr.bf16.mxu0 0
      %851 = vmatpush1.bf16.msra.mxu0 0
      %852 = vmatprep.subr.bf16.mxu0 0
      %853 = vmatpush1.bf16.msra.mxu0 0
      %854 = vmatprep.subr.bf16.mxu0 0
      %855 = vmatpush1.bf16.msra.mxu0 0
      %856 = vmatprep.subr.bf16.mxu0 0
      %857 = vmatpush1.bf16.msra.mxu0 0
      %858 = vmatprep.subr.bf16.mxu0 0
      %859 = vmatpush1.bf16.msra.mxu0 0
      %860 = vmatprep.subr.bf16.mxu0 0
      %861 = vmatpush1.bf16.msra.mxu0 0
      %862 = vmatprep.subr.bf16.mxu0 0
      %863 = vmatpush1.bf16.msra.mxu0 0
      %864 = vmatprep.subr.bf16.mxu0 0
      %865 = vmatpush1.bf16.msra.mxu0 0
      %866 = vmatprep.subr.bf16.mxu0 0
      %867 = vmatpush1.bf16.msra.mxu0 0
      %868 = vmatprep.subr.bf16.mxu0 0
      %869 = vmatpush1.bf16.msra.mxu0 0
      %870 = vmatprep.subr.bf16.mxu0 0
      %871 = vmatpush1.bf16.msra.mxu0 0
      %872 = vmatprep.subr.bf16.mxu0 0
      %873 = vmatpush1.bf16.msra.mxu0 0
      %874 = vmatprep.subr.bf16.mxu0 0
      %875 = vmatpush1.bf16.msra.mxu0 0
      %876 = vmatprep.mubr.bf16.mxu0 0
      %877 = vmatmul.mubr.bf16.gmra.mrb[0].mxu0 %v836
      %v878 = vpop.f32.mrb[0].mxu0
      %v879 = vadd.f32 0.0, %v878
      %v880 = vpop.f32.mrb[0].mxu0
      %v881 = vadd.f32 0.0, %v880
      %v882 = vpop.f32.mrb[0].mxu0
      %v883 = vpop.f32.mrb[0].mxu0
      %884 = vdwg.mxu0
      %v885 = vadd.f32 %v807, %v879
      %v886 = vadd.f32 %v808, %v881
      %887 = vrot.lane.b32.xlu0 %v592, 96
      %v888 = vpop.permute.xlu0 %887
      %889 = vrot.lane.b32.xlu0 %v550, 111
      %v890 = vpop.permute.xlu0 %889
      %891 = vrot.lane.b32.xlu0 %v545, 111
      %v892 = vpop.permute.xlu0 %891
      %893 = vrot.lane.b32.xlu0 %v553, 111
      %v894 = vpop.permute.xlu0 %893
      %vm895 = vcmask 908288
      %v896 = vsel %vm895, %v890, %v892
      %v897 = vsel %vm895, %v892, %v894
      %v899 = vsel %vm473, %v888, 0
      %v902 = vsel %vm477, %v896, 0
      %v905 = vsel %vm477, %v897, 0
      %907 = vmatprep.subr.bf16.mxu0 %v905
      %908 = vmatpush1.bf16.msra.mxu0 %v902
      %909 = vmatprep.subr.bf16.mxu0 0
      %910 = vmatpush1.bf16.msra.mxu0 0
      %911 = vmatprep.subr.bf16.mxu0 0
      %912 = vmatpush1.bf16.msra.mxu0 0
      %913 = vmatprep.subr.bf16.mxu0 0
      %914 = vmatpush1.bf16.msra.mxu0 0
      %915 = vmatprep.subr.bf16.mxu0 0
      %916 = vmatpush1.bf16.msra.mxu0 0
      %917 = vmatprep.subr.bf16.mxu0 0
      %918 = vmatpush1.bf16.msra.mxu0 0
      %919 = vmatprep.subr.bf16.mxu0 0
      %920 = vmatpush1.bf16.msra.mxu0 0
      %921 = vmatprep.subr.bf16.mxu0 0
      %922 = vmatpush1.bf16.msra.mxu0 0
      %923 = vmatprep.subr.bf16.mxu0 0
      %924 = vmatpush1.bf16.msra.mxu0 0
      %925 = vmatprep.subr.bf16.mxu0 0
      %926 = vmatpush1.bf16.msra.mxu0 0
      %927 = vmatprep.subr.bf16.mxu0 0
      %928 = vmatpush1.bf16.msra.mxu0 0
      %929 = vmatprep.subr.bf16.mxu0 0
      %930 = vmatpush1.bf16.msra.mxu0 0
      %931 = vmatprep.subr.bf16.mxu0 0
      %932 = vmatpush1.bf16.msra.mxu0 0
      %933 = vmatprep.subr.bf16.mxu0 0
      %934 = vmatpush1.bf16.msra.mxu0 0
      %935 = vmatprep.subr.bf16.mxu0 0
      %936 = vmatpush1.bf16.msra.mxu0 0
      %937 = vmatprep.subr.bf16.mxu0 0
      %938 = vmatpush1.bf16.msra.mxu0 0
      %939 = vmatprep.mubr.bf16.mxu0 0
      %940 = vmatmul.mubr.bf16.gmra.mrb[0].mxu0 %v899
      %v941 = vpop.f32.mrb[0].mxu0
      %v942 = vadd.f32 0.0, %v941
      %v943 = vpop.f32.mrb[0].mxu0
      %v944 = vadd.f32 0.0, %v943
      %v945 = vpop.f32.mrb[0].mxu0
      %v946 = vpop.f32.mrb[0].mxu0
      %947 = vdwg.mxu0
      %v948 = vadd.f32 %v885, %v942
      %v949 = vadd.f32 %v886, %v944
      %950 = vrot.lane.b32.xlu0 %v726, 18
      %v951 = vpop.permute.xlu0 %950
      %952 = vrot.lane.b32.xlu0 %v730, 18
      %v953 = vpop.permute.xlu0 %952
      %vm954 = vcmask 146432
      %v955 = vsel %vm954, %v951, %v953
      %vm956 = vcmp.ne.s16.totalorder %v951, 0
      %vm957 = vcmp.ne.s16.totalorder %v955, 0
      %vm958 = vcmp.ne.s16.totalorder %v953, 0
      %v959 = vsel %vm956, %v550, 0
      %v960 = vsel %vm957, %v545, 0
      %v961 = vsel %vm958, %v553, 0
      %962 = vrot.lane.b32.xlu0 %v592, 88
      %v963 = vpop.permute.xlu0 %962
      %967 = vrot.lane.b32.xlu0 %v959, 110
      %v968 = vpop.permute.xlu0 %967
      %969 = vrot.lane.b32.xlu0 %v960, 110
      %v970 = vpop.permute.xlu0 %969
      %971 = vrot.lane.b32.xlu0 %v961, 110
      %v972 = vpop.permute.xlu0 %971
      %vm973 = vcmask 900096
      %v974 = vsel %vm973, %v968, %v970
      %v975 = vsel %vm973, %v970, %v972
      %v977 = vsel %vm473, %v963, 0
      %v980 = vsel %vm477, %v974, 0
      %v983 = vsel %vm477, %v975, 0
      %985 = vmatprep.subr.bf16.mxu0 %v983
      %986 = vmatpush1.bf16.msra.mxu0 %v980
      %987 = vmatprep.subr.bf16.mxu0 0
      %988 = vmatpush1.bf16.msra.mxu0 0
      %989 = vmatprep.subr.bf16.mxu0 0
      %990 = vmatpush1.bf16.msra.mxu0 0
      %991 = vmatprep.subr.bf16.mxu0 0
      %992 = vmatpush1.bf16.msra.mxu0 0
      %993 = vmatprep.subr.bf16.mxu0 0
      %994 = vmatpush1.bf16.msra.mxu0 0
      %995 = vmatprep.subr.bf16.mxu0 0
      %996 = vmatpush1.bf16.msra.mxu0 0
      %997 = vmatprep.subr.bf16.mxu0 0
      %998 = vmatpush1.bf16.msra.mxu0 0
      %999 = vmatprep.subr.bf16.mxu0 0
      %1000 = vmatpush1.bf16.msra.mxu0 0
      %1001 = vmatprep.subr.bf16.mxu0 0
      %1002 = vmatpush1.bf16.msra.mxu0 0
      %1003 = vmatprep.subr.bf16.mxu0 0
      %1004 = vmatpush1.bf16.msra.mxu0 0
      %1005 = vmatprep.subr.bf16.mxu0 0
      %1006 = vmatpush1.bf16.msra.mxu0 0
      %1007 = vmatprep.subr.bf16.mxu0 0
      %1008 = vmatpush1.bf16.msra.mxu0 0
      %1009 = vmatprep.subr.bf16.mxu0 0
      %1010 = vmatpush1.bf16.msra.mxu0 0
      %1011 = vmatprep.subr.bf16.mxu0 0
      %1012 = vmatpush1.bf16.msra.mxu0 0
      %1013 = vmatprep.subr.bf16.mxu0 0
      %1014 = vmatpush1.bf16.msra.mxu0 0
      %1015 = vmatprep.subr.bf16.mxu0 0
      %1016 = vmatpush1.bf16.msra.mxu0 0
      %1017 = vmatprep.mubr.bf16.mxu0 0
      %1018 = vmatmul.mubr.bf16.gmra.mrb[0].mxu0 %v977
      %v1019 = vpop.f32.mrb[0].mxu0
      %v1020 = vadd.f32 0.0, %v1019
      %v1021 = vpop.f32.mrb[0].mxu0
      %v1022 = vadd.f32 0.0, %v1021
      %v1023 = vpop.f32.mrb[0].mxu0
      %v1024 = vpop.f32.mrb[0].mxu0
      %1025 = vdwg.mxu0
      %v1026 = vadd.f32 %v948, %v1020
      %v1027 = vadd.f32 %v949, %v1022
      %v1028 = vld [vmem:[%s5] sm:$0xf]
      %1030 = vset.pattern.permute.xlu0 0
      %1031 = vperm.xlu0 %1030, %v1028
      %v1032 = vpop.permute.xlu0 %1031
      %v1034 = vadd.f32 %v1026, %v1032
      %v1035 = vadd.f32 %v1027, %v1032
      %v1036 = vpack.c.bf16 %v1034, %v1034
      %v1037 = vpack.c.bf16 %v1035, %v1035
      %v1040 = vcombine.low %v1036, %v1037
      %v1042 = vunpack.c.l.s4 1983009808
      %v1043 = vunpack.c.0.s8 %v1042
      %v1044 = vlaneseq
      %v1045 = vshrl.u32 %v1044, 7
      %v1046 = vsub.s32 %v1043, %v1045
      %v1047 = vrot.slane %v1040, %v1046
      %1049 = vst [vmem:[%s352] sm:$0xf] %v1047
      %p1050 = scmp.lt.s32.totalorder %s20, 1
      %s1051 = scalar_select %p1050, %s20, 1
      %s1052 = smul.addr %s1051, 2
      %s1053 = smul.addr %s1052, 2
      %s1054 = scalar_lea.vmem %s9, %s1053
      // Predicated region
      $region57: #{_lambda_.9} parent=55 // pred_check
        %p1055 = pneg %p237
      $region58: #{_lambda_.9} parent=55 // pred_check_branch
        %1057 = sbr.rel (%p1055) target = $region60
      $region59: #{_lambda_.9} parent=55 // pred_region
        _
      $region60: #{_lambda_.9} parent=55 // pred_fallthru
        _
    $region56: #{_lambda_.9} parent=5 // pred_fallthru
      _
    %p1058 = scmp.le.s32.totalorder 2, %s15
    // Predicated region
    $region61: #{_lambda_.9} parent=5 // pred_check
      %p1059 = pneg %p1058
    $region62: #{_lambda_.9} parent=5 // pred_check_branch
      %1061 = sbr.rel (%p1059) target = $region64
    $region63: #{_lambda_.9} parent=5 // pred_region
      %s1062 = ssub.s32 %s15, 2
      // Predicated region
      $region65: #{_lambda_.9} parent=63 // pred_check
        %p1063 = pneg %p243
      $region66: #{_lambda_.9} parent=63 // pred_check_branch
        %1065 = sbr.rel (%p1063) target = $region68
      $region67: #{_lambda_.9} parent=63 // pred_region
        %p1066 = scmp.lt.s32.totalorder %s21, 1
        %s1067 = scalar_select %p1066, %s21, 1
        %s1068 = smul.addr %s1067, 2
        %s1069 = smul.addr %s1068, 2
        %s1070 = scalar_lea.vmem %s9, %s1069
      $region68: #{_lambda_.9} parent=63 // pred_fallthru
        _
    $region64: #{_lambda_.9} parent=5 // pred_fallthru
      _
  $region6: #{_lambda_.9} parent=0 // loop_footer
    %s19 = sadd.s32 1, %s15
  $region7: #{_lambda_.9} parent=0 // loop_footer_branch
    %14 = sbr.rel target = $region3
  $region8: #{_lambda_.9} parent=0 // loop_exit
    _

// kernel: _lambda_.10
$region0: #{_lambda_.10}
  #allocation0 [shape = 'u32[]', space=smem, size = 0x4, offset = 0x4, fixed_abs, tag = 'smem constant byte address 0x4 - core index']
  #allocation1 [shape = 'u32[144,128]{1,0:T(1,128)}', space=vmem, size = 0x12000, scoped, tag = 'internal scratch']
  %s0 = inlined_call_operand.vmem [shape: f32[16,1], index: 0, kind: input, shape index: {}]
  %s1 = inlined_call_operand.vmem [shape: f32[16,1], index: 1, kind: input, shape index: {}]
  %s2 = inlined_call_operand.vmem [shape: bf16[8,16], index: 2, kind: input, shape index: {}]
  %s3 = inlined_call_operand.vmem [shape: f32[8,1], index: 3, kind: input, shape index: {}]
  %s4 = inlined_call_operand.vmem [shape: bf16[2,8,256], index: 4, kind: input, shape index: {}]
  %s5 = inlined_call_operand.vmem [shape: bf16[2,4,256], index: 5, kind: input, shape index: {}]
  %s6 = inlined_call_operand.vmem [shape: bf16[2,4,256], index: 6, kind: input, shape index: {}]
  %s7 = inlined_call_operand.vmem [shape: bf16[2,8,256], index: 7, kind: output, shape index: {}]
  %s8 = sld [smem:[#allocation0]]
  $region61: #{_lambda_.10} parent=0
    _
  %s10 = ssub.s32 1, %s8
  %s11 = scalar_select 0, %s10, %s8
  loop: start=0, step=1, limit=4
  $region2: #{_lambda_.10} parent=0 // loop_pre_header
    _
  $region3: #{_lambda_.10} parent=0 // loop_header
    %s13 = sphi 0, %s17
    %p14 = scmp.ge.s32.totalorder %s13, 4
    %s21 = sphi 0, %s21
    %s23 = sphi 0, %s21
    %s24 = sphi 0, %s23
    %s38 = sphi 0, %s24
    %s42 = sphi 0, %s42
    %s44 = sphi 0, %s42
    %s45 = sphi 0, %s44
    %s59 = sphi 0, %s45
    %s63 = sphi 0, %s63
    %s65 = sphi 0, %s63
    %s66 = sphi 0, %s65
    %s80 = sphi 0, %s66
    %s84 = sphi 0, %s84
    %s86 = sphi 0, %s84
    %s87 = sphi 0, %s86
    %s101 = sphi 0, %s87
    %s107 = sphi 0, %s109
    %s110 = sphi 0, %s107
    %s111 = sphi 0, %s110
    %s127 = sphi 0, %s111
    %s133 = sphi 0, %s135
    %s136 = sphi 0, %s133
    %s137 = sphi 0, %s136
    %s153 = sphi 0, %s137
    %s159 = sphi 0, %s161
    %s162 = sphi 0, %s159
    %s163 = sphi 0, %s162
    %s179 = sphi 0, %s163
    %s185 = sphi 0, %s187
    %s188 = sphi 0, %s185
    %s189 = sphi 0, %s188
    %s205 = sphi 0, %s189
  $region4: #{_lambda_.10} parent=0 // loop_header_branch
    %16 = sbr.rel (%p14) target = $region8
  $region5: #{_lambda_.10} parent=0 // loop_body
    %s18 = ssub.s32 %s13, 1
    %s19 = ssub.s32 %s13, 2
    %s20 = sadd.s32 %s13, 1
    %s22 = sadd.s32 %s21, 1
    %p25 = scmp.eq.s32.totalorder %s13, 1
    %p26 = scmp.ne.s32.totalorder %s21, %s23
    %p27 = scmp.eq.s32.totalorder %s13, 0
    %p28 = por %p26, %p27
    %p29 = scmp.ne.s32.totalorder %s21, %s23
    %p30 = scmp.eq.s32.totalorder %s18, 1
    %p31 = por %p29, %p30
    %p32 = scmp.ne.s32.totalorder %s23, %s24
    %p33 = scmp.eq.s32.totalorder %s18, 0
    %p34 = por %p32, %p33
    %p35 = scmp.ne.s32.totalorder %s23, %s24
    %p36 = scmp.eq.s32.totalorder %s19, 1
    %p37 = por %p35, %p36
    %p39 = scmp.ne.s32.totalorder %s24, %s38
    %p40 = scmp.eq.s32.totalorder %s19, 0
    %p41 = por %p39, %p40
    %s43 = sadd.s32 %s42, 1
    %p46 = scmp.eq.s32.totalorder %s13, 1
    %p47 = scmp.ne.s32.totalorder %s42, %s44
    %p48 = scmp.eq.s32.totalorder %s13, 0
    %p49 = por %p47, %p48
    %p50 = scmp.ne.s32.totalorder %s42, %s44
    %p51 = scmp.eq.s32.totalorder %s18, 1
    %p52 = por %p50, %p51
    %p53 = scmp.ne.s32.totalorder %s44, %s45
    %p54 = scmp.eq.s32.totalorder %s18, 0
    %p55 = por %p53, %p54
    %p56 = scmp.ne.s32.totalorder %s44, %s45
    %p57 = scmp.eq.s32.totalorder %s19, 1
    %p58 = por %p56, %p57
    %p60 = scmp.ne.s32.totalorder %s45, %s59
    %p61 = scmp.eq.s32.totalorder %s19, 0
    %p62 = por %p60, %p61
    %s64 = sadd.s32 %s63, 1
    %p67 = scmp.eq.s32.totalorder %s13, 1
    %p68 = scmp.ne.s32.totalorder %s63, %s65
    %p69 = scmp.eq.s32.totalorder %s13, 0
    %p70 = por %p68, %p69
    %p71 = scmp.ne.s32.totalorder %s63, %s65
    %p72 = scmp.eq.s32.totalorder %s18, 1
    %p73 = por %p71, %p72
    %p74 = scmp.ne.s32.totalorder %s65, %s66
    %p75 = scmp.eq.s32.totalorder %s18, 0
    %p76 = por %p74, %p75
    %p77 = scmp.ne.s32.totalorder %s65, %s66
    %p78 = scmp.eq.s32.totalorder %s19, 1
    %p79 = por %p77, %p78
    %p81 = scmp.ne.s32.totalorder %s66, %s80
    %p82 = scmp.eq.s32.totalorder %s19, 0
    %p83 = por %p81, %p82
    %s85 = sadd.s32 %s84, 1
    %p88 = scmp.eq.s32.totalorder %s13, 1
    %p89 = scmp.ne.s32.totalorder %s84, %s86
    %p90 = scmp.eq.s32.totalorder %s13, 0
    %p91 = por %p89, %p90
    %p92 = scmp.ne.s32.totalorder %s84, %s86
    %p93 = scmp.eq.s32.totalorder %s18, 1
    %p94 = por %p92, %p93
    %p95 = scmp.ne.s32.totalorder %s86, %s87
    %p96 = scmp.eq.s32.totalorder %s18, 0
    %p97 = por %p95, %p96
    %p98 = scmp.ne.s32.totalorder %s86, %s87
    %p99 = scmp.eq.s32.totalorder %s19, 1
    %p100 = por %p98, %p99
    %p102 = scmp.ne.s32.totalorder %s87, %s101
    %p103 = scmp.eq.s32.totalorder %s19, 0
    %p104 = por %p102, %p103
    %s105 = ssub.s32 %s13, %s20
    %p106 = scmp.eq.s32.totalorder %s105, 0
    %s108 = sadd.s32 %s107, 1
    %s109 = scalar_select %p106, %s107, %s108
    %p112 = pneg %p106
    %p113 = scmp.eq.s32.totalorder %s13, 1
    %p114 = por %p112, %p113
    %p115 = scmp.ne.s32.totalorder %s107, %s110
    %p116 = scmp.eq.s32.totalorder %s13, 0
    %p117 = por %p115, %p116
    %p118 = scmp.ne.s32.totalorder %s107, %s110
    %p119 = scmp.eq.s32.totalorder %s18, 1
    %p120 = por %p118, %p119
    %p121 = scmp.ne.s32.totalorder %s110, %s111
    %p122 = scmp.eq.s32.totalorder %s18, 0
    %p123 = por %p121, %p122
    %p124 = scmp.ne.s32.totalorder %s110, %s111
    %p125 = scmp.eq.s32.totalorder %s19, 1
    %p126 = por %p124, %p125
    %p128 = scmp.ne.s32.totalorder %s111, %s127
    %p129 = scmp.eq.s32.totalorder %s19, 0
    %p130 = por %p128, %p129
    %s131 = ssub.s32 %s13, %s20
    %p132 = scmp.eq.s32.totalorder %s131, 0
    %s134 = sadd.s32 %s133, 1
    %s135 = scalar_select %p132, %s133, %s134
    %p138 = pneg %p132
    %p139 = scmp.eq.s32.totalorder %s13, 1
    %p140 = por %p138, %p139
    %p141 = scmp.ne.s32.totalorder %s133, %s136
    %p142 = scmp.eq.s32.totalorder %s13, 0
    %p143 = por %p141, %p142
    %p144 = scmp.ne.s32.totalorder %s133, %s136
    %p145 = scmp.eq.s32.totalorder %s18, 1
    %p146 = por %p144, %p145
    %p147 = scmp.ne.s32.totalorder %s136, %s137
    %p148 = scmp.eq.s32.totalorder %s18, 0
    %p149 = por %p147, %p148
    %p150 = scmp.ne.s32.totalorder %s136, %s137
    %p151 = scmp.eq.s32.totalorder %s19, 1
    %p152 = por %p150, %p151
    %p154 = scmp.ne.s32.totalorder %s137, %s153
    %p155 = scmp.eq.s32.totalorder %s19, 0
    %p156 = por %p154, %p155
    %s157 = ssub.s32 %s13, %s20
    %p158 = scmp.eq.s32.totalorder %s157, 0
    %s160 = sadd.s32 %s159, 1
    %s161 = scalar_select %p158, %s159, %s160
    %p164 = pneg %p158
    %p165 = scmp.eq.s32.totalorder %s13, 1
    %p166 = por %p164, %p165
    %p167 = scmp.ne.s32.totalorder %s159, %s162
    %p168 = scmp.eq.s32.totalorder %s13, 0
    %p169 = por %p167, %p168
    %p170 = scmp.ne.s32.totalorder %s159, %s162
    %p171 = scmp.eq.s32.totalorder %s18, 1
    %p172 = por %p170, %p171
    %p173 = scmp.ne.s32.totalorder %s162, %s163
    %p174 = scmp.eq.s32.totalorder %s18, 0
    %p175 = por %p173, %p174
    %p176 = scmp.ne.s32.totalorder %s162, %s163
    %p177 = scmp.eq.s32.totalorder %s19, 1
    %p178 = por %p176, %p177
    %p180 = scmp.ne.s32.totalorder %s163, %s179
    %p181 = scmp.eq.s32.totalorder %s19, 0
    %p182 = por %p180, %p181
    %s183 = ssub.s32 %s13, %s20
    %p184 = scmp.eq.s32.totalorder %s183, 0
    %s186 = sadd.s32 %s185, 1
    %s187 = scalar_select %p184, %s185, %s186
    %p190 = pneg %p184
    %p191 = scmp.eq.s32.totalorder %s13, 1
    %p192 = por %p190, %p191
    %p193 = scmp.ne.s32.totalorder %s185, %s188
    %p194 = scmp.eq.s32.totalorder %s13, 0
    %p195 = por %p193, %p194
    %p196 = scmp.ne.s32.totalorder %s185, %s188
    %p197 = scmp.eq.s32.totalorder %s18, 1
    %p198 = por %p196, %p197
    %p199 = scmp.ne.s32.totalorder %s188, %s189
    %p200 = scmp.eq.s32.totalorder %s18, 0
    %p201 = por %p199, %p200
    %p202 = scmp.ne.s32.totalorder %s188, %s189
    %p203 = scmp.eq.s32.totalorder %s19, 1
    %p204 = por %p202, %p203
    %p206 = scmp.ne.s32.totalorder %s189, %s205
    %p207 = scmp.eq.s32.totalorder %s19, 0
    %p208 = por %p206, %p207
    %p209 = scmp.le.s32.totalorder 1, %s13
    %p210 = scmp.lt.s32.totalorder %s13, 3
    %p211 = pnand %p209, %p210
    %p212 = pneg %p211
    // Predicated region
    $region9: #{_lambda_.10} parent=5 // pred_check
      _
    $region10: #{_lambda_.10} parent=5 // pred_check_branch
      %214 = sbr.rel (%p211) target = $region12
    $region11: #{_lambda_.10} parent=5 // pred_region
      %s215 = ssub.s32 %s13, 1
      // Predicated region
      $region13: #{_lambda_.10} parent=11 // pred_check
        %p216 = pneg %p34
      $region14: #{_lambda_.10} parent=11 // pred_check_branch
        %218 = sbr.rel (%p216) target = $region16
      $region15: #{_lambda_.10} parent=11 // pred_region
        _
      $region16: #{_lambda_.10} parent=11 // pred_fallthru
        _
      // Predicated region
      $region17: #{_lambda_.10} parent=11 // pred_check
        %p219 = pneg %p55
      $region18: #{_lambda_.10} parent=11 // pred_check_branch
        %221 = sbr.rel (%p219) target = $region20
      $region19: #{_lambda_.10} parent=11 // pred_region
        _
      $region20: #{_lambda_.10} parent=11 // pred_fallthru
        _
      // Predicated region
      $region21: #{_lambda_.10} parent=11 // pred_check
        %p222 = pneg %p76
      $region22: #{_lambda_.10} parent=11 // pred_check_branch
        %224 = sbr.rel (%p222) target = $region24
      $region23: #{_lambda_.10} parent=11 // pred_region
        _
      $region24: #{_lambda_.10} parent=11 // pred_fallthru
        _
      // Predicated region
      $region25: #{_lambda_.10} parent=11 // pred_check
        %p225 = pneg %p97
      $region26: #{_lambda_.10} parent=11 // pred_check_branch
        %227 = sbr.rel (%p225) target = $region28
      $region27: #{_lambda_.10} parent=11 // pred_region
        _
      $region28: #{_lambda_.10} parent=11 // pred_fallthru
        _
    $region12: #{_lambda_.10} parent=5 // pred_fallthru
      _
    %p228 = scmp.lt.s32.totalorder %s13, 2
    // Predicated region
    $region29: #{_lambda_.10} parent=5 // pred_check
      %p229 = pneg %p228
    $region30: #{_lambda_.10} parent=5 // pred_check_branch
      %231 = sbr.rel (%p229) target = $region32
    $region31: #{_lambda_.10} parent=5 // pred_region
      // Predicated region
      $region33: #{_lambda_.10} parent=31 // pred_check
        %p232 = pneg %p117
      $region34: #{_lambda_.10} parent=31 // pred_check_branch
        %234 = sbr.rel (%p232) target = $region36
      $region35: #{_lambda_.10} parent=31 // pred_region
        %p235 = scmp.lt.s32.totalorder %s13, 1
        %s236 = scalar_select %p235, %s13, 1
        %s237 = smul.addr %s236, 2
        %s238 = smul.addr %s237, 4
        %s239 = scalar_lea.vmem %s4, %s238
      $region36: #{_lambda_.10} parent=31 // pred_fallthru
        _
      // Predicated region
      $region37: #{_lambda_.10} parent=31 // pred_check
        %p240 = pneg %p143
      $region38: #{_lambda_.10} parent=31 // pred_check_branch
        %242 = sbr.rel (%p240) target = $region40
      $region39: #{_lambda_.10} parent=31 // pred_region
        %p243 = scmp.lt.s32.totalorder %s13, 1
        %s244 = scalar_select %p243, %s13, 1
        %s245 = smul.addr %s244, 2
        %s246 = smul.addr %s245, 2
        %s247 = scalar_lea.vmem %s5, %s246
      $region40: #{_lambda_.10} parent=31 // pred_fallthru
        _
      // Predicated region
      $region41: #{_lambda_.10} parent=31 // pred_check
        %p248 = pneg %p169
      $region42: #{_lambda_.10} parent=31 // pred_check_branch
        %250 = sbr.rel (%p248) target = $region44
      $region43: #{_lambda_.10} parent=31 // pred_region
        %p251 = scmp.lt.s32.totalorder %s13, 1
        %s252 = scalar_select %p251, %s13, 1
        %s253 = smul.addr %s252, 2
        %s254 = smul.addr %s253, 2
        %s255 = scalar_lea.vmem %s6, %s254
      $region44: #{_lambda_.10} parent=31 // pred_fallthru
        _
    $region32: #{_lambda_.10} parent=5 // pred_fallthru
      _
    %p256 = scmp.le.s32.totalorder 1, %s13
    %p257 = scmp.lt.s32.totalorder %s13, 3
    %p258 = pnand %p256, %p257
    %p259 = pneg %p258
    // Predicated region
    $region45: #{_lambda_.10} parent=5 // pred_check
      _
    $region46: #{_lambda_.10} parent=5 // pred_check_branch
      %261 = sbr.rel (%p258) target = $region48
    $region47: #{_lambda_.10} parent=5 // pred_region
      %s262 = ssub.s32 %s13, 1
      %p263 = pneg %p34
      %p264 = pneg %p31
      %p265 = pneg %p55
      %p266 = pneg %p52
      %p267 = pneg %p76
      %p268 = pneg %p73
      %p269 = pneg %p97
      %p270 = pneg %p94
      %p271 = scmp.lt.s32.totalorder %s18, 1
      %s272 = scalar_select %p271, %s18, 1
      %s273 = smul.addr %s272, 2
      %s274 = smul.addr %s273, 4
      %s275 = scalar_lea.vmem %s4, %s274
      %p276 = pneg %p123
      %p277 = pneg %p120
      %p278 = scmp.lt.s32.totalorder %s18, 1
      %s279 = scalar_select %p278, %s18, 1
      %s280 = smul.addr %s279, 2
      %s281 = smul.addr %s280, 2
      %s282 = scalar_lea.vmem %s5, %s281
      %p283 = pneg %p149
      %p284 = pneg %p146
      %p285 = scmp.lt.s32.totalorder %s18, 1
      %s286 = scalar_select %p285, %s18, 1
      %s287 = smul.addr %s286, 2
      %s288 = smul.addr %s287, 2
      %s289 = scalar_lea.vmem %s6, %s288
      %p290 = pneg %p175
      %p291 = pneg %p172
      %p292 = pneg %p201
      %p293 = pneg %p198
      %p294 = scmp.lt.s32.totalorder %s18, 1
      %s295 = scalar_select %p294, %s18, 1
      %s296 = smul.addr %s295, 2
      %s297 = smul.addr %s296, 4
      %s298 = scalar_lea.vmem %s7, %s297
      %p299 = scmp.lt.s32.totalorder %s18, 1
      %s300 = scalar_select %p299, %s18, 1
      %s301 = smul.addr %s300, 2
      %s302 = smul.addr %s301, 4
      %s303 = scalar_lea.vmem %s4, %s302
      %p304 = scmp.lt.s32.totalorder %s18, 1
      %s305 = scalar_select %p304, %s18, 1
      %s306 = smul.addr %s305, 2
      %s307 = smul.addr %s306, 2
      %s308 = scalar_lea.vmem %s5, %s307
      %p309 = scmp.lt.s32.totalorder %s18, 1
      %s310 = scalar_select %p309, %s18, 1
      %s311 = smul.addr %s310, 2
      %s312 = smul.addr %s311, 2
      %s313 = scalar_lea.vmem %s6, %s312
      %p314 = scmp.lt.s32.totalorder %s18, 1
      %s315 = scalar_select %p314, %s18, 1
      %s316 = smul.addr %s315, 2
      %s317 = smul.addr %s316, 4
      %s318 = scalar_lea.vmem %s7, %s317
      %v320 = vld [vmem:[%s2] sm:$0xf]
      %v321 = vld [vmem:[%s0] sm:$0xff]
      %v322 = vld [vmem:[%s0 + $0x8] sm:$0xff]
      %v323 = vld [vmem:[%s1] sm:$0xff]
      %v324 = vld [vmem:[%s1 + $0x8] sm:$0xff]
      %v325 = vld [vmem:[%s303] sm:$0xff]
      %v326 = vunpack.c.l.bf16 %v325
      %v327 = vunpack.c.h.bf16 %v325
      %329 = vset.pattern.permute.xlu0 0
      %330 = vperm.xlu0 %329, %v321
      %v331 = vpop.permute.xlu0 %330
      %v333 = vmul.f32 %v326, %v331
      %v334 = vmul.f32 %v327, %v331
      %336 = vset.pattern.permute.xlu0 0
      %337 = vperm.xlu0 %336, %v323
      %v338 = vpop.permute.xlu0 %337
      %v340 = vadd.f32 %v333, %v338
      %v341 = vadd.f32 %v334, %v338
      %v342 = vmax.f32 %v340, 0.0
      %v343 = vmax.f32 %v341, 0.0
      %v344 = vpack.c.bf16 %v342, %v342
      %v345 = vpack.c.bf16 %v343, %v343
      %v346 = vld [vmem:[%s308] sm:$0xf]
      %v347 = vunpack.c.l.bf16 %v346
      %349 = vset.pattern.permute.xlu0 0
      %350 = vperm.xlu0 %349, %v322
      %v351 = vpop.permute.xlu0 %350
      %v353 = vunpack.c.l.s4 839922192
      %v354 = vunpack.c.0.s8 %v353
      %v355 = vlaneseq
      %v356 = vshrl.u32 %v355, 7
      %v357 = vsub.s32 %v354, %v356
      %v358 = vrot.slane %v351, %v357
      %v360 = vmul.f32 %v347, %v358
      %362 = vset.pattern.permute.xlu0 0
      %363 = vperm.xlu0 %362, %v324
      %v364 = vpop.permute.xlu0 %363
      %v366 = vunpack.c.l.s4 839922192
      %v367 = vunpack.c.0.s8 %v366
      %v368 = vlaneseq
      %v369 = vshrl.u32 %v368, 7
      %v370 = vsub.s32 %v367, %v369
      %v371 = vrot.slane %v364, %v370
      %v373 = vadd.f32 %v360, %v371
      %v374 = vmax.f32 %v373, 0.0
      %v376 = vcombine.high %v374, %v374
      %v378 = vpack.c.bf16 %v374, %v374
      %v379 = vpack.c.bf16 %v376, %v376
      %v381 = vunpack.c.l.b16 %v320
      %v382 = vpack.c.b16 %v381, %v381
      %383 = vrot.lane.b32.xlu0 %v382, 120
      %v384 = vpop.permute.xlu0 %383
      %vm385 = vcmask 31744
      %v387 = vsel %vm385, %v384, 0
      %vm389 = vcmask 1041408
      %v391 = vsel %vm389, %v378, 0
      %v394 = vsel %vm389, %v379, 0
      %396 = vmatprep.subr.bf16.mxu0 %v394
      %397 = vmatpush1.bf16.msra.mxu0 %v391
      %398 = vmatprep.subr.bf16.mxu0 0
      %399 = vmatpush1.bf16.msra.mxu0 0
      %400 = vmatprep.subr.bf16.mxu0 0
      %401 = vmatpush1.bf16.msra.mxu0 0
      %402 = vmatprep.subr.bf16.mxu0 0
      %403 = vmatpush1.bf16.msra.mxu0 0
      %404 = vmatprep.subr.bf16.mxu0 0
      %405 = vmatpush1.bf16.msra.mxu0 0
      %406 = vmatprep.subr.bf16.mxu0 0
      %407 = vmatpush1.bf16.msra.mxu0 0
      %408 = vmatprep.subr.bf16.mxu0 0
      %409 = vmatpush1.bf16.msra.mxu0 0
      %410 = vmatprep.subr.bf16.mxu0 0
      %411 = vmatpush1.bf16.msra.mxu0 0
      %412 = vmatprep.subr.bf16.mxu0 0
      %413 = vmatpush1.bf16.msra.mxu0 0
      %414 = vmatprep.subr.bf16.mxu0 0
      %415 = vmatpush1.bf16.msra.mxu0 0
      %416 = vmatprep.subr.bf16.mxu0 0
      %417 = vmatpush1.bf16.msra.mxu0 0
      %418 = vmatprep.subr.bf16.mxu0 0
      %419 = vmatpush1.bf16.msra.mxu0 0
      %420 = vmatprep.subr.bf16.mxu0 0
      %421 = vmatpush1.bf16.msra.mxu0 0
      %422 = vmatprep.subr.bf16.mxu0 0
      %423 = vmatpush1.bf16.msra.mxu0 0
      %424 = vmatprep.subr.bf16.mxu0 0
      %425 = vmatpush1.bf16.msra.mxu0 0
      %426 = vmatprep.subr.bf16.mxu0 0
      %427 = vmatpush1.bf16.msra.mxu0 0
      %428 = vmatprep.mubr.bf16.mxu0 0
      %429 = vmatmul.mubr.bf16.gmra.mrb[0].mxu0 %v387
      %v430 = vpop.f32.mrb[0].mxu0
      %v431 = vadd.f32 0.0, %v430
      %v432 = vpop.f32.mrb[0].mxu0
      %v433 = vadd.f32 0.0, %v432
      %v434 = vpop.f32.mrb[0].mxu0
      %v435 = vpop.f32.mrb[0].mxu0
      %436 = vdwg.mxu0
      %vm437 = vcmask 64512
      %v439 = vsel %vm437, %v320, 0
      %vm441 = vcmask 1043456
      %v443 = vsel %vm441, %v344, 0
      %v446 = vsel %vm441, %v345, 0
      %448 = vmatprep.subr.bf16.mxu0 %v446
      %449 = vmatpush1.bf16.msra.mxu0 %v443
      %450 = vmatprep.subr.bf16.mxu0 0
      %451 = vmatpush1.bf16.msra.mxu0 0
      %452 = vmatprep.subr.bf16.mxu0 0
      %453 = vmatpush1.bf16.msra.mxu0 0
      %454 = vmatprep.subr.bf16.mxu0 0
      %455 = vmatpush1.bf16.msra.mxu0 0
      %456 = vmatprep.subr.bf16.mxu0 0
      %457 = vmatpush1.bf16.msra.mxu0 0
      %458 = vmatprep.subr.bf16.mxu0 0
      %459 = vmatpush1.bf16.msra.mxu0 0
      %460 = vmatprep.subr.bf16.mxu0 0
      %461 = vmatpush1.bf16.msra.mxu0 0
      %462 = vmatprep.subr.bf16.mxu0 0
      %463 = vmatpush1.bf16.msra.mxu0 0
      %464 = vmatprep.subr.bf16.mxu0 0
      %465 = vmatpush1.bf16.msra.mxu0 0
      %466 = vmatprep.subr.bf16.mxu0 0
      %467 = vmatpush1.bf16.msra.mxu0 0
      %468 = vmatprep.subr.bf16.mxu0 0
      %469 = vmatpush1.bf16.msra.mxu0 0
      %470 = vmatprep.subr.bf16.mxu0 0
      %471 = vmatpush1.bf16.msra.mxu0 0
      %472 = vmatprep.subr.bf16.mxu0 0
      %473 = vmatpush1.bf16.msra.mxu0 0
      %474 = vmatprep.subr.bf16.mxu0 0
      %475 = vmatpush1.bf16.msra.mxu0 0
      %476 = vmatprep.subr.bf16.mxu0 0
      %477 = vmatpush1.bf16.msra.mxu0 0
      %478 = vmatprep.subr.bf16.mxu0 0
      %479 = vmatpush1.bf16.msra.mxu0 0
      %480 = vmatprep.mubr.bf16.mxu0 0
      %481 = vmatmul.mubr.bf16.gmra.mrb[0].mxu0 %v439
      %v482 = vpop.f32.mrb[0].mxu0
      %v483 = vadd.f32 %v431, %v482
      %v484 = vpop.f32.mrb[0].mxu0
      %v485 = vadd.f32 %v433, %v484
      %v486 = vpop.f32.mrb[0].mxu0
      %v487 = vpop.f32.mrb[0].mxu0
      %488 = vdwg.mxu0
      %v489 = vld [vmem:[%s313] sm:$0xf]
      %v490 = vunpack.c.l.bf16 %v489
      %v492 = vunpack.c.l.s4 1985246804
      %v493 = vunpack.c.0.s8 %v492
      %v494 = vlaneseq
      %v495 = vshrl.u32 %v494, 7
      %v496 = vsub.s32 %v493, %v495
      %v497 = vrot.slane %v351, %v496
      %v499 = vmul.f32 %v490, %v497
      %v501 = vunpack.c.l.s4 1985246804
      %v502 = vunpack.c.0.s8 %v501
      %v503 = vlaneseq
      %v504 = vshrl.u32 %v503, 7
      %v505 = vsub.s32 %v502, %v504
      %v506 = vrot.slane %v364, %v505
      %v508 = vadd.f32 %v499, %v506
      %v509 = vmax.f32 %v508, 0.0
      %v511 = vcombine.high %v509, %v509
      %v513 = vpack.c.bf16 %v509, %v509
      %v514 = vpack.c.bf16 %v511, %v511
      %515 = vrot.lane.b32.xlu0 %v382, 116
      %v516 = vpop.permute.xlu0 %515
      %v518 = vsel %vm385, %v516, 0
      %v521 = vsel %vm389, %v513, 0
      %v524 = vsel %vm389, %v514, 0
      %526 = vmatprep.subr.bf16.mxu0 %v524
      %527 = vmatpush1.bf16.msra.mxu0 %v521
      %528 = vmatprep.subr.bf16.mxu0 0
      %529 = vmatpush1.bf16.msra.mxu0 0
      %530 = vmatprep.subr.bf16.mxu0 0
      %531 = vmatpush1.bf16.msra.mxu0 0
      %532 = vmatprep.subr.bf16.mxu0 0
      %533 = vmatpush1.bf16.msra.mxu0 0
      %534 = vmatprep.subr.bf16.mxu0 0
      %535 = vmatpush1.bf16.msra.mxu0 0
      %536 = vmatprep.subr.bf16.mxu0 0
      %537 = vmatpush1.bf16.msra.mxu0 0
      %538 = vmatprep.subr.bf16.mxu0 0
      %539 = vmatpush1.bf16.msra.mxu0 0
      %540 = vmatprep.subr.bf16.mxu0 0
      %541 = vmatpush1.bf16.msra.mxu0 0
      %542 = vmatprep.subr.bf16.mxu0 0
      %543 = vmatpush1.bf16.msra.mxu0 0
      %544 = vmatprep.subr.bf16.mxu0 0
      %545 = vmatpush1.bf16.msra.mxu0 0
      %546 = vmatprep.subr.bf16.mxu0 0
      %547 = vmatpush1.bf16.msra.mxu0 0
      %548 = vmatprep.subr.bf16.mxu0 0
      %549 = vmatpush1.bf16.msra.mxu0 0
      %550 = vmatprep.subr.bf16.mxu0 0
      %551 = vmatpush1.bf16.msra.mxu0 0
      %552 = vmatprep.subr.bf16.mxu0 0
      %553 = vmatpush1.bf16.msra.mxu0 0
      %554 = vmatprep.subr.bf16.mxu0 0
      %555 = vmatpush1.bf16.msra.mxu0 0
      %556 = vmatprep.subr.bf16.mxu0 0
      %557 = vmatpush1.bf16.msra.mxu0 0
      %558 = vmatprep.mubr.bf16.mxu0 0
      %559 = vmatmul.mubr.bf16.gmra.mrb[0].mxu0 %v518
      %v560 = vpop.f32.mrb[0].mxu0
      %v561 = vadd.f32 0.0, %v560
      %v562 = vpop.f32.mrb[0].mxu0
      %v563 = vadd.f32 0.0, %v562
      %v564 = vpop.f32.mrb[0].mxu0
      %v565 = vpop.f32.mrb[0].mxu0
      %566 = vdwg.mxu0
      %v567 = vadd.f32 %v483, %v561
      %v568 = vadd.f32 %v485, %v563
      %v569 = vld [vmem:[%s3] sm:$0xff]
      %571 = vset.pattern.permute.xlu0 0
      %572 = vperm.xlu0 %571, %v569
      %v573 = vpop.permute.xlu0 %572
      %v575 = vadd.f32 %v567, %v573
      %v576 = vadd.f32 %v568, %v573
      %v577 = vpack.c.bf16 %v575, %v575
      %v578 = vpack.c.bf16 %v576, %v576
      %v581 = vunpack.c.l.b16 %v577
      %v582 = vunpack.c.l.b16 %v578
      %v583 = vpack.c.b16 %v582, %v581
      %585 = vst [vmem:[%s318] sm:$0xff] %v583
      %p586 = scmp.lt.s32.totalorder %s18, 1
      %s587 = scalar_select %p586, %s18, 1
      %s588 = smul.addr %s587, 2
      %s589 = smul.addr %s588, 4
      %s590 = scalar_lea.vmem %s7, %s589
      // Predicated region
      $region49: #{_lambda_.10} parent=47 // pred_check
        %p591 = pneg %p198
      $region50: #{_lambda_.10} parent=47 // pred_check_branch
        %593 = sbr.rel (%p591) target = $region52
      $region51: #{_lambda_.10} parent=47 // pred_region
        _
      $region52: #{_lambda_.10} parent=47 // pred_fallthru
        _
    $region48: #{_lambda_.10} parent=5 // pred_fallthru
      _
    %p594 = scmp.le.s32.totalorder 2, %s13
    // Predicated region
    $region53: #{_lambda_.10} parent=5 // pred_check
      %p595 = pneg %p594
    $region54: #{_lambda_.10} parent=5 // pred_check_branch
      %597 = sbr.rel (%p595) target = $region56
    $region55: #{_lambda_.10} parent=5 // pred_region
      %s598 = ssub.s32 %s13, 2
      // Predicated region
      $region57: #{_lambda_.10} parent=55 // pred_check
        %p599 = pneg %p204
      $region58: #{_lambda_.10} parent=55 // pred_check_branch
        %601 = sbr.rel (%p599) target = $region60
      $region59: #{_lambda_.10} parent=55 // pred_region
        %p602 = scmp.lt.s32.totalorder %s19, 1
        %s603 = scalar_select %p602, %s19, 1
        %s604 = smul.addr %s603, 2
        %s605 = smul.addr %s604, 4
        %s606 = scalar_lea.vmem %s7, %s605
      $region60: #{_lambda_.10} parent=55 // pred_fallthru
        _
    $region56: #{_lambda_.10} parent=5 // pred_fallthru
      _
  $region6: #{_lambda_.10} parent=0 // loop_footer
    %s17 = sadd.s32 1, %s13
  $region7: #{_lambda_.10} parent=0 // loop_footer_branch
    %12 = sbr.rel target = $region3
  $region8: #{_lambda_.10} parent=0 // loop_exit
    _

// kernel: _lambda_.13
$region0: #{_lambda_.13}
  #allocation0 [shape = 'u32[]', space=smem, size = 0x4, offset = 0x4, fixed_abs, tag = 'smem constant byte address 0x4 - core index']
  #allocation1 [shape = 'u32[144,128]{1,0:T(1,128)}', space=vmem, size = 0x12000, scoped, tag = 'internal scratch']
  %s0 = inlined_call_operand.vmem [shape: f32[16,1], index: 0, kind: input, shape index: {}]
  %s1 = inlined_call_operand.vmem [shape: f32[16,1], index: 1, kind: input, shape index: {}]
  %s2 = inlined_call_operand.vmem [shape: bf16[8,16], index: 2, kind: input, shape index: {}]
  %s3 = inlined_call_operand.vmem [shape: f32[8,1], index: 3, kind: input, shape index: {}]
  %s4 = inlined_call_operand.vmem [shape: bf16[2,8,256], index: 4, kind: input, shape index: {}]
  %s5 = inlined_call_operand.vmem [shape: bf16[2,4,256], index: 5, kind: input, shape index: {}]
  %s6 = inlined_call_operand.vmem [shape: bf16[2,4,256], index: 6, kind: input, shape index: {}]
  %s7 = inlined_call_operand.vmem [shape: f32[2,8,256], index: 7, kind: output, shape index: {}]
  %s8 = sld [smem:[#allocation0]]
  $region61: #{_lambda_.13} parent=0
    _
  %s10 = ssub.s32 1, %s8
  %s11 = scalar_select 0, %s10, %s8
  loop: start=0, step=1, limit=4
  $region2: #{_lambda_.13} parent=0 // loop_pre_header
    _
  $region3: #{_lambda_.13} parent=0 // loop_header
    %s13 = sphi 0, %s17
    %p14 = scmp.ge.s32.totalorder %s13, 4
    %s21 = sphi 0, %s21
    %s23 = sphi 0, %s21
    %s24 = sphi 0, %s23
    %s38 = sphi 0, %s24
    %s42 = sphi 0, %s42
    %s44 = sphi 0, %s42
    %s45 = sphi 0, %s44
    %s59 = sphi 0, %s45
    %s63 = sphi 0, %s63
    %s65 = sphi 0, %s63
    %s66 = sphi 0, %s65
    %s80 = sphi 0, %s66
    %s84 = sphi 0, %s84
    %s86 = sphi 0, %s84
    %s87 = sphi 0, %s86
    %s101 = sphi 0, %s87
    %s107 = sphi 0, %s109
    %s110 = sphi 0, %s107
    %s111 = sphi 0, %s110
    %s127 = sphi 0, %s111
    %s133 = sphi 0, %s135
    %s136 = sphi 0, %s133
    %s137 = sphi 0, %s136
    %s153 = sphi 0, %s137
    %s159 = sphi 0, %s161
    %s162 = sphi 0, %s159
    %s163 = sphi 0, %s162
    %s179 = sphi 0, %s163
    %s185 = sphi 0, %s187
    %s188 = sphi 0, %s185
    %s189 = sphi 0, %s188
    %s205 = sphi 0, %s189
  $region4: #{_lambda_.13} parent=0 // loop_header_branch
    %16 = sbr.rel (%p14) target = $region8
  $region5: #{_lambda_.13} parent=0 // loop_body
    %s18 = ssub.s32 %s13, 1
    %s19 = ssub.s32 %s13, 2
    %s20 = sadd.s32 %s13, 1
    %s22 = sadd.s32 %s21, 1
    %p25 = scmp.eq.s32.totalorder %s13, 1
    %p26 = scmp.ne.s32.totalorder %s21, %s23
    %p27 = scmp.eq.s32.totalorder %s13, 0
    %p28 = por %p26, %p27
    %p29 = scmp.ne.s32.totalorder %s21, %s23
    %p30 = scmp.eq.s32.totalorder %s18, 1
    %p31 = por %p29, %p30
    %p32 = scmp.ne.s32.totalorder %s23, %s24
    %p33 = scmp.eq.s32.totalorder %s18, 0
    %p34 = por %p32, %p33
    %p35 = scmp.ne.s32.totalorder %s23, %s24
    %p36 = scmp.eq.s32.totalorder %s19, 1
    %p37 = por %p35, %p36
    %p39 = scmp.ne.s32.totalorder %s24, %s38
    %p40 = scmp.eq.s32.totalorder %s19, 0
    %p41 = por %p39, %p40
    %s43 = sadd.s32 %s42, 1
    %p46 = scmp.eq.s32.totalorder %s13, 1
    %p47 = scmp.ne.s32.totalorder %s42, %s44
    %p48 = scmp.eq.s32.totalorder %s13, 0
    %p49 = por %p47, %p48
    %p50 = scmp.ne.s32.totalorder %s42, %s44
    %p51 = scmp.eq.s32.totalorder %s18, 1
    %p52 = por %p50, %p51
    %p53 = scmp.ne.s32.totalorder %s44, %s45
    %p54 = scmp.eq.s32.totalorder %s18, 0
    %p55 = por %p53, %p54
    %p56 = scmp.ne.s32.totalorder %s44, %s45
    %p57 = scmp.eq.s32.totalorder %s19, 1
    %p58 = por %p56, %p57
    %p60 = scmp.ne.s32.totalorder %s45, %s59
    %p61 = scmp.eq.s32.totalorder %s19, 0
    %p62 = por %p60, %p61
    %s64 = sadd.s32 %s63, 1
    %p67 = scmp.eq.s32.totalorder %s13, 1
    %p68 = scmp.ne.s32.totalorder %s63, %s65
    %p69 = scmp.eq.s32.totalorder %s13, 0
    %p70 = por %p68, %p69
    %p71 = scmp.ne.s32.totalorder %s63, %s65
    %p72 = scmp.eq.s32.totalorder %s18, 1
    %p73 = por %p71, %p72
    %p74 = scmp.ne.s32.totalorder %s65, %s66
    %p75 = scmp.eq.s32.totalorder %s18, 0
    %p76 = por %p74, %p75
    %p77 = scmp.ne.s32.totalorder %s65, %s66
    %p78 = scmp.eq.s32.totalorder %s19, 1
    %p79 = por %p77, %p78
    %p81 = scmp.ne.s32.totalorder %s66, %s80
    %p82 = scmp.eq.s32.totalorder %s19, 0
    %p83 = por %p81, %p82
    %s85 = sadd.s32 %s84, 1
    %p88 = scmp.eq.s32.totalorder %s13, 1
    %p89 = scmp.ne.s32.totalorder %s84, %s86
    %p90 = scmp.eq.s32.totalorder %s13, 0
    %p91 = por %p89, %p90
    %p92 = scmp.ne.s32.totalorder %s84, %s86
    %p93 = scmp.eq.s32.totalorder %s18, 1
    %p94 = por %p92, %p93
    %p95 = scmp.ne.s32.totalorder %s86, %s87
    %p96 = scmp.eq.s32.totalorder %s18, 0
    %p97 = por %p95, %p96
    %p98 = scmp.ne.s32.totalorder %s86, %s87
    %p99 = scmp.eq.s32.totalorder %s19, 1
    %p100 = por %p98, %p99
    %p102 = scmp.ne.s32.totalorder %s87, %s101
    %p103 = scmp.eq.s32.totalorder %s19, 0
    %p104 = por %p102, %p103
    %s105 = ssub.s32 %s13, %s20
    %p106 = scmp.eq.s32.totalorder %s105, 0
    %s108 = sadd.s32 %s107, 1
    %s109 = scalar_select %p106, %s107, %s108
    %p112 = pneg %p106
    %p113 = scmp.eq.s32.totalorder %s13, 1
    %p114 = por %p112, %p113
    %p115 = scmp.ne.s32.totalorder %s107, %s110
    %p116 = scmp.eq.s32.totalorder %s13, 0
    %p117 = por %p115, %p116
    %p118 = scmp.ne.s32.totalorder %s107, %s110
    %p119 = scmp.eq.s32.totalorder %s18, 1
    %p120 = por %p118, %p119
    %p121 = scmp.ne.s32.totalorder %s110, %s111
    %p122 = scmp.eq.s32.totalorder %s18, 0
    %p123 = por %p121, %p122
    %p124 = scmp.ne.s32.totalorder %s110, %s111
    %p125 = scmp.eq.s32.totalorder %s19, 1
    %p126 = por %p124, %p125
    %p128 = scmp.ne.s32.totalorder %s111, %s127
    %p129 = scmp.eq.s32.totalorder %s19, 0
    %p130 = por %p128, %p129
    %s131 = ssub.s32 %s13, %s20
    %p132 = scmp.eq.s32.totalorder %s131, 0
    %s134 = sadd.s32 %s133, 1
    %s135 = scalar_select %p132, %s133, %s134
    %p138 = pneg %p132
    %p139 = scmp.eq.s32.totalorder %s13, 1
    %p140 = por %p138, %p139
    %p141 = scmp.ne.s32.totalorder %s133, %s136
    %p142 = scmp.eq.s32.totalorder %s13, 0
    %p143 = por %p141, %p142
    %p144 = scmp.ne.s32.totalorder %s133, %s136
    %p145 = scmp.eq.s32.totalorder %s18, 1
    %p146 = por %p144, %p145
    %p147 = scmp.ne.s32.totalorder %s136, %s137
    %p148 = scmp.eq.s32.totalorder %s18, 0
    %p149 = por %p147, %p148
    %p150 = scmp.ne.s32.totalorder %s136, %s137
    %p151 = scmp.eq.s32.totalorder %s19, 1
    %p152 = por %p150, %p151
    %p154 = scmp.ne.s32.totalorder %s137, %s153
    %p155 = scmp.eq.s32.totalorder %s19, 0
    %p156 = por %p154, %p155
    %s157 = ssub.s32 %s13, %s20
    %p158 = scmp.eq.s32.totalorder %s157, 0
    %s160 = sadd.s32 %s159, 1
    %s161 = scalar_select %p158, %s159, %s160
    %p164 = pneg %p158
    %p165 = scmp.eq.s32.totalorder %s13, 1
    %p166 = por %p164, %p165
    %p167 = scmp.ne.s32.totalorder %s159, %s162
    %p168 = scmp.eq.s32.totalorder %s13, 0
    %p169 = por %p167, %p168
    %p170 = scmp.ne.s32.totalorder %s159, %s162
    %p171 = scmp.eq.s32.totalorder %s18, 1
    %p172 = por %p170, %p171
    %p173 = scmp.ne.s32.totalorder %s162, %s163
    %p174 = scmp.eq.s32.totalorder %s18, 0
    %p175 = por %p173, %p174
    %p176 = scmp.ne.s32.totalorder %s162, %s163
    %p177 = scmp.eq.s32.totalorder %s19, 1
    %p178 = por %p176, %p177
    %p180 = scmp.ne.s32.totalorder %s163, %s179
    %p181 = scmp.eq.s32.totalorder %s19, 0
    %p182 = por %p180, %p181
    %s183 = ssub.s32 %s13, %s20
    %p184 = scmp.eq.s32.totalorder %s183, 0
    %s186 = sadd.s32 %s185, 1
    %s187 = scalar_select %p184, %s185, %s186
    %p190 = pneg %p184
    %p191 = scmp.eq.s32.totalorder %s13, 1
    %p192 = por %p190, %p191
    %p193 = scmp.ne.s32.totalorder %s185, %s188
    %p194 = scmp.eq.s32.totalorder %s13, 0
    %p195 = por %p193, %p194
    %p196 = scmp.ne.s32.totalorder %s185, %s188
    %p197 = scmp.eq.s32.totalorder %s18, 1
    %p198 = por %p196, %p197
    %p199 = scmp.ne.s32.totalorder %s188, %s189
    %p200 = scmp.eq.s32.totalorder %s18, 0
    %p201 = por %p199, %p200
    %p202 = scmp.ne.s32.totalorder %s188, %s189
    %p203 = scmp.eq.s32.totalorder %s19, 1
    %p204 = por %p202, %p203
    %p206 = scmp.ne.s32.totalorder %s189, %s205
    %p207 = scmp.eq.s32.totalorder %s19, 0
    %p208 = por %p206, %p207
    %p209 = scmp.le.s32.totalorder 1, %s13
    %p210 = scmp.lt.s32.totalorder %s13, 3
    %p211 = pnand %p209, %p210
    %p212 = pneg %p211
    // Predicated region
    $region9: #{_lambda_.13} parent=5 // pred_check
      _
    $region10: #{_lambda_.13} parent=5 // pred_check_branch
      %214 = sbr.rel (%p211) target = $region12
    $region11: #{_lambda_.13} parent=5 // pred_region
      %s215 = ssub.s32 %s13, 1
      // Predicated region
      $region13: #{_lambda_.13} parent=11 // pred_check
        %p216 = pneg %p34
      $region14: #{_lambda_.13} parent=11 // pred_check_branch
        %218 = sbr.rel (%p216) target = $region16
      $region15: #{_lambda_.13} parent=11 // pred_region
        _
      $region16: #{_lambda_.13} parent=11 // pred_fallthru
        _
      // Predicated region
      $region17: #{_lambda_.13} parent=11 // pred_check
        %p219 = pneg %p55
      $region18: #{_lambda_.13} parent=11 // pred_check_branch
        %221 = sbr.rel (%p219) target = $region20
      $region19: #{_lambda_.13} parent=11 // pred_region
        _
      $region20: #{_lambda_.13} parent=11 // pred_fallthru
        _
      // Predicated region
      $region21: #{_lambda_.13} parent=11 // pred_check
        %p222 = pneg %p76
      $region22: #{_lambda_.13} parent=11 // pred_check_branch
        %224 = sbr.rel (%p222) target = $region24
      $region23: #{_lambda_.13} parent=11 // pred_region
        _
      $region24: #{_lambda_.13} parent=11 // pred_fallthru
        _
      // Predicated region
      $region25: #{_lambda_.13} parent=11 // pred_check
        %p225 = pneg %p97
      $region26: #{_lambda_.13} parent=11 // pred_check_branch
        %227 = sbr.rel (%p225) target = $region28
      $region27: #{_lambda_.13} parent=11 // pred_region
        _
      $region28: #{_lambda_.13} parent=11 // pred_fallthru
        _
    $region12: #{_lambda_.13} parent=5 // pred_fallthru
      _
    %p228 = scmp.lt.s32.totalorder %s13, 2
    // Predicated region
    $region29: #{_lambda_.13} parent=5 // pred_check
      %p229 = pneg %p228
    $region30: #{_lambda_.13} parent=5 // pred_check_branch
      %231 = sbr.rel (%p229) target = $region32
    $region31: #{_lambda_.13} parent=5 // pred_region
      // Predicated region
      $region33: #{_lambda_.13} parent=31 // pred_check
        %p232 = pneg %p117
      $region34: #{_lambda_.13} parent=31 // pred_check_branch
        %234 = sbr.rel (%p232) target = $region36
      $region35: #{_lambda_.13} parent=31 // pred_region
        %p235 = scmp.lt.s32.totalorder %s13, 1
        %s236 = scalar_select %p235, %s13, 1
        %s237 = smul.addr %s236, 2
        %s238 = smul.addr %s237, 4
        %s239 = scalar_lea.vmem %s4, %s238
      $region36: #{_lambda_.13} parent=31 // pred_fallthru
        _
      // Predicated region
      $region37: #{_lambda_.13} parent=31 // pred_check
        %p240 = pneg %p143
      $region38: #{_lambda_.13} parent=31 // pred_check_branch
        %242 = sbr.rel (%p240) target = $region40
      $region39: #{_lambda_.13} parent=31 // pred_region
        %p243 = scmp.lt.s32.totalorder %s13, 1
        %s244 = scalar_select %p243, %s13, 1
        %s245 = smul.addr %s244, 2
        %s246 = smul.addr %s245, 2
        %s247 = scalar_lea.vmem %s5, %s246
      $region40: #{_lambda_.13} parent=31 // pred_fallthru
        _
      // Predicated region
      $region41: #{_lambda_.13} parent=31 // pred_check
        %p248 = pneg %p169
      $region42: #{_lambda_.13} parent=31 // pred_check_branch
        %250 = sbr.rel (%p248) target = $region44
      $region43: #{_lambda_.13} parent=31 // pred_region
        %p251 = scmp.lt.s32.totalorder %s13, 1
        %s252 = scalar_select %p251, %s13, 1
        %s253 = smul.addr %s252, 2
        %s254 = smul.addr %s253, 2
        %s255 = scalar_lea.vmem %s6, %s254
      $region44: #{_lambda_.13} parent=31 // pred_fallthru
        _
    $region32: #{_lambda_.13} parent=5 // pred_fallthru
      _
    %p256 = scmp.le.s32.totalorder 1, %s13
    %p257 = scmp.lt.s32.totalorder %s13, 3
    %p258 = pnand %p256, %p257
    %p259 = pneg %p258
    // Predicated region
    $region45: #{_lambda_.13} parent=5 // pred_check
      _
    $region46: #{_lambda_.13} parent=5 // pred_check_branch
      %261 = sbr.rel (%p258) target = $region48
    $region47: #{_lambda_.13} parent=5 // pred_region
      %s262 = ssub.s32 %s13, 1
      %p263 = pneg %p34
      %p264 = pneg %p31
      %p265 = pneg %p55
      %p266 = pneg %p52
      %p267 = pneg %p76
      %p268 = pneg %p73
      %p269 = pneg %p97
      %p270 = pneg %p94
      %p271 = scmp.lt.s32.totalorder %s18, 1
      %s272 = scalar_select %p271, %s18, 1
      %s273 = smul.addr %s272, 2
      %s274 = smul.addr %s273, 4
      %s275 = scalar_lea.vmem %s4, %s274
      %p276 = pneg %p123
      %p277 = pneg %p120
      %p278 = scmp.lt.s32.totalorder %s18, 1
      %s279 = scalar_select %p278, %s18, 1
      %s280 = smul.addr %s279, 2
      %s281 = smul.addr %s280, 2
      %s282 = scalar_lea.vmem %s5, %s281
      %p283 = pneg %p149
      %p284 = pneg %p146
      %p285 = scmp.lt.s32.totalorder %s18, 1
      %s286 = scalar_select %p285, %s18, 1
      %s287 = smul.addr %s286, 2
      %s288 = smul.addr %s287, 2
      %s289 = scalar_lea.vmem %s6, %s288
      %p290 = pneg %p175
      %p291 = pneg %p172
      %p292 = pneg %p201
      %p293 = pneg %p198
      %p294 = scmp.lt.s32.totalorder %s18, 1
      %s295 = scalar_select %p294, %s18, 1
      %s296 = smul.addr %s295, 2
      %s297 = smul.addr %s296, 8
      %s298 = scalar_lea.vmem %s7, %s297
      %p299 = scmp.lt.s32.totalorder %s18, 1
      %s300 = scalar_select %p299, %s18, 1
      %s301 = smul.addr %s300, 2
      %s302 = smul.addr %s301, 4
      %s303 = scalar_lea.vmem %s4, %s302
      %p304 = scmp.lt.s32.totalorder %s18, 1
      %s305 = scalar_select %p304, %s18, 1
      %s306 = smul.addr %s305, 2
      %s307 = smul.addr %s306, 2
      %s308 = scalar_lea.vmem %s5, %s307
      %p309 = scmp.lt.s32.totalorder %s18, 1
      %s310 = scalar_select %p309, %s18, 1
      %s311 = smul.addr %s310, 2
      %s312 = smul.addr %s311, 2
      %s313 = scalar_lea.vmem %s6, %s312
      %p314 = scmp.lt.s32.totalorder %s18, 1
      %s315 = scalar_select %p314, %s18, 1
      %s316 = smul.addr %s315, 2
      %s317 = smul.addr %s316, 8
      %s318 = scalar_lea.vmem %s7, %s317
      %v320 = vld [vmem:[%s2] sm:$0xf]
      %v321 = vld [vmem:[%s0] sm:$0xff]
      %v322 = vld [vmem:[%s0 + $0x8] sm:$0xff]
      %v323 = vld [vmem:[%s1] sm:$0xff]
      %v324 = vld [vmem:[%s1 + $0x8] sm:$0xff]
      %v325 = vld [vmem:[%s303] sm:$0xff]
      %v326 = vunpack.c.l.bf16 %v325
      %v327 = vunpack.c.h.bf16 %v325
      %329 = vset.pattern.permute.xlu0 0
      %330 = vperm.xlu0 %329, %v321
      %v331 = vpop.permute.xlu0 %330
      %v333 = vmul.f32 %v326, %v331
      %v334 = vmul.f32 %v327, %v331
      %336 = vset.pattern.permute.xlu0 0
      %337 = vperm.xlu0 %336, %v323
      %v338 = vpop.permute.xlu0 %337
      %v340 = vadd.f32 %v333, %v338
      %v341 = vadd.f32 %v334, %v338
      %v342 = vmax.f32 %v340, 0.0
      %v343 = vmax.f32 %v341, 0.0
      %v344 = vpack.c.bf16 %v342, %v342
      %v345 = vpack.c.bf16 %v343, %v343
      %v346 = vld [vmem:[%s308] sm:$0xf]
      %v347 = vunpack.c.l.bf16 %v346
      %349 = vset.pattern.permute.xlu0 0
      %350 = vperm.xlu0 %349, %v322
      %v351 = vpop.permute.xlu0 %350
      %v353 = vunpack.c.l.s4 839922192
      %v354 = vunpack.c.0.s8 %v353
      %v355 = vlaneseq
      %v356 = vshrl.u32 %v355, 7
      %v357 = vsub.s32 %v354, %v356
      %v358 = vrot.slane %v351, %v357
      %v360 = vmul.f32 %v347, %v358
      %362 = vset.pattern.permute.xlu0 0
      %363 = vperm.xlu0 %362, %v324
      %v364 = vpop.permute.xlu0 %363
      %v366 = vunpack.c.l.s4 839922192
      %v367 = vunpack.c.0.s8 %v366
      %v368 = vlaneseq
      %v369 = vshrl.u32 %v368, 7
      %v370 = vsub.s32 %v367, %v369
      %v371 = vrot.slane %v364, %v370
      %v373 = vadd.f32 %v360, %v371
      %v374 = vmax.f32 %v373, 0.0
      %v376 = vcombine.high %v374, %v374
      %v378 = vpack.c.bf16 %v374, %v374
      %v379 = vpack.c.bf16 %v376, %v376
      %v381 = vunpack.c.l.b16 %v320
      %v382 = vpack.c.b16 %v381, %v381
      %383 = vrot.lane.b32.xlu0 %v382, 120
      %v384 = vpop.permute.xlu0 %383
      %vm385 = vcmask 31744
      %v387 = vsel %vm385, %v384, 0
      %vm389 = vcmask 1041408
      %v391 = vsel %vm389, %v378, 0
      %v394 = vsel %vm389, %v379, 0
      %396 = vmatprep.subr.bf16.mxu0 %v394
      %397 = vmatpush1.bf16.msra.mxu0 %v391
      %398 = vmatprep.subr.bf16.mxu0 0
      %399 = vmatpush1.bf16.msra.mxu0 0
      %400 = vmatprep.subr.bf16.mxu0 0
      %401 = vmatpush1.bf16.msra.mxu0 0
      %402 = vmatprep.subr.bf16.mxu0 0
      %403 = vmatpush1.bf16.msra.mxu0 0
      %404 = vmatprep.subr.bf16.mxu0 0
      %405 = vmatpush1.bf16.msra.mxu0 0
      %406 = vmatprep.subr.bf16.mxu0 0
      %407 = vmatpush1.bf16.msra.mxu0 0
      %408 = vmatprep.subr.bf16.mxu0 0
      %409 = vmatpush1.bf16.msra.mxu0 0
      %410 = vmatprep.subr.bf16.mxu0 0
      %411 = vmatpush1.bf16.msra.mxu0 0
      %412 = vmatprep.subr.bf16.mxu0 0
      %413 = vmatpush1.bf16.msra.mxu0 0
      %414 = vmatprep.subr.bf16.mxu0 0
      %415 = vmatpush1.bf16.msra.mxu0 0
      %416 = vmatprep.subr.bf16.mxu0 0
      %417 = vmatpush1.bf16.msra.mxu0 0
      %418 = vmatprep.subr.bf16.mxu0 0
      %419 = vmatpush1.bf16.msra.mxu0 0
      %420 = vmatprep.subr.bf16.mxu0 0
      %421 = vmatpush1.bf16.msra.mxu0 0
      %422 = vmatprep.subr.bf16.mxu0 0
      %423 = vmatpush1.bf16.msra.mxu0 0
      %424 = vmatprep.subr.bf16.mxu0 0
      %425 = vmatpush1.bf16.msra.mxu0 0
      %426 = vmatprep.subr.bf16.mxu0 0
      %427 = vmatpush1.bf16.msra.mxu0 0
      %428 = vmatprep.mubr.bf16.mxu0 0
      %429 = vmatmul.mubr.bf16.gmra.mrb[0].mxu0 %v387
      %v430 = vpop.f32.mrb[0].mxu0
      %v431 = vadd.f32 0.0, %v430
      %v432 = vpop.f32.mrb[0].mxu0
      %v433 = vadd.f32 0.0, %v432
      %v434 = vpop.f32.mrb[0].mxu0
      %v435 = vpop.f32.mrb[0].mxu0
      %436 = vdwg.mxu0
      %vm437 = vcmask 64512
      %v439 = vsel %vm437, %v320, 0
      %vm441 = vcmask 1043456
      %v443 = vsel %vm441, %v344, 0
      %v446 = vsel %vm441, %v345, 0
      %448 = vmatprep.subr.bf16.mxu0 %v446
      %449 = vmatpush1.bf16.msra.mxu0 %v443
      %450 = vmatprep.subr.bf16.mxu0 0
      %451 = vmatpush1.bf16.msra.mxu0 0
      %452 = vmatprep.subr.bf16.mxu0 0
      %453 = vmatpush1.bf16.msra.mxu0 0
      %454 = vmatprep.subr.bf16.mxu0 0
      %455 = vmatpush1.bf16.msra.mxu0 0
      %456 = vmatprep.subr.bf16.mxu0 0
      %457 = vmatpush1.bf16.msra.mxu0 0
      %458 = vmatprep.subr.bf16.mxu0 0
      %459 = vmatpush1.bf16.msra.mxu0 0
      %460 = vmatprep.subr.bf16.mxu0 0
      %461 = vmatpush1.bf16.msra.mxu0 0
      %462 = vmatprep.subr.bf16.mxu0 0
      %463 = vmatpush1.bf16.msra.mxu0 0
      %464 = vmatprep.subr.bf16.mxu0 0
      %465 = vmatpush1.bf16.msra.mxu0 0
      %466 = vmatprep.subr.bf16.mxu0 0
      %467 = vmatpush1.bf16.msra.mxu0 0
      %468 = vmatprep.subr.bf16.mxu0 0
      %469 = vmatpush1.bf16.msra.mxu0 0
      %470 = vmatprep.subr.bf16.mxu0 0
      %471 = vmatpush1.bf16.msra.mxu0 0
      %472 = vmatprep.subr.bf16.mxu0 0
      %473 = vmatpush1.bf16.msra.mxu0 0
      %474 = vmatprep.subr.bf16.mxu0 0
      %475 = vmatpush1.bf16.msra.mxu0 0
      %476 = vmatprep.subr.bf16.mxu0 0
      %477 = vmatpush1.bf16.msra.mxu0 0
      %478 = vmatprep.subr.bf16.mxu0 0
      %479 = vmatpush1.bf16.msra.mxu0 0
      %480 = vmatprep.mubr.bf16.mxu0 0
      %481 = vmatmul.mubr.bf16.gmra.mrb[0].mxu0 %v439
      %v482 = vpop.f32.mrb[0].mxu0
      %v483 = vadd.f32 %v431, %v482
      %v484 = vpop.f32.mrb[0].mxu0
      %v485 = vadd.f32 %v433, %v484
      %v486 = vpop.f32.mrb[0].mxu0
      %v487 = vpop.f32.mrb[0].mxu0
      %488 = vdwg.mxu0
      %v489 = vld [vmem:[%s313] sm:$0xf]
      %v490 = vunpack.c.l.bf16 %v489
      %v492 = vunpack.c.l.s4 1985246804
      %v493 = vunpack.c.0.s8 %v492
      %v494 = vlaneseq
      %v495 = vshrl.u32 %v494, 7
      %v496 = vsub.s32 %v493, %v495
      %v497 = vrot.slane %v351, %v496
      %v499 = vmul.f32 %v490, %v497
      %v501 = vunpack.c.l.s4 1985246804
      %v502 = vunpack.c.0.s8 %v501
      %v503 = vlaneseq
      %v504 = vshrl.u32 %v503, 7
      %v505 = vsub.s32 %v502, %v504
      %v506 = vrot.slane %v364, %v505
      %v508 = vadd.f32 %v499, %v506
      %v509 = vmax.f32 %v508, 0.0
      %v511 = vcombine.high %v509, %v509
      %v513 = vpack.c.bf16 %v509, %v509
      %v514 = vpack.c.bf16 %v511, %v511
      %515 = vrot.lane.b32.xlu0 %v382, 116
      %v516 = vpop.permute.xlu0 %515
      %v518 = vsel %vm385, %v516, 0
      %v521 = vsel %vm389, %v513, 0
      %v524 = vsel %vm389, %v514, 0
      %526 = vmatprep.subr.bf16.mxu0 %v524
      %527 = vmatpush1.bf16.msra.mxu0 %v521
      %528 = vmatprep.subr.bf16.mxu0 0
      %529 = vmatpush1.bf16.msra.mxu0 0
      %530 = vmatprep.subr.bf16.mxu0 0
      %531 = vmatpush1.bf16.msra.mxu0 0
      %532 = vmatprep.subr.bf16.mxu0 0
      %533 = vmatpush1.bf16.msra.mxu0 0
      %534 = vmatprep.subr.bf16.mxu0 0
      %535 = vmatpush1.bf16.msra.mxu0 0
      %536 = vmatprep.subr.bf16.mxu0 0
      %537 = vmatpush1.bf16.msra.mxu0 0
      %538 = vmatprep.subr.bf16.mxu0 0
      %539 = vmatpush1.bf16.msra.mxu0 0
      %540 = vmatprep.subr.bf16.mxu0 0
      %541 = vmatpush1.bf16.msra.mxu0 0
      %542 = vmatprep.subr.bf16.mxu0 0
      %543 = vmatpush1.bf16.msra.mxu0 0
      %544 = vmatprep.subr.bf16.mxu0 0
      %545 = vmatpush1.bf16.msra.mxu0 0
      %546 = vmatprep.subr.bf16.mxu0 0
      %547 = vmatpush1.bf16.msra.mxu0 0
      %548 = vmatprep.subr.bf16.mxu0 0
      %549 = vmatpush1.bf16.msra.mxu0 0
      %550 = vmatprep.subr.bf16.mxu0 0
      %551 = vmatpush1.bf16.msra.mxu0 0
      %552 = vmatprep.subr.bf16.mxu0 0
      %553 = vmatpush1.bf16.msra.mxu0 0
      %554 = vmatprep.subr.bf16.mxu0 0
      %555 = vmatpush1.bf16.msra.mxu0 0
      %556 = vmatprep.subr.bf16.mxu0 0
      %557 = vmatpush1.bf16.msra.mxu0 0
      %558 = vmatprep.mubr.bf16.mxu0 0
      %559 = vmatmul.mubr.bf16.gmra.mrb[0].mxu0 %v518
      %v560 = vpop.f32.mrb[0].mxu0
      %v561 = vadd.f32 0.0, %v560
      %v562 = vpop.f32.mrb[0].mxu0
      %v563 = vadd.f32 0.0, %v562
      %v564 = vpop.f32.mrb[0].mxu0
      %v565 = vpop.f32.mrb[0].mxu0
      %566 = vdwg.mxu0
      %v567 = vadd.f32 %v483, %v561
      %v568 = vadd.f32 %v485, %v563
      %v569 = vld [vmem:[%s3] sm:$0xff]
      %571 = vset.pattern.permute.xlu0 0
      %572 = vperm.xlu0 %571, %v569
      %v573 = vpop.permute.xlu0 %572
      %v575 = vadd.f32 %v567, %v573
      %v576 = vadd.f32 %v568, %v573
      %v577 = vmax.f32 %v575, 0.0
      %v578 = vmax.f32 %v576, 0.0
      %579 = vst [vmem:[%s318] sm:$0xff] %v577
      %580 = vst [vmem:[%s318 + $0x8] sm:$0xff] %v578
      %p581 = scmp.lt.s32.totalorder %s18, 1
      %s582 = scalar_select %p581, %s18, 1
      %s583 = smul.addr %s582, 2
      %s584 = smul.addr %s583, 8
      %s585 = scalar_lea.vmem %s7, %s584
      // Predicated region
      $region49: #{_lambda_.13} parent=47 // pred_check
        %p586 = pneg %p198
      $region50: #{_lambda_.13} parent=47 // pred_check_branch
        %588 = sbr.rel (%p586) target = $region52
      $region51: #{_lambda_.13} parent=47 // pred_region
        _
      $region52: #{_lambda_.13} parent=47 // pred_fallthru
        _
    $region48: #{_lambda_.13} parent=5 // pred_fallthru
      _
    %p589 = scmp.le.s32.totalorder 2, %s13
    // Predicated region
    $region53: #{_lambda_.13} parent=5 // pred_check
      %p590 = pneg %p589
    $region54: #{_lambda_.13} parent=5 // pred_check_branch
      %592 = sbr.rel (%p590) target = $region56
    $region55: #{_lambda_.13} parent=5 // pred_region
      %s593 = ssub.s32 %s13, 2
      // Predicated region
      $region57: #{_lambda_.13} parent=55 // pred_check
        %p594 = pneg %p204
      $region58: #{_lambda_.13} parent=55 // pred_check_branch
        %596 = sbr.rel (%p594) target = $region60
      $region59: #{_lambda_.13} parent=55 // pred_region
        %p597 = scmp.lt.s32.totalorder %s19, 1
        %s598 = scalar_select %p597, %s19, 1
        %s599 = smul.addr %s598, 2
        %s600 = smul.addr %s599, 8
        %s601 = scalar_lea.vmem %s7, %s600
      $region60: #{_lambda_.13} parent=55 // pred_fallthru
        _
    $region56: #{_lambda_.13} parent=5 // pred_fallthru
      _
  $region6: #{_lambda_.13} parent=0 // loop_footer
    %s17 = sadd.s32 1, %s13
  $region7: #{_lambda_.13} parent=0 // loop_footer_branch
    %12 = sbr.rel target = $region3
  $region8: #{_lambda_.13} parent=0 // loop_exit
    _

</llo_original>
